<compile_context>
chip_gen: v5e
topology: v5e:2x2
jax: 0.10.0
libtpu: 0.0.40
codegen_flags: <defaults>
</compile_context>

<pallas_src>
import functools
import math

import jax
import jax.numpy as jnp
from jax.experimental import pallas as pl
from jax.experimental.pallas import tpu as pltpu

# ---------------- config (scaled-down ViT) ----------------
IMG = 32
PATCH = 16
IN_CH = 3
EMBED = 64
DEPTH = 2
HEADS = 4
MLP_RATIO = 4
NUM_CLASSES = 2
EPS = 1e-6

NUM_PATCHES = (IMG // PATCH) * (IMG // PATCH)
SEQ = NUM_PATCHES + 1
SEQ_PAD = ((SEQ + 7) // 8) * 8          # pad sequence to a sublane multiple
HEAD_DIM = EMBED // HEADS
MLP = MLP_RATIO * EMBED
CPP = IN_CH * PATCH * PATCH


# ---------------- fused Pallas kernel (one grid step == one batch element) ----------------
def _vit_kernel(patches_ref, base_ref, patch_w_ref,
                ln1_g_ref, ln1_b_ref, qkv_w_ref, qkv_b_ref,
                proj_w_ref, proj_b_ref, ln2_g_ref, ln2_b_ref,
                fc1_w_ref, fc1_b_ref, fc2_w_ref, fc2_b_ref,
                lnf_g_ref, lnf_b_ref, out_ref, *, scale):
    def layernorm(x, g, b):
        mu = jnp.mean(x, axis=-1, keepdims=True)
        var = jnp.mean(jnp.square(x - mu), axis=-1, keepdims=True)
        return (x - mu) * jax.lax.rsqrt(var + EPS) * g + b

    # Patch embedding: padded-patch matmul + precomputed (cls/pos/conv-bias) base.
    # Padded rows of `patches` are zero and `base` is zero there -> stay zero.
    xt = jnp.dot(patches_ref[0], patch_w_ref[...],
                 preferred_element_type=jnp.float32) + base_ref[...]     # (S_pad, D)

    # Additive key-padding mask: padded tokens never contribute as keys.
    col = jax.lax.broadcasted_iota(jnp.int32, (SEQ_PAD, SEQ_PAD), 1)
    key_bias = jnp.where(col < SEQ, 0.0, -1e30).astype(jnp.float32)       # (S_pad, S_pad)

    for d in range(DEPTH):                               # static unroll (DEPTH=2)
        # ---------------- multi-head attention ----------------
        h = layernorm(xt, ln1_g_ref[d], ln1_b_ref[d])
        qkv = jnp.dot(h, qkv_w_ref[d],
                      preferred_element_type=jnp.float32) + qkv_b_ref[d]  # (S_pad, 3D)
        proj_w = proj_w_ref[d]                                            # (D, D)

        attn = jnp.zeros((SEQ_PAD, EMBED), jnp.float32)
        for hh in range(HEADS):                          # static unroll, in-register head split
            lo = hh * HEAD_DIM
            q = qkv[:, lo:lo + HEAD_DIM] * scale
            k = qkv[:, EMBED + lo:EMBED + lo + HEAD_DIM]
            v = qkv[:, 2 * EMBED + lo:2 * EMBED + lo + HEAD_DIM]

            # scores = q @ k^T via dot_general contracting Dh (no explicit transpose)
            s = jax.lax.dot_general(q, k, (((1,), (1,)), ((), ())),
                                    preferred_element_type=jnp.float32)   # (S_pad, S_pad)
            s = s + key_bias
            s = s - jnp.max(s, axis=-1, keepdims=True)
            p = jnp.exp(s)
            p = p * pl.reciprocal(jnp.sum(p, axis=-1, keepdims=True), approx=True)

            o_h = jnp.dot(p, v, preferred_element_type=jnp.float32)       # (S_pad, Dh)
            # per-head output projection (== concat(heads) @ proj_w), fused here
            attn = attn + jnp.dot(o_h, proj_w[lo:lo + HEAD_DIM, :],
                                  preferred_element_type=jnp.float32)
        xt = xt + attn + proj_b_ref[d]                   # residual fused in epilogue

        # ---------------- MLP ----------------
        h = layernorm(xt, ln2_g_ref[d], ln2_b_ref[d])
        h = jnp.dot(h, fc1_w_ref[d],
                    preferred_element_type=jnp.float32) + fc1_b_ref[d]    # (S_pad, MLP)
        # TODO(synk): timm uses exact (erf) GELU; tanh approximation used here for Mosaic.
        h = jax.nn.gelu(h, approximate=True)
        h = jnp.dot(h, fc2_w_ref[d],
                    preferred_element_type=jnp.float32) + fc2_b_ref[d]    # (S_pad, D)
        xt = xt + h                                      # residual fused in epilogue

    out_ref[0] = layernorm(xt, lnf_g_ref[...], lnf_b_ref[...])


# ---------------- parameters ----------------
def init_params(key):
    keys = iter(jax.random.split(key, 4 + DEPTH * 8 + 4))

    def nrm(shape, std=0.02):
        return std * jax.random.normal(next(keys), shape, dtype=jnp.float32)

    params = {
        "patch_w": nrm((EMBED, IN_CH, PATCH, PATCH)),    # Conv2d weight (D, C, P, P)
        "patch_b": nrm((EMBED,)),
        "cls": nrm((1, 1, EMBED)),
        "pos": nrm((1, SEQ, EMBED)),
        "blocks": [],
        "ln_g": jnp.ones((EMBED,), jnp.float32),
        "ln_b": jnp.zeros((EMBED,), jnp.float32),
        "head_w": nrm((EMBED, NUM_CLASSES)),
        "head_b": jnp.zeros((NUM_CLASSES,), jnp.float32),
    }
    for _ in range(DEPTH):
        params["blocks"].append(dict(
            ln1_g=jnp.ones((EMBED,), jnp.float32), ln1_b=jnp.zeros((EMBED,), jnp.float32),
            qkv_w=nrm((EMBED, 3 * EMBED)), qkv_b=nrm((3 * EMBED,)),
            proj_w=nrm((EMBED, EMBED)), proj_b=nrm((EMBED,)),
            ln2_g=jnp.ones((EMBED,), jnp.float32), ln2_b=jnp.zeros((EMBED,), jnp.float32),
            fc1_w=nrm((EMBED, MLP)), fc1_b=nrm((MLP,)),
            fc2_w=nrm((MLP, EMBED)), fc2_b=nrm((EMBED,)),
        ))
    return params


def _pack_blocks(blocks):
    """Stack per-block weights along a leading DEPTH axis (2-D slabs, biases as (1, N))."""
    def stk(name, shape2d):
        return jnp.stack([blk[name].reshape(shape2d) for blk in blocks])
    return dict(
        ln1_g=stk("ln1_g", (1, EMBED)), ln1_b=stk("ln1_b", (1, EMBED)),
        qkv_w=stk("qkv_w", (EMBED, 3 * EMBED)), qkv_b=stk("qkv_b", (1, 3 * EMBED)),
        proj_w=stk("proj_w", (EMBED, EMBED)), proj_b=stk("proj_b", (1, EMBED)),
        ln2_g=stk("ln2_g", (1, EMBED)), ln2_b=stk("ln2_b", (1, EMBED)),
        fc1_w=stk("fc1_w", (EMBED, MLP)), fc1_b=stk("fc1_b", (1, MLP)),
        fc2_w=stk("fc2_w", (MLP, EMBED)), fc2_b=stk("fc2_b", (1, EMBED)),
    )


# ---------------- forward ----------------
def _patchify(x):
    # (B, C, H, W) -> (B, N, C*P*P), pixel order (C, Ph, Pw) matches Conv2d weight flatten.
    B, C, H, W = x.shape
    gh, gw = H // PATCH, W // PATCH
    x = x.reshape(B, C, gh, PATCH, gw, PATCH)
    x = x.transpose(0, 2, 4, 1, 3, 5)
    return x.reshape(B, gh * gw, C * PATCH * PATCH)


def vit_forward(params, x):
    B = x.shape[0]
    scale = 1.0 / math.sqrt(HEAD_DIM)

    # ---- plain-JAX layout prep only (no compute worth a kernel launch) ----
    patches = _patchify(x)                                               # (B, NP, CPP)
    patches_padded = jnp.zeros((B, SEQ_PAD, CPP), jnp.float32)
    patches_padded = patches_padded.at[:, 1:1 + NUM_PATCHES].set(patches)

    # base row j: j==0 -> cls + pos0 ; 1<=j<=NP -> pos_j + conv bias ; j>NP -> 0 (pad)
    pos = params["pos"][0]                                               # (SEQ, D)
    base = jnp.zeros((SEQ_PAD, EMBED), jnp.float32)
    base = base.at[0].set(params["cls"][0, 0] + pos[0])
    base = base.at[1:SEQ].set(pos[1:] + params["patch_b"][None, :])

    patch_w = params["patch_w"].reshape(EMBED, -1).T                     # (CPP, D)
    pk = _pack_blocks(params["blocks"])

    inputs = [
        patches_padded, base, patch_w,
        pk["ln1_g"], pk["ln1_b"], pk["qkv_w"], pk["qkv_b"],
        pk["proj_w"], pk["proj_b"], pk["ln2_g"], pk["ln2_b"],
        pk["fc1_w"], pk["fc1_b"], pk["fc2_w"], pk["fc2_b"],
        params["ln_g"].reshape(1, EMBED), params["ln_b"].reshape(1, EMBED),
    ]

    def shared_spec(a):
        nd = a.ndim
        return pl.BlockSpec(a.shape, lambda b, nd=nd: (0,) * nd)

    in_specs = [pl.BlockSpec((1, SEQ_PAD, CPP), lambda b: (b, 0, 0))]     # per-batch patches
    in_specs += [shared_spec(a) for a in inputs[1:]]                      # weights: whole-array VMEM

    hidden = pl.pallas_call(
        functools.partial(_vit_kernel, scale=scale),
        grid=(B,),
        out_shape=jax.ShapeDtypeStruct((B, SEQ_PAD, EMBED), jnp.float32),
        in_specs=in_specs,
        out_specs=pl.BlockSpec((1, SEQ_PAD, EMBED), lambda b: (b, 0, 0)),
        compiler_params=pltpu.CompilerParams(dimension_semantics=("parallel",)),
    )(*inputs)

    # cls-token pooling + tiny (B,64)@(64,2) head in plain JAX (per perf review).
    cls_tok = hidden[:, 0, :]                                            # (B, D)
    return cls_tok @ params["head_w"] + params["head_b"]                 # (B, NUM_CLASSES)


if __name__ == "__main__":
    key = jax.random.PRNGKey(0)
    kp, kx = jax.random.split(key)
    params = init_params(kp)
    x = jax.random.normal(kx, (2, IN_CH, IMG, IMG), dtype=jnp.float32)

    fwd = jax.jit(functools.partial(vit_forward, params))
    out = fwd(x)
    jax.block_until_ready(out)
    assert out.shape == (2, NUM_CLASSES) and out.dtype == jnp.float32
    assert bool(jnp.all(jnp.isfinite(out)))
    print("KERNEL_OK")
</pallas_src>

<mosaic_0001>
module attributes {stable_mosaic.version = 11 : i64} {
  func.func @_vit_kernel(%arg0: i32, %arg1: memref<1x8x768xf32, #tpu.memory_space<vmem>>, %arg2: memref<8x64xf32, #tpu.memory_space<vmem>>, %arg3: memref<768x64xf32, #tpu.memory_space<vmem>>, %arg4: memref<2x1x64xf32, #tpu.memory_space<vmem>>, %arg5: memref<2x1x64xf32, #tpu.memory_space<vmem>>, %arg6: memref<2x64x192xf32, #tpu.memory_space<vmem>>, %arg7: memref<2x1x192xf32, #tpu.memory_space<vmem>>, %arg8: memref<2x64x64xf32, #tpu.memory_space<vmem>>, %arg9: memref<2x1x64xf32, #tpu.memory_space<vmem>>, %arg10: memref<2x1x64xf32, #tpu.memory_space<vmem>>, %arg11: memref<2x1x64xf32, #tpu.memory_space<vmem>>, %arg12: memref<2x64x256xf32, #tpu.memory_space<vmem>>, %arg13: memref<2x1x256xf32, #tpu.memory_space<vmem>>, %arg14: memref<2x256x64xf32, #tpu.memory_space<vmem>>, %arg15: memref<2x1x64xf32, #tpu.memory_space<vmem>>, %arg16: memref<1x64xf32, #tpu.memory_space<vmem>>, %arg17: memref<1x64xf32, #tpu.memory_space<vmem>>, %arg18: memref<1x8x64xf32, #tpu.memory_space<vmem>>) attributes {dimension_semantics = [#tpu.dimension_semantics<parallel>], iteration_bounds = array<i64: 2>, scalar_prefetch = 0 : i64, scratch_operands = 0 : i64, tpu.core_type = #tpu.core_type<tc>, window_params = [{transform_indices = @transform_0, window_bounds = array<i64: 1, 8, 768>}, {pipeline_mode = #tpu.pipeline_mode<synchronous>, transform_indices = @transform_1, window_bounds = array<i64: 8, 64>}, {pipeline_mode = #tpu.pipeline_mode<synchronous>, transform_indices = @transform_2, window_bounds = array<i64: 768, 64>}, {pipeline_mode = #tpu.pipeline_mode<synchronous>, transform_indices = @transform_3, window_bounds = array<i64: 2, 1, 64>}, {pipeline_mode = #tpu.pipeline_mode<synchronous>, transform_indices = @transform_4, window_bounds = array<i64: 2, 1, 64>}, {pipeline_mode = #tpu.pipeline_mode<synchronous>, transform_indices = @transform_5, window_bounds = array<i64: 2, 64, 192>}, {pipeline_mode = #tpu.pipeline_mode<synchronous>, transform_indices = @transform_6, window_bounds = array<i64: 2, 1, 192>}, {pipeline_mode = #tpu.pipeline_mode<synchronous>, transform_indices = @transform_7, window_bounds = array<i64: 2, 64, 64>}, {pipeline_mode = #tpu.pipeline_mode<synchronous>, transform_indices = @transform_8, window_bounds = array<i64: 2, 1, 64>}, {pipeline_mode = #tpu.pipeline_mode<synchronous>, transform_indices = @transform_9, window_bounds = array<i64: 2, 1, 64>}, {pipeline_mode = #tpu.pipeline_mode<synchronous>, transform_indices = @transform_10, window_bounds = array<i64: 2, 1, 64>}, {pipeline_mode = #tpu.pipeline_mode<synchronous>, transform_indices = @transform_11, window_bounds = array<i64: 2, 64, 256>}, {pipeline_mode = #tpu.pipeline_mode<synchronous>, transform_indices = @transform_12, window_bounds = array<i64: 2, 1, 256>}, {pipeline_mode = #tpu.pipeline_mode<synchronous>, transform_indices = @transform_13, window_bounds = array<i64: 2, 256, 64>}, {pipeline_mode = #tpu.pipeline_mode<synchronous>, transform_indices = @transform_14, window_bounds = array<i64: 2, 1, 64>}, {pipeline_mode = #tpu.pipeline_mode<synchronous>, transform_indices = @transform_15, window_bounds = array<i64: 1, 64>}, {pipeline_mode = #tpu.pipeline_mode<synchronous>, transform_indices = @transform_16, window_bounds = array<i64: 1, 64>}, {transform_indices = @transform_17, window_bounds = array<i64: 1, 8, 64>}]} {
    %c0 = arith.constant 0 : index
    %c0_0 = arith.constant 0 : index
    %c0_1 = arith.constant 0 : index
    %0 = vector.load %arg1[%c0, %c0_0, %c0_1] : memref<1x8x768xf32, #tpu.memory_space<vmem>>, vector<1x8x768xf32>
    %1 = vector.shape_cast %0 : vector<1x8x768xf32> to vector<8x768xf32>
    %c0_2 = arith.constant 0 : index
    %c0_3 = arith.constant 0 : index
    %2 = vector.load %arg3[%c0_2, %c0_3] : memref<768x64xf32, #tpu.memory_space<vmem>>, vector<768x64xf32>
    %cst = arith.constant dense<0.000000e+00> : vector<8x64xf32>
    %3 = tpu.matmul %1, %2, %cst {dimension_numbers = #tpu.dot_dimension_numbers<[1], [0], [0], [1], [0, 0, 1, 1], [], []>} : vector<8x768xf32>, vector<768x64xf32>, vector<8x64xf32> -> vector<8x64xf32>
    %c0_4 = arith.constant 0 : index
    %c0_5 = arith.constant 0 : index
    %4 = vector.load %arg2[%c0_4, %c0_5] : memref<8x64xf32, #tpu.memory_space<vmem>>, vector<8x64xf32>
    %5 = arith.addf %3, %4 : vector<8x64xf32>
    %6 = tpu.iota {dimensions = array<i32: 1>} : vector<8x8xi32>
    %c5_i32 = arith.constant 5 : i32
    %7 = vector.broadcast %c5_i32 : i32 to vector<8x8xi32>
    %8 = arith.cmpi slt, %6, %7 : vector<8x8xi32>
    %cst_6 = arith.constant 0.000000e+00 : f32
    %cst_7 = arith.constant -1.000000e+30 : f32
    %9 = vector.broadcast %cst_6 : f32 to vector<8x8xf32>
    %10 = vector.broadcast %cst_7 : f32 to vector<8x8xf32>
    %11 = arith.select %8, %9, %10 : vector<8x8xi1>, vector<8x8xf32>
    %c0_8 = arith.constant 0 : index
    %c0_9 = arith.constant 0 : index
    %c0_10 = arith.constant 0 : index
    %12 = vector.load %arg4[%c0_8, %c0_9, %c0_10] : memref<2x1x64xf32, #tpu.memory_space<vmem>>, vector<1x1x64xf32>
    %13 = vector.shape_cast %12 : vector<1x1x64xf32> to vector<1x64xf32>
    %c0_11 = arith.constant 0 : index
    %c0_12 = arith.constant 0 : index
    %c0_13 = arith.constant 0 : index
    %14 = vector.load %arg5[%c0_11, %c0_12, %c0_13] : memref<2x1x64xf32, #tpu.memory_space<vmem>>, vector<1x1x64xf32>
    %15 = vector.shape_cast %14 : vector<1x1x64xf32> to vector<1x64xf32>
    %cst_14 = arith.constant dense<0.000000e+00> : vector<8xf32>
    %16 = vector.multi_reduction <add>, %5, %cst_14 [1] : vector<8x64xf32> to vector<8xf32>
    %17 = vector.shape_cast %16 : vector<8xf32> to vector<8x1xf32>
    %cst_15 = arith.constant 6.400000e+01 : f32
    %18 = vector.broadcast %cst_15 : f32 to vector<8x1xf32>
    %19 = arith.divf %17, %18 : vector<8x1xf32>
    %20 = vector.broadcast %19 : vector<8x1xf32> to vector<8x64xf32>
    %21 = arith.subf %5, %20 : vector<8x64xf32>
    %22 = arith.mulf %21, %21 : vector<8x64xf32>
    %cst_16 = arith.constant dense<0.000000e+00> : vector<8xf32>
    %23 = vector.multi_reduction <add>, %22, %cst_16 [1] : vector<8x64xf32> to vector<8xf32>
    %24 = vector.shape_cast %23 : vector<8xf32> to vector<8x1xf32>
    %cst_17 = arith.constant 6.400000e+01 : f32
    %25 = vector.broadcast %cst_17 : f32 to vector<8x1xf32>
    %26 = arith.divf %24, %25 : vector<8x1xf32>
    %27 = vector.broadcast %19 : vector<8x1xf32> to vector<8x64xf32>
    %28 = arith.subf %5, %27 : vector<8x64xf32>
    %cst_18 = arith.constant 9.99999997E-7 : f32
    %29 = vector.broadcast %cst_18 : f32 to vector<8x1xf32>
    %30 = arith.addf %26, %29 : vector<8x1xf32>
    %31 = math.rsqrt %30 : vector<8x1xf32>
    %32 = vector.broadcast %31 : vector<8x1xf32> to vector<8x64xf32>
    %33 = arith.mulf %28, %32 : vector<8x64xf32>
    %34 = vector.broadcast %13 : vector<1x64xf32> to vector<8x64xf32>
    %35 = arith.mulf %33, %34 : vector<8x64xf32>
    %36 = vector.broadcast %15 : vector<1x64xf32> to vector<8x64xf32>
    %37 = arith.addf %35, %36 : vector<8x64xf32>
    %c0_19 = arith.constant 0 : index
    %c0_20 = arith.constant 0 : index
    %c0_21 = arith.constant 0 : index
    %38 = vector.load %arg6[%c0_19, %c0_20, %c0_21] : memref<2x64x192xf32, #tpu.memory_space<vmem>>, vector<1x64x192xf32>
    %39 = vector.shape_cast %38 : vector<1x64x192xf32> to vector<64x192xf32>
    %cst_22 = arith.constant dense<0.000000e+00> : vector<8x192xf32>
    %40 = tpu.matmul %37, %39, %cst_22 {dimension_numbers = #tpu.dot_dimension_numbers<[1], [0], [0], [1], [0, 0, 1, 1], [], []>} : vector<8x64xf32>, vector<64x192xf32>, vector<8x192xf32> -> vector<8x192xf32>
    %c0_23 = arith.constant 0 : index
    %c0_24 = arith.constant 0 : index
    %c0_25 = arith.constant 0 : index
    %41 = vector.load %arg7[%c0_23, %c0_24, %c0_25] : memref<2x1x192xf32, #tpu.memory_space<vmem>>, vector<1x1x192xf32>
    %42 = vector.shape_cast %41 : vector<1x1x192xf32> to vector<1x192xf32>
    %43 = vector.broadcast %42 : vector<1x192xf32> to vector<8x192xf32>
    %44 = arith.addf %40, %43 : vector<8x192xf32>
    %c0_26 = arith.constant 0 : index
    %c0_27 = arith.constant 0 : index
    %c0_28 = arith.constant 0 : index
    %45 = vector.load %arg8[%c0_26, %c0_27, %c0_28] : memref<2x64x64xf32, #tpu.memory_space<vmem>>, vector<1x64x64xf32>
    %46 = vector.shape_cast %45 : vector<1x64x64xf32> to vector<64x64xf32>
    %cst_29 = arith.constant 0.000000e+00 : f32
    %47 = vector.broadcast %cst_29 : f32 to vector<8x64xf32>
    %48 = vector.extract_strided_slice %44 {offsets = [0, 0], sizes = [8, 16], strides = [1, 1]} : vector<8x192xf32> to vector<8x16xf32>
    %cst_30 = arith.constant 2.500000e-01 : f32
    %49 = vector.broadcast %cst_30 : f32 to vector<8x16xf32>
    %50 = arith.mulf %48, %49 : vector<8x16xf32>
    %51 = vector.extract_strided_slice %44 {offsets = [0, 64], sizes = [8, 16], strides = [1, 1]} : vector<8x192xf32> to vector<8x16xf32>
    %52 = vector.extract_strided_slice %44 {offsets = [0, 128], sizes = [8, 16], strides = [1, 1]} : vector<8x192xf32> to vector<8x16xf32>
    %cst_31 = arith.constant dense<0.000000e+00> : vector<8x8xf32>
    %53 = tpu.matmul %50, %51, %cst_31 {dimension_numbers = #tpu.dot_dimension_numbers<[1], [1], [0], [0], [0, 0, 1, 0], [], []>} : vector<8x16xf32>, vector<8x16xf32>, vector<8x8xf32> -> vector<8x8xf32>
    %54 = arith.addf %53, %11 : vector<8x8xf32>
    %cst_32 = arith.constant dense<0xFF800000> : vector<8xf32>
    %55 = vector.multi_reduction <maximumf>, %54, %cst_32 [1] : vector<8x8xf32> to vector<8xf32>
    %56 = vector.shape_cast %55 : vector<8xf32> to vector<8x1xf32>
    %57 = vector.broadcast %56 : vector<8x1xf32> to vector<8x8xf32>
    %58 = arith.subf %54, %57 : vector<8x8xf32>
    %59 = math.exp %58 : vector<8x8xf32>
    %cst_33 = arith.constant dense<0.000000e+00> : vector<8xf32>
    %60 = vector.multi_reduction <add>, %59, %cst_33 [1] : vector<8x8xf32> to vector<8xf32>
    %61 = vector.shape_cast %60 : vector<8xf32> to vector<8x1xf32>
    %62 = tpu.reciprocal %61 {approx = true} : vector<8x1xf32> -> vector<8x1xf32>
    %63 = vector.broadcast %62 : vector<8x1xf32> to vector<8x8xf32>
    %64 = arith.mulf %59, %63 : vector<8x8xf32>
    %cst_34 = arith.constant dense<0.000000e+00> : vector<8x16xf32>
    %65 = tpu.matmul %64, %52, %cst_34 {dimension_numbers = #tpu.dot_dimension_numbers<[1], [0], [0], [1], [0, 0, 1, 1], [], []>} : vector<8x8xf32>, vector<8x16xf32>, vector<8x16xf32> -> vector<8x16xf32>
    %66 = vector.extract_strided_slice %46 {offsets = [0, 0], sizes = [16, 64], strides = [1, 1]} : vector<64x64xf32> to vector<16x64xf32>
    %cst_35 = arith.constant dense<0.000000e+00> : vector<8x64xf32>
    %67 = tpu.matmul %65, %66, %cst_35 {dimension_numbers = #tpu.dot_dimension_numbers<[1], [0], [0], [1], [0, 0, 1, 1], [], []>} : vector<8x16xf32>, vector<16x64xf32>, vector<8x64xf32> -> vector<8x64xf32>
    %68 = arith.addf %47, %67 : vector<8x64xf32>
    %69 = vector.extract_strided_slice %44 {offsets = [0, 16], sizes = [8, 16], strides = [1, 1]} : vector<8x192xf32> to vector<8x16xf32>
    %cst_36 = arith.constant 2.500000e-01 : f32
    %70 = vector.broadcast %cst_36 : f32 to vector<8x16xf32>
    %71 = arith.mulf %69, %70 : vector<8x16xf32>
    %72 = vector.extract_strided_slice %44 {offsets = [0, 80], sizes = [8, 16], strides = [1, 1]} : vector<8x192xf32> to vector<8x16xf32>
    %73 = vector.extract_strided_slice %44 {offsets = [0, 144], sizes = [8, 16], strides = [1, 1]} : vector<8x192xf32> to vector<8x16xf32>
    %cst_37 = arith.constant dense<0.000000e+00> : vector<8x8xf32>
    %74 = tpu.matmul %71, %72, %cst_37 {dimension_numbers = #tpu.dot_dimension_numbers<[1], [1], [0], [0], [0, 0, 1, 0], [], []>} : vector<8x16xf32>, vector<8x16xf32>, vector<8x8xf32> -> vector<8x8xf32>
    %75 = arith.addf %74, %11 : vector<8x8xf32>
    %cst_38 = arith.constant dense<0xFF800000> : vector<8xf32>
    %76 = vector.multi_reduction <maximumf>, %75, %cst_38 [1] : vector<8x8xf32> to vector<8xf32>
    %77 = vector.shape_cast %76 : vector<8xf32> to vector<8x1xf32>
    %78 = vector.broadcast %77 : vector<8x1xf32> to vector<8x8xf32>
    %79 = arith.subf %75, %78 : vector<8x8xf32>
    %80 = math.exp %79 : vector<8x8xf32>
    %cst_39 = arith.constant dense<0.000000e+00> : vector<8xf32>
    %81 = vector.multi_reduction <add>, %80, %cst_39 [1] : vector<8x8xf32> to vector<8xf32>
    %82 = vector.shape_cast %81 : vector<8xf32> to vector<8x1xf32>
    %83 = tpu.reciprocal %82 {approx = true} : vector<8x1xf32> -> vector<8x1xf32>
    %84 = vector.broadcast %83 : vector<8x1xf32> to vector<8x8xf32>
    %85 = arith.mulf %80, %84 : vector<8x8xf32>
    %cst_40 = arith.constant dense<0.000000e+00> : vector<8x16xf32>
    %86 = tpu.matmul %85, %73, %cst_40 {dimension_numbers = #tpu.dot_dimension_numbers<[1], [0], [0], [1], [0, 0, 1, 1], [], []>} : vector<8x8xf32>, vector<8x16xf32>, vector<8x16xf32> -> vector<8x16xf32>
    %87 = vector.extract_strided_slice %46 {offsets = [16, 0], sizes = [16, 64], strides = [1, 1]} : vector<64x64xf32> to vector<16x64xf32>
    %cst_41 = arith.constant dense<0.000000e+00> : vector<8x64xf32>
    %88 = tpu.matmul %86, %87, %cst_41 {dimension_numbers = #tpu.dot_dimension_numbers<[1], [0], [0], [1], [0, 0, 1, 1], [], []>} : vector<8x16xf32>, vector<16x64xf32>, vector<8x64xf32> -> vector<8x64xf32>
    %89 = arith.addf %68, %88 : vector<8x64xf32>
    %90 = vector.extract_strided_slice %44 {offsets = [0, 32], sizes = [8, 16], strides = [1, 1]} : vector<8x192xf32> to vector<8x16xf32>
    %cst_42 = arith.constant 2.500000e-01 : f32
    %91 = vector.broadcast %cst_42 : f32 to vector<8x16xf32>
    %92 = arith.mulf %90, %91 : vector<8x16xf32>
    %93 = vector.extract_strided_slice %44 {offsets = [0, 96], sizes = [8, 16], strides = [1, 1]} : vector<8x192xf32> to vector<8x16xf32>
    %94 = vector.extract_strided_slice %44 {offsets = [0, 160], sizes = [8, 16], strides = [1, 1]} : vector<8x192xf32> to vector<8x16xf32>
    %cst_43 = arith.constant dense<0.000000e+00> : vector<8x8xf32>
    %95 = tpu.matmul %92, %93, %cst_43 {dimension_numbers = #tpu.dot_dimension_numbers<[1], [1], [0], [0], [0, 0, 1, 0], [], []>} : vector<8x16xf32>, vector<8x16xf32>, vector<8x8xf32> -> vector<8x8xf32>
    %96 = arith.addf %95, %11 : vector<8x8xf32>
    %cst_44 = arith.constant dense<0xFF800000> : vector<8xf32>
    %97 = vector.multi_reduction <maximumf>, %96, %cst_44 [1] : vector<8x8xf32> to vector<8xf32>
    %98 = vector.shape_cast %97 : vector<8xf32> to vector<8x1xf32>
    %99 = vector.broadcast %98 : vector<8x1xf32> to vector<8x8xf32>
    %100 = arith.subf %96, %99 : vector<8x8xf32>
    %101 = math.exp %100 : vector<8x8xf32>
    %cst_45 = arith.constant dense<0.000000e+00> : vector<8xf32>
    %102 = vector.multi_reduction <add>, %101, %cst_45 [1] : vector<8x8xf32> to vector<8xf32>
    %103 = vector.shape_cast %102 : vector<8xf32> to vector<8x1xf32>
    %104 = tpu.reciprocal %103 {approx = true} : vector<8x1xf32> -> vector<8x1xf32>
    %105 = vector.broadcast %104 : vector<8x1xf32> to vector<8x8xf32>
    %106 = arith.mulf %101, %105 : vector<8x8xf32>
    %cst_46 = arith.constant dense<0.000000e+00> : vector<8x16xf32>
    %107 = tpu.matmul %106, %94, %cst_46 {dimension_numbers = #tpu.dot_dimension_numbers<[1], [0], [0], [1], [0, 0, 1, 1], [], []>} : vector<8x8xf32>, vector<8x16xf32>, vector<8x16xf32> -> vector<8x16xf32>
    %108 = vector.extract_strided_slice %46 {offsets = [32, 0], sizes = [16, 64], strides = [1, 1]} : vector<64x64xf32> to vector<16x64xf32>
    %cst_47 = arith.constant dense<0.000000e+00> : vector<8x64xf32>
    %109 = tpu.matmul %107, %108, %cst_47 {dimension_numbers = #tpu.dot_dimension_numbers<[1], [0], [0], [1], [0, 0, 1, 1], [], []>} : vector<8x16xf32>, vector<16x64xf32>, vector<8x64xf32> -> vector<8x64xf32>
    %110 = arith.addf %89, %109 : vector<8x64xf32>
    %111 = vector.extract_strided_slice %44 {offsets = [0, 48], sizes = [8, 16], strides = [1, 1]} : vector<8x192xf32> to vector<8x16xf32>
    %cst_48 = arith.constant 2.500000e-01 : f32
    %112 = vector.broadcast %cst_48 : f32 to vector<8x16xf32>
    %113 = arith.mulf %111, %112 : vector<8x16xf32>
    %114 = vector.extract_strided_slice %44 {offsets = [0, 112], sizes = [8, 16], strides = [1, 1]} : vector<8x192xf32> to vector<8x16xf32>
    %115 = vector.extract_strided_slice %44 {offsets = [0, 176], sizes = [8, 16], strides = [1, 1]} : vector<8x192xf32> to vector<8x16xf32>
    %cst_49 = arith.constant dense<0.000000e+00> : vector<8x8xf32>
    %116 = tpu.matmul %113, %114, %cst_49 {dimension_numbers = #tpu.dot_dimension_numbers<[1], [1], [0], [0], [0, 0, 1, 0], [], []>} : vector<8x16xf32>, vector<8x16xf32>, vector<8x8xf32> -> vector<8x8xf32>
    %117 = arith.addf %116, %11 : vector<8x8xf32>
    %cst_50 = arith.constant dense<0xFF800000> : vector<8xf32>
    %118 = vector.multi_reduction <maximumf>, %117, %cst_50 [1] : vector<8x8xf32> to vector<8xf32>
    %119 = vector.shape_cast %118 : vector<8xf32> to vector<8x1xf32>
    %120 = vector.broadcast %119 : vector<8x1xf32> to vector<8x8xf32>
    %121 = arith.subf %117, %120 : vector<8x8xf32>
    %122 = math.exp %121 : vector<8x8xf32>
    %cst_51 = arith.constant dense<0.000000e+00> : vector<8xf32>
    %123 = vector.multi_reduction <add>, %122, %cst_51 [1] : vector<8x8xf32> to vector<8xf32>
    %124 = vector.shape_cast %123 : vector<8xf32> to vector<8x1xf32>
    %125 = tpu.reciprocal %124 {approx = true} : vector<8x1xf32> -> vector<8x1xf32>
    %126 = vector.broadcast %125 : vector<8x1xf32> to vector<8x8xf32>
    %127 = arith.mulf %122, %126 : vector<8x8xf32>
    %cst_52 = arith.constant dense<0.000000e+00> : vector<8x16xf32>
    %128 = tpu.matmul %127, %115, %cst_52 {dimension_numbers = #tpu.dot_dimension_numbers<[1], [0], [0], [1], [0, 0, 1, 1], [], []>} : vector<8x8xf32>, vector<8x16xf32>, vector<8x16xf32> -> vector<8x16xf32>
    %129 = vector.extract_strided_slice %46 {offsets = [48, 0], sizes = [16, 64], strides = [1, 1]} : vector<64x64xf32> to vector<16x64xf32>
    %cst_53 = arith.constant dense<0.000000e+00> : vector<8x64xf32>
    %130 = tpu.matmul %128, %129, %cst_53 {dimension_numbers = #tpu.dot_dimension_numbers<[1], [0], [0], [1], [0, 0, 1, 1], [], []>} : vector<8x16xf32>, vector<16x64xf32>, vector<8x64xf32> -> vector<8x64xf32>
    %131 = arith.addf %110, %130 : vector<8x64xf32>
    %132 = arith.addf %5, %131 : vector<8x64xf32>
    %c0_54 = arith.constant 0 : index
    %c0_55 = arith.constant 0 : index
    %c0_56 = arith.constant 0 : index
    %133 = vector.load %arg9[%c0_54, %c0_55, %c0_56] : memref<2x1x64xf32, #tpu.memory_space<vmem>>, vector<1x1x64xf32>
    %134 = vector.shape_cast %133 : vector<1x1x64xf32> to vector<1x64xf32>
    %135 = vector.broadcast %134 : vector<1x64xf32> to vector<8x64xf32>
    %136 = arith.addf %132, %135 : vector<8x64xf32>
    %c0_57 = arith.constant 0 : index
    %c0_58 = arith.constant 0 : index
    %c0_59 = arith.constant 0 : index
    %137 = vector.load %arg10[%c0_57, %c0_58, %c0_59] : memref<2x1x64xf32, #tpu.memory_space<vmem>>, vector<1x1x64xf32>
    %138 = vector.shape_cast %137 : vector<1x1x64xf32> to vector<1x64xf32>
    %c0_60 = arith.constant 0 : index
    %c0_61 = arith.constant 0 : index
    %c0_62 = arith.constant 0 : index
    %139 = vector.load %arg11[%c0_60, %c0_61, %c0_62] : memref<2x1x64xf32, #tpu.memory_space<vmem>>, vector<1x1x64xf32>
    %140 = vector.shape_cast %139 : vector<1x1x64xf32> to vector<1x64xf32>
    %cst_63 = arith.constant dense<0.000000e+00> : vector<8xf32>
    %141 = vector.multi_reduction <add>, %136, %cst_63 [1] : vector<8x64xf32> to vector<8xf32>
    %142 = vector.shape_cast %141 : vector<8xf32> to vector<8x1xf32>
    %cst_64 = arith.constant 6.400000e+01 : f32
    %143 = vector.broadcast %cst_64 : f32 to vector<8x1xf32>
    %144 = arith.divf %142, %143 : vector<8x1xf32>
    %145 = vector.broadcast %144 : vector<8x1xf32> to vector<8x64xf32>
    %146 = arith.subf %136, %145 : vector<8x64xf32>
    %147 = arith.mulf %146, %146 : vector<8x64xf32>
    %cst_65 = arith.constant dense<0.000000e+00> : vector<8xf32>
    %148 = vector.multi_reduction <add>, %147, %cst_65 [1] : vector<8x64xf32> to vector<8xf32>
    %149 = vector.shape_cast %148 : vector<8xf32> to vector<8x1xf32>
    %cst_66 = arith.constant 6.400000e+01 : f32
    %150 = vector.broadcast %cst_66 : f32 to vector<8x1xf32>
    %151 = arith.divf %149, %150 : vector<8x1xf32>
    %152 = vector.broadcast %144 : vector<8x1xf32> to vector<8x64xf32>
    %153 = arith.subf %136, %152 : vector<8x64xf32>
    %cst_67 = arith.constant 9.99999997E-7 : f32
    %154 = vector.broadcast %cst_67 : f32 to vector<8x1xf32>
    %155 = arith.addf %151, %154 : vector<8x1xf32>
    %156 = math.rsqrt %155 : vector<8x1xf32>
    %157 = vector.broadcast %156 : vector<8x1xf32> to vector<8x64xf32>
    %158 = arith.mulf %153, %157 : vector<8x64xf32>
    %159 = vector.broadcast %138 : vector<1x64xf32> to vector<8x64xf32>
    %160 = arith.mulf %158, %159 : vector<8x64xf32>
    %161 = vector.broadcast %140 : vector<1x64xf32> to vector<8x64xf32>
    %162 = arith.addf %160, %161 : vector<8x64xf32>
    %c0_68 = arith.constant 0 : index
    %c0_69 = arith.constant 0 : index
    %c0_70 = arith.constant 0 : index
    %163 = vector.load %arg12[%c0_68, %c0_69, %c0_70] : memref<2x64x256xf32, #tpu.memory_space<vmem>>, vector<1x64x256xf32>
    %164 = vector.shape_cast %163 : vector<1x64x256xf32> to vector<64x256xf32>
    %cst_71 = arith.constant dense<0.000000e+00> : vector<8x256xf32>
    %165 = tpu.matmul %162, %164, %cst_71 {dimension_numbers = #tpu.dot_dimension_numbers<[1], [0], [0], [1], [0, 0, 1, 1], [], []>} : vector<8x64xf32>, vector<64x256xf32>, vector<8x256xf32> -> vector<8x256xf32>
    %c0_72 = arith.constant 0 : index
    %c0_73 = arith.constant 0 : index
    %c0_74 = arith.constant 0 : index
    %166 = vector.load %arg13[%c0_72, %c0_73, %c0_74] : memref<2x1x256xf32, #tpu.memory_space<vmem>>, vector<1x1x256xf32>
    %167 = vector.shape_cast %166 : vector<1x1x256xf32> to vector<1x256xf32>
    %168 = vector.broadcast %167 : vector<1x256xf32> to vector<8x256xf32>
    %169 = arith.addf %165, %168 : vector<8x256xf32>
    %170 = arith.mulf %169, %169 : vector<8x256xf32>
    %171 = arith.mulf %169, %170 : vector<8x256xf32>
    %cst_75 = arith.constant 4.471500e-02 : f32
    %172 = vector.broadcast %cst_75 : f32 to vector<8x256xf32>
    %173 = arith.mulf %172, %171 : vector<8x256xf32>
    %174 = arith.addf %169, %173 : vector<8x256xf32>
    %cst_76 = arith.constant 0.797884583 : f32
    %175 = vector.broadcast %cst_76 : f32 to vector<8x256xf32>
    %176 = arith.mulf %175, %174 : vector<8x256xf32>
    %177 = math.tanh %176 : vector<8x256xf32>
    %cst_77 = arith.constant 1.000000e+00 : f32
    %178 = vector.broadcast %cst_77 : f32 to vector<8x256xf32>
    %179 = arith.addf %178, %177 : vector<8x256xf32>
    %cst_78 = arith.constant 5.000000e-01 : f32
    %180 = vector.broadcast %cst_78 : f32 to vector<8x256xf32>
    %181 = arith.mulf %180, %179 : vector<8x256xf32>
    %182 = arith.mulf %169, %181 : vector<8x256xf32>
    %c0_79 = arith.constant 0 : index
    %c0_80 = arith.constant 0 : index
    %c0_81 = arith.constant 0 : index
    %183 = vector.load %arg14[%c0_79, %c0_80, %c0_81] : memref<2x256x64xf32, #tpu.memory_space<vmem>>, vector<1x256x64xf32>
    %184 = vector.shape_cast %183 : vector<1x256x64xf32> to vector<256x64xf32>
    %cst_82 = arith.constant dense<0.000000e+00> : vector<8x64xf32>
    %185 = tpu.matmul %182, %184, %cst_82 {dimension_numbers = #tpu.dot_dimension_numbers<[1], [0], [0], [1], [0, 0, 1, 1], [], []>} : vector<8x256xf32>, vector<256x64xf32>, vector<8x64xf32> -> vector<8x64xf32>
    %c0_83 = arith.constant 0 : index
    %c0_84 = arith.constant 0 : index
    %c0_85 = arith.constant 0 : index
    %186 = vector.load %arg15[%c0_83, %c0_84, %c0_85] : memref<2x1x64xf32, #tpu.memory_space<vmem>>, vector<1x1x64xf32>
    %187 = vector.shape_cast %186 : vector<1x1x64xf32> to vector<1x64xf32>
    %188 = vector.broadcast %187 : vector<1x64xf32> to vector<8x64xf32>
    %189 = arith.addf %185, %188 : vector<8x64xf32>
    %190 = arith.addf %136, %189 : vector<8x64xf32>
    %c1 = arith.constant 1 : index
    %c0_86 = arith.constant 0 : index
    %c0_87 = arith.constant 0 : index
    %191 = vector.load %arg4[%c1, %c0_86, %c0_87] : memref<2x1x64xf32, #tpu.memory_space<vmem>>, vector<1x1x64xf32>
    %192 = vector.shape_cast %191 : vector<1x1x64xf32> to vector<1x64xf32>
    %c1_88 = arith.constant 1 : index
    %c0_89 = arith.constant 0 : index
    %c0_90 = arith.constant 0 : index
    %193 = vector.load %arg5[%c1_88, %c0_89, %c0_90] : memref<2x1x64xf32, #tpu.memory_space<vmem>>, vector<1x1x64xf32>
    %194 = vector.shape_cast %193 : vector<1x1x64xf32> to vector<1x64xf32>
    %cst_91 = arith.constant dense<0.000000e+00> : vector<8xf32>
    %195 = vector.multi_reduction <add>, %190, %cst_91 [1] : vector<8x64xf32> to vector<8xf32>
    %196 = vector.shape_cast %195 : vector<8xf32> to vector<8x1xf32>
    %cst_92 = arith.constant 6.400000e+01 : f32
    %197 = vector.broadcast %cst_92 : f32 to vector<8x1xf32>
    %198 = arith.divf %196, %197 : vector<8x1xf32>
    %199 = vector.broadcast %198 : vector<8x1xf32> to vector<8x64xf32>
    %200 = arith.subf %190, %199 : vector<8x64xf32>
    %201 = arith.mulf %200, %200 : vector<8x64xf32>
    %cst_93 = arith.constant dense<0.000000e+00> : vector<8xf32>
    %202 = vector.multi_reduction <add>, %201, %cst_93 [1] : vector<8x64xf32> to vector<8xf32>
    %203 = vector.shape_cast %202 : vector<8xf32> to vector<8x1xf32>
    %cst_94 = arith.constant 6.400000e+01 : f32
    %204 = vector.broadcast %cst_94 : f32 to vector<8x1xf32>
    %205 = arith.divf %203, %204 : vector<8x1xf32>
    %206 = vector.broadcast %198 : vector<8x1xf32> to vector<8x64xf32>
    %207 = arith.subf %190, %206 : vector<8x64xf32>
    %cst_95 = arith.constant 9.99999997E-7 : f32
    %208 = vector.broadcast %cst_95 : f32 to vector<8x1xf32>
    %209 = arith.addf %205, %208 : vector<8x1xf32>
    %210 = math.rsqrt %209 : vector<8x1xf32>
    %211 = vector.broadcast %210 : vector<8x1xf32> to vector<8x64xf32>
    %212 = arith.mulf %207, %211 : vector<8x64xf32>
    %213 = vector.broadcast %192 : vector<1x64xf32> to vector<8x64xf32>
    %214 = arith.mulf %212, %213 : vector<8x64xf32>
    %215 = vector.broadcast %194 : vector<1x64xf32> to vector<8x64xf32>
    %216 = arith.addf %214, %215 : vector<8x64xf32>
    %c1_96 = arith.constant 1 : index
    %c0_97 = arith.constant 0 : index
    %c0_98 = arith.constant 0 : index
    %217 = vector.load %arg6[%c1_96, %c0_97, %c0_98] : memref<2x64x192xf32, #tpu.memory_space<vmem>>, vector<1x64x192xf32>
    %218 = vector.shape_cast %217 : vector<1x64x192xf32> to vector<64x192xf32>
    %cst_99 = arith.constant dense<0.000000e+00> : vector<8x192xf32>
    %219 = tpu.matmul %216, %218, %cst_99 {dimension_numbers = #tpu.dot_dimension_numbers<[1], [0], [0], [1], [0, 0, 1, 1], [], []>} : vector<8x64xf32>, vector<64x192xf32>, vector<8x192xf32> -> vector<8x192xf32>
    %c1_100 = arith.constant 1 : index
    %c0_101 = arith.constant 0 : index
    %c0_102 = arith.constant 0 : index
    %220 = vector.load %arg7[%c1_100, %c0_101, %c0_102] : memref<2x1x192xf32, #tpu.memory_space<vmem>>, vector<1x1x192xf32>
    %221 = vector.shape_cast %220 : vector<1x1x192xf32> to vector<1x192xf32>
    %222 = vector.broadcast %221 : vector<1x192xf32> to vector<8x192xf32>
    %223 = arith.addf %219, %222 : vector<8x192xf32>
    %c1_103 = arith.constant 1 : index
    %c0_104 = arith.constant 0 : index
    %c0_105 = arith.constant 0 : index
    %224 = vector.load %arg8[%c1_103, %c0_104, %c0_105] : memref<2x64x64xf32, #tpu.memory_space<vmem>>, vector<1x64x64xf32>
    %225 = vector.shape_cast %224 : vector<1x64x64xf32> to vector<64x64xf32>
    %cst_106 = arith.constant 0.000000e+00 : f32
    %226 = vector.broadcast %cst_106 : f32 to vector<8x64xf32>
    %227 = vector.extract_strided_slice %223 {offsets = [0, 0], sizes = [8, 16], strides = [1, 1]} : vector<8x192xf32> to vector<8x16xf32>
    %cst_107 = arith.constant 2.500000e-01 : f32
    %228 = vector.broadcast %cst_107 : f32 to vector<8x16xf32>
    %229 = arith.mulf %227, %228 : vector<8x16xf32>
    %230 = vector.extract_strided_slice %223 {offsets = [0, 64], sizes = [8, 16], strides = [1, 1]} : vector<8x192xf32> to vector<8x16xf32>
    %231 = vector.extract_strided_slice %223 {offsets = [0, 128], sizes = [8, 16], strides = [1, 1]} : vector<8x192xf32> to vector<8x16xf32>
    %cst_108 = arith.constant dense<0.000000e+00> : vector<8x8xf32>
    %232 = tpu.matmul %229, %230, %cst_108 {dimension_numbers = #tpu.dot_dimension_numbers<[1], [1], [0], [0], [0, 0, 1, 0], [], []>} : vector<8x16xf32>, vector<8x16xf32>, vector<8x8xf32> -> vector<8x8xf32>
    %233 = arith.addf %232, %11 : vector<8x8xf32>
    %cst_109 = arith.constant dense<0xFF800000> : vector<8xf32>
    %234 = vector.multi_reduction <maximumf>, %233, %cst_109 [1] : vector<8x8xf32> to vector<8xf32>
    %235 = vector.shape_cast %234 : vector<8xf32> to vector<8x1xf32>
    %236 = vector.broadcast %235 : vector<8x1xf32> to vector<8x8xf32>
    %237 = arith.subf %233, %236 : vector<8x8xf32>
    %238 = math.exp %237 : vector<8x8xf32>
    %cst_110 = arith.constant dense<0.000000e+00> : vector<8xf32>
    %239 = vector.multi_reduction <add>, %238, %cst_110 [1] : vector<8x8xf32> to vector<8xf32>
    %240 = vector.shape_cast %239 : vector<8xf32> to vector<8x1xf32>
    %241 = tpu.reciprocal %240 {approx = true} : vector<8x1xf32> -> vector<8x1xf32>
    %242 = vector.broadcast %241 : vector<8x1xf32> to vector<8x8xf32>
    %243 = arith.mulf %238, %242 : vector<8x8xf32>
    %cst_111 = arith.constant dense<0.000000e+00> : vector<8x16xf32>
    %244 = tpu.matmul %243, %231, %cst_111 {dimension_numbers = #tpu.dot_dimension_numbers<[1], [0], [0], [1], [0, 0, 1, 1], [], []>} : vector<8x8xf32>, vector<8x16xf32>, vector<8x16xf32> -> vector<8x16xf32>
    %245 = vector.extract_strided_slice %225 {offsets = [0, 0], sizes = [16, 64], strides = [1, 1]} : vector<64x64xf32> to vector<16x64xf32>
    %cst_112 = arith.constant dense<0.000000e+00> : vector<8x64xf32>
    %246 = tpu.matmul %244, %245, %cst_112 {dimension_numbers = #tpu.dot_dimension_numbers<[1], [0], [0], [1], [0, 0, 1, 1], [], []>} : vector<8x16xf32>, vector<16x64xf32>, vector<8x64xf32> -> vector<8x64xf32>
    %247 = arith.addf %226, %246 : vector<8x64xf32>
    %248 = vector.extract_strided_slice %223 {offsets = [0, 16], sizes = [8, 16], strides = [1, 1]} : vector<8x192xf32> to vector<8x16xf32>
    %cst_113 = arith.constant 2.500000e-01 : f32
    %249 = vector.broadcast %cst_113 : f32 to vector<8x16xf32>
    %250 = arith.mulf %248, %249 : vector<8x16xf32>
    %251 = vector.extract_strided_slice %223 {offsets = [0, 80], sizes = [8, 16], strides = [1, 1]} : vector<8x192xf32> to vector<8x16xf32>
    %252 = vector.extract_strided_slice %223 {offsets = [0, 144], sizes = [8, 16], strides = [1, 1]} : vector<8x192xf32> to vector<8x16xf32>
    %cst_114 = arith.constant dense<0.000000e+00> : vector<8x8xf32>
    %253 = tpu.matmul %250, %251, %cst_114 {dimension_numbers = #tpu.dot_dimension_numbers<[1], [1], [0], [0], [0, 0, 1, 0], [], []>} : vector<8x16xf32>, vector<8x16xf32>, vector<8x8xf32> -> vector<8x8xf32>
    %254 = arith.addf %253, %11 : vector<8x8xf32>
    %cst_115 = arith.constant dense<0xFF800000> : vector<8xf32>
    %255 = vector.multi_reduction <maximumf>, %254, %cst_115 [1] : vector<8x8xf32> to vector<8xf32>
    %256 = vector.shape_cast %255 : vector<8xf32> to vector<8x1xf32>
    %257 = vector.broadcast %256 : vector<8x1xf32> to vector<8x8xf32>
    %258 = arith.subf %254, %257 : vector<8x8xf32>
    %259 = math.exp %258 : vector<8x8xf32>
    %cst_116 = arith.constant dense<0.000000e+00> : vector<8xf32>
    %260 = vector.multi_reduction <add>, %259, %cst_116 [1] : vector<8x8xf32> to vector<8xf32>
    %261 = vector.shape_cast %260 : vector<8xf32> to vector<8x1xf32>
    %262 = tpu.reciprocal %261 {approx = true} : vector<8x1xf32> -> vector<8x1xf32>
    %263 = vector.broadcast %262 : vector<8x1xf32> to vector<8x8xf32>
    %264 = arith.mulf %259, %263 : vector<8x8xf32>
    %cst_117 = arith.constant dense<0.000000e+00> : vector<8x16xf32>
    %265 = tpu.matmul %264, %252, %cst_117 {dimension_numbers = #tpu.dot_dimension_numbers<[1], [0], [0], [1], [0, 0, 1, 1], [], []>} : vector<8x8xf32>, vector<8x16xf32>, vector<8x16xf32> -> vector<8x16xf32>
    %266 = vector.extract_strided_slice %225 {offsets = [16, 0], sizes = [16, 64], strides = [1, 1]} : vector<64x64xf32> to vector<16x64xf32>
    %cst_118 = arith.constant dense<0.000000e+00> : vector<8x64xf32>
    %267 = tpu.matmul %265, %266, %cst_118 {dimension_numbers = #tpu.dot_dimension_numbers<[1], [0], [0], [1], [0, 0, 1, 1], [], []>} : vector<8x16xf32>, vector<16x64xf32>, vector<8x64xf32> -> vector<8x64xf32>
    %268 = arith.addf %247, %267 : vector<8x64xf32>
    %269 = vector.extract_strided_slice %223 {offsets = [0, 32], sizes = [8, 16], strides = [1, 1]} : vector<8x192xf32> to vector<8x16xf32>
    %cst_119 = arith.constant 2.500000e-01 : f32
    %270 = vector.broadcast %cst_119 : f32 to vector<8x16xf32>
    %271 = arith.mulf %269, %270 : vector<8x16xf32>
    %272 = vector.extract_strided_slice %223 {offsets = [0, 96], sizes = [8, 16], strides = [1, 1]} : vector<8x192xf32> to vector<8x16xf32>
    %273 = vector.extract_strided_slice %223 {offsets = [0, 160], sizes = [8, 16], strides = [1, 1]} : vector<8x192xf32> to vector<8x16xf32>
    %cst_120 = arith.constant dense<0.000000e+00> : vector<8x8xf32>
    %274 = tpu.matmul %271, %272, %cst_120 {dimension_numbers = #tpu.dot_dimension_numbers<[1], [1], [0], [0], [0, 0, 1, 0], [], []>} : vector<8x16xf32>, vector<8x16xf32>, vector<8x8xf32> -> vector<8x8xf32>
    %275 = arith.addf %274, %11 : vector<8x8xf32>
    %cst_121 = arith.constant dense<0xFF800000> : vector<8xf32>
    %276 = vector.multi_reduction <maximumf>, %275, %cst_121 [1] : vector<8x8xf32> to vector<8xf32>
    %277 = vector.shape_cast %276 : vector<8xf32> to vector<8x1xf32>
    %278 = vector.broadcast %277 : vector<8x1xf32> to vector<8x8xf32>
    %279 = arith.subf %275, %278 : vector<8x8xf32>
    %280 = math.exp %279 : vector<8x8xf32>
    %cst_122 = arith.constant dense<0.000000e+00> : vector<8xf32>
    %281 = vector.multi_reduction <add>, %280, %cst_122 [1] : vector<8x8xf32> to vector<8xf32>
    %282 = vector.shape_cast %281 : vector<8xf32> to vector<8x1xf32>
    %283 = tpu.reciprocal %282 {approx = true} : vector<8x1xf32> -> vector<8x1xf32>
    %284 = vector.broadcast %283 : vector<8x1xf32> to vector<8x8xf32>
    %285 = arith.mulf %280, %284 : vector<8x8xf32>
    %cst_123 = arith.constant dense<0.000000e+00> : vector<8x16xf32>
    %286 = tpu.matmul %285, %273, %cst_123 {dimension_numbers = #tpu.dot_dimension_numbers<[1], [0], [0], [1], [0, 0, 1, 1], [], []>} : vector<8x8xf32>, vector<8x16xf32>, vector<8x16xf32> -> vector<8x16xf32>
    %287 = vector.extract_strided_slice %225 {offsets = [32, 0], sizes = [16, 64], strides = [1, 1]} : vector<64x64xf32> to vector<16x64xf32>
    %cst_124 = arith.constant dense<0.000000e+00> : vector<8x64xf32>
    %288 = tpu.matmul %286, %287, %cst_124 {dimension_numbers = #tpu.dot_dimension_numbers<[1], [0], [0], [1], [0, 0, 1, 1], [], []>} : vector<8x16xf32>, vector<16x64xf32>, vector<8x64xf32> -> vector<8x64xf32>
    %289 = arith.addf %268, %288 : vector<8x64xf32>
    %290 = vector.extract_strided_slice %223 {offsets = [0, 48], sizes = [8, 16], strides = [1, 1]} : vector<8x192xf32> to vector<8x16xf32>
    %cst_125 = arith.constant 2.500000e-01 : f32
    %291 = vector.broadcast %cst_125 : f32 to vector<8x16xf32>
    %292 = arith.mulf %290, %291 : vector<8x16xf32>
    %293 = vector.extract_strided_slice %223 {offsets = [0, 112], sizes = [8, 16], strides = [1, 1]} : vector<8x192xf32> to vector<8x16xf32>
    %294 = vector.extract_strided_slice %223 {offsets = [0, 176], sizes = [8, 16], strides = [1, 1]} : vector<8x192xf32> to vector<8x16xf32>
    %cst_126 = arith.constant dense<0.000000e+00> : vector<8x8xf32>
    %295 = tpu.matmul %292, %293, %cst_126 {dimension_numbers = #tpu.dot_dimension_numbers<[1], [1], [0], [0], [0, 0, 1, 0], [], []>} : vector<8x16xf32>, vector<8x16xf32>, vector<8x8xf32> -> vector<8x8xf32>
    %296 = arith.addf %295, %11 : vector<8x8xf32>
    %cst_127 = arith.constant dense<0xFF800000> : vector<8xf32>
    %297 = vector.multi_reduction <maximumf>, %296, %cst_127 [1] : vector<8x8xf32> to vector<8xf32>
    %298 = vector.shape_cast %297 : vector<8xf32> to vector<8x1xf32>
    %299 = vector.broadcast %298 : vector<8x1xf32> to vector<8x8xf32>
    %300 = arith.subf %296, %299 : vector<8x8xf32>
    %301 = math.exp %300 : vector<8x8xf32>
    %cst_128 = arith.constant dense<0.000000e+00> : vector<8xf32>
    %302 = vector.multi_reduction <add>, %301, %cst_128 [1] : vector<8x8xf32> to vector<8xf32>
    %303 = vector.shape_cast %302 : vector<8xf32> to vector<8x1xf32>
    %304 = tpu.reciprocal %303 {approx = true} : vector<8x1xf32> -> vector<8x1xf32>
    %305 = vector.broadcast %304 : vector<8x1xf32> to vector<8x8xf32>
    %306 = arith.mulf %301, %305 : vector<8x8xf32>
    %cst_129 = arith.constant dense<0.000000e+00> : vector<8x16xf32>
    %307 = tpu.matmul %306, %294, %cst_129 {dimension_numbers = #tpu.dot_dimension_numbers<[1], [0], [0], [1], [0, 0, 1, 1], [], []>} : vector<8x8xf32>, vector<8x16xf32>, vector<8x16xf32> -> vector<8x16xf32>
    %308 = vector.extract_strided_slice %225 {offsets = [48, 0], sizes = [16, 64], strides = [1, 1]} : vector<64x64xf32> to vector<16x64xf32>
    %cst_130 = arith.constant dense<0.000000e+00> : vector<8x64xf32>
    %309 = tpu.matmul %307, %308, %cst_130 {dimension_numbers = #tpu.dot_dimension_numbers<[1], [0], [0], [1], [0, 0, 1, 1], [], []>} : vector<8x16xf32>, vector<16x64xf32>, vector<8x64xf32> -> vector<8x64xf32>
    %310 = arith.addf %289, %309 : vector<8x64xf32>
    %311 = arith.addf %190, %310 : vector<8x64xf32>
    %c1_131 = arith.constant 1 : index
    %c0_132 = arith.constant 0 : index
    %c0_133 = arith.constant 0 : index
    %312 = vector.load %arg9[%c1_131, %c0_132, %c0_133] : memref<2x1x64xf32, #tpu.memory_space<vmem>>, vector<1x1x64xf32>
    %313 = vector.shape_cast %312 : vector<1x1x64xf32> to vector<1x64xf32>
    %314 = vector.broadcast %313 : vector<1x64xf32> to vector<8x64xf32>
    %315 = arith.addf %311, %314 : vector<8x64xf32>
    %c1_134 = arith.constant 1 : index
    %c0_135 = arith.constant 0 : index
    %c0_136 = arith.constant 0 : index
    %316 = vector.load %arg10[%c1_134, %c0_135, %c0_136] : memref<2x1x64xf32, #tpu.memory_space<vmem>>, vector<1x1x64xf32>
    %317 = vector.shape_cast %316 : vector<1x1x64xf32> to vector<1x64xf32>
    %c1_137 = arith.constant 1 : index
    %c0_138 = arith.constant 0 : index
    %c0_139 = arith.constant 0 : index
    %318 = vector.load %arg11[%c1_137, %c0_138, %c0_139] : memref<2x1x64xf32, #tpu.memory_space<vmem>>, vector<1x1x64xf32>
    %319 = vector.shape_cast %318 : vector<1x1x64xf32> to vector<1x64xf32>
    %cst_140 = arith.constant dense<0.000000e+00> : vector<8xf32>
    %320 = vector.multi_reduction <add>, %315, %cst_140 [1] : vector<8x64xf32> to vector<8xf32>
    %321 = vector.shape_cast %320 : vector<8xf32> to vector<8x1xf32>
    %cst_141 = arith.constant 6.400000e+01 : f32
    %322 = vector.broadcast %cst_141 : f32 to vector<8x1xf32>
    %323 = arith.divf %321, %322 : vector<8x1xf32>
    %324 = vector.broadcast %323 : vector<8x1xf32> to vector<8x64xf32>
    %325 = arith.subf %315, %324 : vector<8x64xf32>
    %326 = arith.mulf %325, %325 : vector<8x64xf32>
    %cst_142 = arith.constant dense<0.000000e+00> : vector<8xf32>
    %327 = vector.multi_reduction <add>, %326, %cst_142 [1] : vector<8x64xf32> to vector<8xf32>
    %328 = vector.shape_cast %327 : vector<8xf32> to vector<8x1xf32>
    %cst_143 = arith.constant 6.400000e+01 : f32
    %329 = vector.broadcast %cst_143 : f32 to vector<8x1xf32>
    %330 = arith.divf %328, %329 : vector<8x1xf32>
    %331 = vector.broadcast %323 : vector<8x1xf32> to vector<8x64xf32>
    %332 = arith.subf %315, %331 : vector<8x64xf32>
    %cst_144 = arith.constant 9.99999997E-7 : f32
    %333 = vector.broadcast %cst_144 : f32 to vector<8x1xf32>
    %334 = arith.addf %330, %333 : vector<8x1xf32>
    %335 = math.rsqrt %334 : vector<8x1xf32>
    %336 = vector.broadcast %335 : vector<8x1xf32> to vector<8x64xf32>
    %337 = arith.mulf %332, %336 : vector<8x64xf32>
    %338 = vector.broadcast %317 : vector<1x64xf32> to vector<8x64xf32>
    %339 = arith.mulf %337, %338 : vector<8x64xf32>
    %340 = vector.broadcast %319 : vector<1x64xf32> to vector<8x64xf32>
    %341 = arith.addf %339, %340 : vector<8x64xf32>
    %c1_145 = arith.constant 1 : index
    %c0_146 = arith.constant 0 : index
    %c0_147 = arith.constant 0 : index
    %342 = vector.load %arg12[%c1_145, %c0_146, %c0_147] : memref<2x64x256xf32, #tpu.memory_space<vmem>>, vector<1x64x256xf32>
    %343 = vector.shape_cast %342 : vector<1x64x256xf32> to vector<64x256xf32>
    %cst_148 = arith.constant dense<0.000000e+00> : vector<8x256xf32>
    %344 = tpu.matmul %341, %343, %cst_148 {dimension_numbers = #tpu.dot_dimension_numbers<[1], [0], [0], [1], [0, 0, 1, 1], [], []>} : vector<8x64xf32>, vector<64x256xf32>, vector<8x256xf32> -> vector<8x256xf32>
    %c1_149 = arith.constant 1 : index
    %c0_150 = arith.constant 0 : index
    %c0_151 = arith.constant 0 : index
    %345 = vector.load %arg13[%c1_149, %c0_150, %c0_151] : memref<2x1x256xf32, #tpu.memory_space<vmem>>, vector<1x1x256xf32>
    %346 = vector.shape_cast %345 : vector<1x1x256xf32> to vector<1x256xf32>
    %347 = vector.broadcast %346 : vector<1x256xf32> to vector<8x256xf32>
    %348 = arith.addf %344, %347 : vector<8x256xf32>
    %349 = arith.mulf %348, %348 : vector<8x256xf32>
    %350 = arith.mulf %348, %349 : vector<8x256xf32>
    %cst_152 = arith.constant 4.471500e-02 : f32
    %351 = vector.broadcast %cst_152 : f32 to vector<8x256xf32>
    %352 = arith.mulf %351, %350 : vector<8x256xf32>
    %353 = arith.addf %348, %352 : vector<8x256xf32>
    %cst_153 = arith.constant 0.797884583 : f32
    %354 = vector.broadcast %cst_153 : f32 to vector<8x256xf32>
    %355 = arith.mulf %354, %353 : vector<8x256xf32>
    %356 = math.tanh %355 : vector<8x256xf32>
    %cst_154 = arith.constant 1.000000e+00 : f32
    %357 = vector.broadcast %cst_154 : f32 to vector<8x256xf32>
    %358 = arith.addf %357, %356 : vector<8x256xf32>
    %cst_155 = arith.constant 5.000000e-01 : f32
    %359 = vector.broadcast %cst_155 : f32 to vector<8x256xf32>
    %360 = arith.mulf %359, %358 : vector<8x256xf32>
    %361 = arith.mulf %348, %360 : vector<8x256xf32>
    %c1_156 = arith.constant 1 : index
    %c0_157 = arith.constant 0 : index
    %c0_158 = arith.constant 0 : index
    %362 = vector.load %arg14[%c1_156, %c0_157, %c0_158] : memref<2x256x64xf32, #tpu.memory_space<vmem>>, vector<1x256x64xf32>
    %363 = vector.shape_cast %362 : vector<1x256x64xf32> to vector<256x64xf32>
    %cst_159 = arith.constant dense<0.000000e+00> : vector<8x64xf32>
    %364 = tpu.matmul %361, %363, %cst_159 {dimension_numbers = #tpu.dot_dimension_numbers<[1], [0], [0], [1], [0, 0, 1, 1], [], []>} : vector<8x256xf32>, vector<256x64xf32>, vector<8x64xf32> -> vector<8x64xf32>
    %c1_160 = arith.constant 1 : index
    %c0_161 = arith.constant 0 : index
    %c0_162 = arith.constant 0 : index
    %365 = vector.load %arg15[%c1_160, %c0_161, %c0_162] : memref<2x1x64xf32, #tpu.memory_space<vmem>>, vector<1x1x64xf32>
    %366 = vector.shape_cast %365 : vector<1x1x64xf32> to vector<1x64xf32>
    %367 = vector.broadcast %366 : vector<1x64xf32> to vector<8x64xf32>
    %368 = arith.addf %364, %367 : vector<8x64xf32>
    %369 = arith.addf %315, %368 : vector<8x64xf32>
    %c0_163 = arith.constant 0 : index
    %c0_164 = arith.constant 0 : index
    %370 = vector.load %arg16[%c0_163, %c0_164] : memref<1x64xf32, #tpu.memory_space<vmem>>, vector<1x64xf32>
    %c0_165 = arith.constant 0 : index
    %c0_166 = arith.constant 0 : index
    %371 = vector.load %arg17[%c0_165, %c0_166] : memref<1x64xf32, #tpu.memory_space<vmem>>, vector<1x64xf32>
    %cst_167 = arith.constant dense<0.000000e+00> : vector<8xf32>
    %372 = vector.multi_reduction <add>, %369, %cst_167 [1] : vector<8x64xf32> to vector<8xf32>
    %373 = vector.shape_cast %372 : vector<8xf32> to vector<8x1xf32>
    %cst_168 = arith.constant 6.400000e+01 : f32
    %374 = vector.broadcast %cst_168 : f32 to vector<8x1xf32>
    %375 = arith.divf %373, %374 : vector<8x1xf32>
    %376 = vector.broadcast %375 : vector<8x1xf32> to vector<8x64xf32>
    %377 = arith.subf %369, %376 : vector<8x64xf32>
    %378 = arith.mulf %377, %377 : vector<8x64xf32>
    %cst_169 = arith.constant dense<0.000000e+00> : vector<8xf32>
    %379 = vector.multi_reduction <add>, %378, %cst_169 [1] : vector<8x64xf32> to vector<8xf32>
    %380 = vector.shape_cast %379 : vector<8xf32> to vector<8x1xf32>
    %cst_170 = arith.constant 6.400000e+01 : f32
    %381 = vector.broadcast %cst_170 : f32 to vector<8x1xf32>
    %382 = arith.divf %380, %381 : vector<8x1xf32>
    %383 = vector.broadcast %375 : vector<8x1xf32> to vector<8x64xf32>
    %384 = arith.subf %369, %383 : vector<8x64xf32>
    %cst_171 = arith.constant 9.99999997E-7 : f32
    %385 = vector.broadcast %cst_171 : f32 to vector<8x1xf32>
    %386 = arith.addf %382, %385 : vector<8x1xf32>
    %387 = math.rsqrt %386 : vector<8x1xf32>
    %388 = vector.broadcast %387 : vector<8x1xf32> to vector<8x64xf32>
    %389 = arith.mulf %384, %388 : vector<8x64xf32>
    %390 = vector.broadcast %370 : vector<1x64xf32> to vector<8x64xf32>
    %391 = arith.mulf %389, %390 : vector<8x64xf32>
    %392 = vector.broadcast %371 : vector<1x64xf32> to vector<8x64xf32>
    %393 = arith.addf %391, %392 : vector<8x64xf32>
    %c0_172 = arith.constant 0 : index
    %c0_173 = arith.constant 0 : index
    %c0_174 = arith.constant 0 : index
    %394 = vector.load %arg18[%c0_172, %c0_173, %c0_174] : memref<1x8x64xf32, #tpu.memory_space<vmem>>, vector<1x8x64xf32>
    %395 = vector.shape_cast %394 : vector<1x8x64xf32> to vector<8x64xf32>
    %396 = vector.shape_cast %393 : vector<8x64xf32> to vector<1x8x64xf32>
    tpu.vector_store %arg18[%c0_172, %c0_173, %c0_174], %396 {strides = array<i32>} : memref<1x8x64xf32, #tpu.memory_space<vmem>>, vector<1x8x64xf32>,
    return
  }
  func.func @transform_0(%arg0: i32) -> (i32, i32, i32) {
    %c0_i32 = arith.constant 0 : i32
    %c0_i32_0 = arith.constant 0 : i32
    %c0_i32_1 = arith.constant 0 : i32
    return %arg0, %c0_i32, %c0_i32_0 : i32, i32, i32
  }
  func.func @transform_1(%arg0: i32) -> (i32, i32) {
    %c0_i32 = arith.constant 0 : i32
    %c0_i32_0 = arith.constant 0 : i32
    %c0_i32_1 = arith.constant 0 : i32
    return %c0_i32, %c0_i32_0 : i32, i32
  }
  func.func @transform_2(%arg0: i32) -> (i32, i32) {
    %c0_i32 = arith.constant 0 : i32
    %c0_i32_0 = arith.constant 0 : i32
    %c0_i32_1 = arith.constant 0 : i32
    return %c0_i32, %c0_i32_0 : i32, i32
  }
  func.func @transform_3(%arg0: i32) -> (i32, i32, i32) {
    %c0_i32 = arith.constant 0 : i32
    %c0_i32_0 = arith.constant 0 : i32
    %c0_i32_1 = arith.constant 0 : i32
    %c0_i32_2 = arith.constant 0 : i32
    return %c0_i32, %c0_i32_0, %c0_i32_1 : i32, i32, i32
  }
  func.func @transform_4(%arg0: i32) -> (i32, i32, i32) {
    %c0_i32 = arith.constant 0 : i32
    %c0_i32_0 = arith.constant 0 : i32
    %c0_i32_1 = arith.constant 0 : i32
    %c0_i32_2 = arith.constant 0 : i32
    return %c0_i32, %c0_i32_0, %c0_i32_1 : i32, i32, i32
  }
  func.func @transform_5(%arg0: i32) -> (i32, i32, i32) {
    %c0_i32 = arith.constant 0 : i32
    %c0_i32_0 = arith.constant 0 : i32
    %c0_i32_1 = arith.constant 0 : i32
    %c0_i32_2 = arith.constant 0 : i32
    return %c0_i32, %c0_i32_0, %c0_i32_1 : i32, i32, i32
  }
  func.func @transform_6(%arg0: i32) -> (i32, i32, i32) {
    %c0_i32 = arith.constant 0 : i32
    %c0_i32_0 = arith.constant 0 : i32
    %c0_i32_1 = arith.constant 0 : i32
    %c0_i32_2 = arith.constant 0 : i32
    return %c0_i32, %c0_i32_0, %c0_i32_1 : i32, i32, i32
  }
  func.func @transform_7(%arg0: i32) -> (i32, i32, i32) {
    %c0_i32 = arith.constant 0 : i32
    %c0_i32_0 = arith.constant 0 : i32
    %c0_i32_1 = arith.constant 0 : i32
    %c0_i32_2 = arith.constant 0 : i32
    return %c0_i32, %c0_i32_0, %c0_i32_1 : i32, i32, i32
  }
  func.func @transform_8(%arg0: i32) -> (i32, i32, i32) {
    %c0_i32 = arith.constant 0 : i32
    %c0_i32_0 = arith.constant 0 : i32
    %c0_i32_1 = arith.constant 0 : i32
    %c0_i32_2 = arith.constant 0 : i32
    return %c0_i32, %c0_i32_0, %c0_i32_1 : i32, i32, i32
  }
  func.func @transform_9(%arg0: i32) -> (i32, i32, i32) {
    %c0_i32 = arith.constant 0 : i32
    %c0_i32_0 = arith.constant 0 : i32
    %c0_i32_1 = arith.constant 0 : i32
    %c0_i32_2 = arith.constant 0 : i32
    return %c0_i32, %c0_i32_0, %c0_i32_1 : i32, i32, i32
  }
  func.func @transform_10(%arg0: i32) -> (i32, i32, i32) {
    %c0_i32 = arith.constant 0 : i32
    %c0_i32_0 = arith.constant 0 : i32
    %c0_i32_1 = arith.constant 0 : i32
    %c0_i32_2 = arith.constant 0 : i32
    return %c0_i32, %c0_i32_0, %c0_i32_1 : i32, i32, i32
  }
  func.func @transform_11(%arg0: i32) -> (i32, i32, i32) {
    %c0_i32 = arith.constant 0 : i32
    %c0_i32_0 = arith.constant 0 : i32
    %c0_i32_1 = arith.constant 0 : i32
    %c0_i32_2 = arith.constant 0 : i32
    return %c0_i32, %c0_i32_0, %c0_i32_1 : i32, i32, i32
  }
  func.func @transform_12(%arg0: i32) -> (i32, i32, i32) {
    %c0_i32 = arith.constant 0 : i32
    %c0_i32_0 = arith.constant 0 : i32
    %c0_i32_1 = arith.constant 0 : i32
    %c0_i32_2 = arith.constant 0 : i32
    return %c0_i32, %c0_i32_0, %c0_i32_1 : i32, i32, i32
  }
  func.func @transform_13(%arg0: i32) -> (i32, i32, i32) {
    %c0_i32 = arith.constant 0 : i32
    %c0_i32_0 = arith.constant 0 : i32
    %c0_i32_1 = arith.constant 0 : i32
    %c0_i32_2 = arith.constant 0 : i32
    return %c0_i32, %c0_i32_0, %c0_i32_1 : i32, i32, i32
  }
  func.func @transform_14(%arg0: i32) -> (i32, i32, i32) {
    %c0_i32 = arith.constant 0 : i32
    %c0_i32_0 = arith.constant 0 : i32
    %c0_i32_1 = arith.constant 0 : i32
    %c0_i32_2 = arith.constant 0 : i32
    return %c0_i32, %c0_i32_0, %c0_i32_1 : i32, i32, i32
  }
  func.func @transform_15(%arg0: i32) -> (i32, i32) {
    %c0_i32 = arith.constant 0 : i32
    %c0_i32_0 = arith.constant 0 : i32
    %c0_i32_1 = arith.constant 0 : i32
    return %c0_i32, %c0_i32_0 : i32, i32
  }
  func.func @transform_16(%arg0: i32) -> (i32, i32) {
    %c0_i32 = arith.constant 0 : i32
    %c0_i32_0 = arith.constant 0 : i32
    %c0_i32_1 = arith.constant 0 : i32
    return %c0_i32, %c0_i32_0 : i32, i32
  }
  func.func @transform_17(%arg0: i32) -> (i32, i32, i32) {
    %c0_i32 = arith.constant 0 : i32
    %c0_i32_0 = arith.constant 0 : i32
    %c0_i32_1 = arith.constant 0 : i32
    return %arg0, %c0_i32, %c0_i32_0 : i32, i32, i32
  }
}

</mosaic_0001>

<llo_original>
// kernel: vit_forward.1
$region0: #{vit_forward.1}
  #allocation0 [shape = 'u32[]', space=smem, size = 0x4, offset = 0x4, fixed_abs, tag = 'smem constant byte address 0x4 - core index']
  #allocation1 [shape = 'u32[72,128]{1,0:T(1,128)}', space=vmem, size = 0x9000, scoped, tag = 'internal scratch']
  %s0 = inlined_call_operand.vmem [shape: f32[2,8,768], index: 0, kind: input, shape index: {}]
  %s1 = inlined_call_operand.vmem [shape: f32[8,64], index: 1, kind: input, shape index: {}]
  %s2 = inlined_call_operand.vmem [shape: f32[768,64], index: 2, kind: input, shape index: {}]
  %s3 = inlined_call_operand.vmem [shape: f32[2,1,64], index: 3, kind: input, shape index: {}, may-alias: {3,9}]
  %s4 = inlined_call_operand.vmem [shape: f32[2,1,64], index: 4, kind: input, shape index: {}, may-alias: {4,10}]
  %s5 = inlined_call_operand.vmem [shape: f32[2,64,192], index: 5, kind: input, shape index: {}]
  %s6 = inlined_call_operand.vmem [shape: f32[2,1,192], index: 6, kind: input, shape index: {}]
  %s7 = inlined_call_operand.hbm [shape: f32[2,64,64], index: 7, kind: input, shape index: {}]
  %s8 = inlined_call_operand.vmem [shape: f32[2,1,64], index: 8, kind: input, shape index: {}]
  %s9 = inlined_call_operand.vmem [shape: f32[2,1,64], index: 9, kind: input, shape index: {}, may-alias: {3,9}]
  %s10 = inlined_call_operand.vmem [shape: f32[2,1,64], index: 10, kind: input, shape index: {}, may-alias: {4,10}]
  %s11 = inlined_call_operand.vmem [shape: f32[2,64,256], index: 11, kind: input, shape index: {}]
  %s12 = inlined_call_operand.vmem [shape: f32[2,1,256], index: 12, kind: input, shape index: {}]
  %s13 = inlined_call_operand.vmem [shape: f32[2,256,64], index: 13, kind: input, shape index: {}]
  %s14 = inlined_call_operand.vmem [shape: f32[2,1,64], index: 14, kind: input, shape index: {}]
  %s15 = inlined_call_operand.vmem [shape: f32[1,64], index: 15, kind: input, shape index: {}]
  %s16 = inlined_call_operand.vmem [shape: f32[1,64], index: 16, kind: input, shape index: {}]
  %s17 = inlined_call_operand.vmem [shape: f32[2,8,64], index: 17, kind: output, shape index: {}]
  %s18 = sld [smem:[#allocation0]]
  $region105: #{vit_forward.1} parent=0
    _
  %s20 = ssub.s32 1, %s18
  %s21 = scalar_select 0, %s20, %s18
  $region1: #{vit_forward.1} parent=0
    #allocation2 [shape = 'u8[65536]{0}', space=vmem, size = 0x10000, scoped, tag = 'input window, operand 7, single buffered']
    #allocation3 [shape = 's32[2]{0}', space=sflag, size = 0x8, scoped, tag = 'scoped memory for vit_forward.1']
    %22 = vsyncpa [#allocation3], 0
    loop: start=0, step=1, limit=4
    $region2: #{vit_forward.1} parent=1 // loop_pre_header
      _
    $region3: #{vit_forward.1} parent=1 // loop_header
      %s24 = sphi 0, %s28
      %p25 = scmp.ge.s32.totalorder %s24, 4
      %s34 = sphi 0, %s36
      %s37 = sphi 0, %s34
      %s38 = sphi 0, %s37
      %s54 = sphi 0, %s38
      %s58 = sphi 0, %s58
      %s60 = sphi 0, %s58
      %s61 = sphi 0, %s60
      %s75 = sphi 0, %s61
      %s79 = sphi 0, %s79
      %s81 = sphi 0, %s79
      %s82 = sphi 0, %s81
      %s96 = sphi 0, %s82
      %s100 = sphi 0, %s100
      %s102 = sphi 0, %s100
      %s103 = sphi 0, %s102
      %s117 = sphi 0, %s103
      %s121 = sphi 0, %s121
      %s123 = sphi 0, %s121
      %s124 = sphi 0, %s123
      %s138 = sphi 0, %s124
      %s142 = sphi 0, %s142
      %s144 = sphi 0, %s142
      %s145 = sphi 0, %s144
      %s159 = sphi 0, %s145
      %s163 = sphi 0, %s163
      %s165 = sphi 0, %s163
      %s166 = sphi 0, %s165
      %s180 = sphi 0, %s166
      %s184 = sphi 0, %s184
      %s186 = sphi 0, %s184
      %s187 = sphi 0, %s186
      %s201 = sphi 0, %s187
      %s205 = sphi 0, %s205
      %s207 = sphi 0, %s205
      %s208 = sphi 0, %s207
      %s222 = sphi 0, %s208
      %s226 = sphi 0, %s226
      %s228 = sphi 0, %s226
      %s229 = sphi 0, %s228
      %s243 = sphi 0, %s229
      %s247 = sphi 0, %s247
      %s249 = sphi 0, %s247
      %s250 = sphi 0, %s249
      %s264 = sphi 0, %s250
      %s268 = sphi 0, %s268
      %s270 = sphi 0, %s268
      %s271 = sphi 0, %s270
      %s285 = sphi 0, %s271
      %s289 = sphi 0, %s289
      %s291 = sphi 0, %s289
      %s292 = sphi 0, %s291
      %s306 = sphi 0, %s292
      %s310 = sphi 0, %s310
      %s312 = sphi 0, %s310
      %s313 = sphi 0, %s312
      %s327 = sphi 0, %s313
      %s331 = sphi 0, %s331
      %s333 = sphi 0, %s331
      %s334 = sphi 0, %s333
      %s348 = sphi 0, %s334
      %s352 = sphi 0, %s352
      %s354 = sphi 0, %s352
      %s355 = sphi 0, %s354
      %s369 = sphi 0, %s355
      %s373 = sphi 0, %s373
      %s375 = sphi 0, %s373
      %s376 = sphi 0, %s375
      %s390 = sphi 0, %s376
      %s396 = sphi 0, %s398
      %s399 = sphi 0, %s396
      %s400 = sphi 0, %s399
      %s416 = sphi 0, %s400
    $region4: #{vit_forward.1} parent=1 // loop_header_branch
      %27 = sbr.rel (%p25) target = $region8
    $region5: #{vit_forward.1} parent=1 // loop_body
      %s29 = ssub.s32 %s24, 1
      %s30 = ssub.s32 %s24, 2
      %s31 = sadd.s32 %s24, 1
      %s32 = ssub.s32 %s24, %s31
      %p33 = scmp.eq.s32.totalorder %s32, 0
      %s35 = sadd.s32 %s34, 1
      %s36 = scalar_select %p33, %s34, %s35
      %p39 = pneg %p33
      %p40 = scmp.eq.s32.totalorder %s24, 1
      %p41 = por %p39, %p40
      %p42 = scmp.ne.s32.totalorder %s34, %s37
      %p43 = scmp.eq.s32.totalorder %s24, 0
      %p44 = por %p42, %p43
      %p45 = scmp.ne.s32.totalorder %s34, %s37
      %p46 = scmp.eq.s32.totalorder %s29, 1
      %p47 = por %p45, %p46
      %p48 = scmp.ne.s32.totalorder %s37, %s38
      %p49 = scmp.eq.s32.totalorder %s29, 0
      %p50 = por %p48, %p49
      %p51 = scmp.ne.s32.totalorder %s37, %s38
      %p52 = scmp.eq.s32.totalorder %s30, 1
      %p53 = por %p51, %p52
      %p55 = scmp.ne.s32.totalorder %s38, %s54
      %p56 = scmp.eq.s32.totalorder %s30, 0
      %p57 = por %p55, %p56
      %s59 = sadd.s32 %s58, 1
      %p62 = scmp.eq.s32.totalorder %s24, 1
      %p63 = scmp.ne.s32.totalorder %s58, %s60
      %p64 = scmp.eq.s32.totalorder %s24, 0
      %p65 = por %p63, %p64
      %p66 = scmp.ne.s32.totalorder %s58, %s60
      %p67 = scmp.eq.s32.totalorder %s29, 1
      %p68 = por %p66, %p67
      %p69 = scmp.ne.s32.totalorder %s60, %s61
      %p70 = scmp.eq.s32.totalorder %s29, 0
      %p71 = por %p69, %p70
      %p72 = scmp.ne.s32.totalorder %s60, %s61
      %p73 = scmp.eq.s32.totalorder %s30, 1
      %p74 = por %p72, %p73
      %p76 = scmp.ne.s32.totalorder %s61, %s75
      %p77 = scmp.eq.s32.totalorder %s30, 0
      %p78 = por %p76, %p77
      %s80 = sadd.s32 %s79, 1
      %p83 = scmp.eq.s32.totalorder %s24, 1
      %p84 = scmp.ne.s32.totalorder %s79, %s81
      %p85 = scmp.eq.s32.totalorder %s24, 0
      %p86 = por %p84, %p85
      %p87 = scmp.ne.s32.totalorder %s79, %s81
      %p88 = scmp.eq.s32.totalorder %s29, 1
      %p89 = por %p87, %p88
      %p90 = scmp.ne.s32.totalorder %s81, %s82
      %p91 = scmp.eq.s32.totalorder %s29, 0
      %p92 = por %p90, %p91
      %p93 = scmp.ne.s32.totalorder %s81, %s82
      %p94 = scmp.eq.s32.totalorder %s30, 1
      %p95 = por %p93, %p94
      %p97 = scmp.ne.s32.totalorder %s82, %s96
      %p98 = scmp.eq.s32.totalorder %s30, 0
      %p99 = por %p97, %p98
      %s101 = sadd.s32 %s100, 1
      %p104 = scmp.eq.s32.totalorder %s24, 1
      %p105 = scmp.ne.s32.totalorder %s100, %s102
      %p106 = scmp.eq.s32.totalorder %s24, 0
      %p107 = por %p105, %p106
      %p108 = scmp.ne.s32.totalorder %s100, %s102
      %p109 = scmp.eq.s32.totalorder %s29, 1
      %p110 = por %p108, %p109
      %p111 = scmp.ne.s32.totalorder %s102, %s103
      %p112 = scmp.eq.s32.totalorder %s29, 0
      %p113 = por %p111, %p112
      %p114 = scmp.ne.s32.totalorder %s102, %s103
      %p115 = scmp.eq.s32.totalorder %s30, 1
      %p116 = por %p114, %p115
      %p118 = scmp.ne.s32.totalorder %s103, %s117
      %p119 = scmp.eq.s32.totalorder %s30, 0
      %p120 = por %p118, %p119
      %s122 = sadd.s32 %s121, 1
      %p125 = scmp.eq.s32.totalorder %s24, 1
      %p126 = scmp.ne.s32.totalorder %s121, %s123
      %p127 = scmp.eq.s32.totalorder %s24, 0
      %p128 = por %p126, %p127
      %p129 = scmp.ne.s32.totalorder %s121, %s123
      %p130 = scmp.eq.s32.totalorder %s29, 1
      %p131 = por %p129, %p130
      %p132 = scmp.ne.s32.totalorder %s123, %s124
      %p133 = scmp.eq.s32.totalorder %s29, 0
      %p134 = por %p132, %p133
      %p135 = scmp.ne.s32.totalorder %s123, %s124
      %p136 = scmp.eq.s32.totalorder %s30, 1
      %p137 = por %p135, %p136
      %p139 = scmp.ne.s32.totalorder %s124, %s138
      %p140 = scmp.eq.s32.totalorder %s30, 0
      %p141 = por %p139, %p140
      %s143 = sadd.s32 %s142, 1
      %p146 = scmp.eq.s32.totalorder %s24, 1
      %p147 = scmp.ne.s32.totalorder %s142, %s144
      %p148 = scmp.eq.s32.totalorder %s24, 0
      %p149 = por %p147, %p148
      %p150 = scmp.ne.s32.totalorder %s142, %s144
      %p151 = scmp.eq.s32.totalorder %s29, 1
      %p152 = por %p150, %p151
      %p153 = scmp.ne.s32.totalorder %s144, %s145
      %p154 = scmp.eq.s32.totalorder %s29, 0
      %p155 = por %p153, %p154
      %p156 = scmp.ne.s32.totalorder %s144, %s145
      %p157 = scmp.eq.s32.totalorder %s30, 1
      %p158 = por %p156, %p157
      %p160 = scmp.ne.s32.totalorder %s145, %s159
      %p161 = scmp.eq.s32.totalorder %s30, 0
      %p162 = por %p160, %p161
      %s164 = sadd.s32 %s163, 1
      %p167 = scmp.eq.s32.totalorder %s24, 1
      %p168 = scmp.ne.s32.totalorder %s163, %s165
      %p169 = scmp.eq.s32.totalorder %s24, 0
      %p170 = por %p168, %p169
      %p171 = scmp.ne.s32.totalorder %s163, %s165
      %p172 = scmp.eq.s32.totalorder %s29, 1
      %p173 = por %p171, %p172
      %p174 = scmp.ne.s32.totalorder %s165, %s166
      %p175 = scmp.eq.s32.totalorder %s29, 0
      %p176 = por %p174, %p175
      %p177 = scmp.ne.s32.totalorder %s165, %s166
      %p178 = scmp.eq.s32.totalorder %s30, 1
      %p179 = por %p177, %p178
      %p181 = scmp.ne.s32.totalorder %s166, %s180
      %p182 = scmp.eq.s32.totalorder %s30, 0
      %p183 = por %p181, %p182
      %s185 = sadd.s32 %s184, 1
      %p188 = scmp.eq.s32.totalorder %s24, 1
      %p189 = scmp.ne.s32.totalorder %s184, %s186
      %p190 = scmp.eq.s32.totalorder %s24, 0
      %p191 = por %p189, %p190
      %p192 = scmp.ne.s32.totalorder %s184, %s186
      %p193 = scmp.eq.s32.totalorder %s29, 1
      %p194 = por %p192, %p193
      %p195 = scmp.ne.s32.totalorder %s186, %s187
      %p196 = scmp.eq.s32.totalorder %s29, 0
      %p197 = por %p195, %p196
      %p198 = scmp.ne.s32.totalorder %s186, %s187
      %p199 = scmp.eq.s32.totalorder %s30, 1
      %p200 = por %p198, %p199
      %p202 = scmp.ne.s32.totalorder %s187, %s201
      %p203 = scmp.eq.s32.totalorder %s30, 0
      %p204 = por %p202, %p203
      %s206 = sadd.s32 %s205, 1
      %p209 = scmp.eq.s32.totalorder %s24, 1
      %p210 = scmp.ne.s32.totalorder %s205, %s207
      %p211 = scmp.eq.s32.totalorder %s24, 0
      %p212 = por %p210, %p211
      %p213 = scmp.ne.s32.totalorder %s205, %s207
      %p214 = scmp.eq.s32.totalorder %s29, 1
      %p215 = por %p213, %p214
      %p216 = scmp.ne.s32.totalorder %s207, %s208
      %p217 = scmp.eq.s32.totalorder %s29, 0
      %p218 = por %p216, %p217
      %p219 = scmp.ne.s32.totalorder %s207, %s208
      %p220 = scmp.eq.s32.totalorder %s30, 1
      %p221 = por %p219, %p220
      %p223 = scmp.ne.s32.totalorder %s208, %s222
      %p224 = scmp.eq.s32.totalorder %s30, 0
      %p225 = por %p223, %p224
      %s227 = sadd.s32 %s226, 1
      %p230 = scmp.eq.s32.totalorder %s24, 1
      %p231 = scmp.ne.s32.totalorder %s226, %s228
      %p232 = scmp.eq.s32.totalorder %s24, 0
      %p233 = por %p231, %p232
      %p234 = scmp.ne.s32.totalorder %s226, %s228
      %p235 = scmp.eq.s32.totalorder %s29, 1
      %p236 = por %p234, %p235
      %p237 = scmp.ne.s32.totalorder %s228, %s229
      %p238 = scmp.eq.s32.totalorder %s29, 0
      %p239 = por %p237, %p238
      %p240 = scmp.ne.s32.totalorder %s228, %s229
      %p241 = scmp.eq.s32.totalorder %s30, 1
      %p242 = por %p240, %p241
      %p244 = scmp.ne.s32.totalorder %s229, %s243
      %p245 = scmp.eq.s32.totalorder %s30, 0
      %p246 = por %p244, %p245
      %s248 = sadd.s32 %s247, 1
      %p251 = scmp.eq.s32.totalorder %s24, 1
      %p252 = scmp.ne.s32.totalorder %s247, %s249
      %p253 = scmp.eq.s32.totalorder %s24, 0
      %p254 = por %p252, %p253
      %p255 = scmp.ne.s32.totalorder %s247, %s249
      %p256 = scmp.eq.s32.totalorder %s29, 1
      %p257 = por %p255, %p256
      %p258 = scmp.ne.s32.totalorder %s249, %s250
      %p259 = scmp.eq.s32.totalorder %s29, 0
      %p260 = por %p258, %p259
      %p261 = scmp.ne.s32.totalorder %s249, %s250
      %p262 = scmp.eq.s32.totalorder %s30, 1
      %p263 = por %p261, %p262
      %p265 = scmp.ne.s32.totalorder %s250, %s264
      %p266 = scmp.eq.s32.totalorder %s30, 0
      %p267 = por %p265, %p266
      %s269 = sadd.s32 %s268, 1
      %p272 = scmp.eq.s32.totalorder %s24, 1
      %p273 = scmp.ne.s32.totalorder %s268, %s270
      %p274 = scmp.eq.s32.totalorder %s24, 0
      %p275 = por %p273, %p274
      %p276 = scmp.ne.s32.totalorder %s268, %s270
      %p277 = scmp.eq.s32.totalorder %s29, 1
      %p278 = por %p276, %p277
      %p279 = scmp.ne.s32.totalorder %s270, %s271
      %p280 = scmp.eq.s32.totalorder %s29, 0
      %p281 = por %p279, %p280
      %p282 = scmp.ne.s32.totalorder %s270, %s271
      %p283 = scmp.eq.s32.totalorder %s30, 1
      %p284 = por %p282, %p283
      %p286 = scmp.ne.s32.totalorder %s271, %s285
      %p287 = scmp.eq.s32.totalorder %s30, 0
      %p288 = por %p286, %p287
      %s290 = sadd.s32 %s289, 1
      %p293 = scmp.eq.s32.totalorder %s24, 1
      %p294 = scmp.ne.s32.totalorder %s289, %s291
      %p295 = scmp.eq.s32.totalorder %s24, 0
      %p296 = por %p294, %p295
      %p297 = scmp.ne.s32.totalorder %s289, %s291
      %p298 = scmp.eq.s32.totalorder %s29, 1
      %p299 = por %p297, %p298
      %p300 = scmp.ne.s32.totalorder %s291, %s292
      %p301 = scmp.eq.s32.totalorder %s29, 0
      %p302 = por %p300, %p301
      %p303 = scmp.ne.s32.totalorder %s291, %s292
      %p304 = scmp.eq.s32.totalorder %s30, 1
      %p305 = por %p303, %p304
      %p307 = scmp.ne.s32.totalorder %s292, %s306
      %p308 = scmp.eq.s32.totalorder %s30, 0
      %p309 = por %p307, %p308
      %s311 = sadd.s32 %s310, 1
      %p314 = scmp.eq.s32.totalorder %s24, 1
      %p315 = scmp.ne.s32.totalorder %s310, %s312
      %p316 = scmp.eq.s32.totalorder %s24, 0
      %p317 = por %p315, %p316
      %p318 = scmp.ne.s32.totalorder %s310, %s312
      %p319 = scmp.eq.s32.totalorder %s29, 1
      %p320 = por %p318, %p319
      %p321 = scmp.ne.s32.totalorder %s312, %s313
      %p322 = scmp.eq.s32.totalorder %s29, 0
      %p323 = por %p321, %p322
      %p324 = scmp.ne.s32.totalorder %s312, %s313
      %p325 = scmp.eq.s32.totalorder %s30, 1
      %p326 = por %p324, %p325
      %p328 = scmp.ne.s32.totalorder %s313, %s327
      %p329 = scmp.eq.s32.totalorder %s30, 0
      %p330 = por %p328, %p329
      %s332 = sadd.s32 %s331, 1
      %p335 = scmp.eq.s32.totalorder %s24, 1
      %p336 = scmp.ne.s32.totalorder %s331, %s333
      %p337 = scmp.eq.s32.totalorder %s24, 0
      %p338 = por %p336, %p337
      %p339 = scmp.ne.s32.totalorder %s331, %s333
      %p340 = scmp.eq.s32.totalorder %s29, 1
      %p341 = por %p339, %p340
      %p342 = scmp.ne.s32.totalorder %s333, %s334
      %p343 = scmp.eq.s32.totalorder %s29, 0
      %p344 = por %p342, %p343
      %p345 = scmp.ne.s32.totalorder %s333, %s334
      %p346 = scmp.eq.s32.totalorder %s30, 1
      %p347 = por %p345, %p346
      %p349 = scmp.ne.s32.totalorder %s334, %s348
      %p350 = scmp.eq.s32.totalorder %s30, 0
      %p351 = por %p349, %p350
      %s353 = sadd.s32 %s352, 1
      %p356 = scmp.eq.s32.totalorder %s24, 1
      %p357 = scmp.ne.s32.totalorder %s352, %s354
      %p358 = scmp.eq.s32.totalorder %s24, 0
      %p359 = por %p357, %p358
      %p360 = scmp.ne.s32.totalorder %s352, %s354
      %p361 = scmp.eq.s32.totalorder %s29, 1
      %p362 = por %p360, %p361
      %p363 = scmp.ne.s32.totalorder %s354, %s355
      %p364 = scmp.eq.s32.totalorder %s29, 0
      %p365 = por %p363, %p364
      %p366 = scmp.ne.s32.totalorder %s354, %s355
      %p367 = scmp.eq.s32.totalorder %s30, 1
      %p368 = por %p366, %p367
      %p370 = scmp.ne.s32.totalorder %s355, %s369
      %p371 = scmp.eq.s32.totalorder %s30, 0
      %p372 = por %p370, %p371
      %s374 = sadd.s32 %s373, 1
      %p377 = scmp.eq.s32.totalorder %s24, 1
      %p378 = scmp.ne.s32.totalorder %s373, %s375
      %p379 = scmp.eq.s32.totalorder %s24, 0
      %p380 = por %p378, %p379
      %p381 = scmp.ne.s32.totalorder %s373, %s375
      %p382 = scmp.eq.s32.totalorder %s29, 1
      %p383 = por %p381, %p382
      %p384 = scmp.ne.s32.totalorder %s375, %s376
      %p385 = scmp.eq.s32.totalorder %s29, 0
      %p386 = por %p384, %p385
      %p387 = scmp.ne.s32.totalorder %s375, %s376
      %p388 = scmp.eq.s32.totalorder %s30, 1
      %p389 = por %p387, %p388
      %p391 = scmp.ne.s32.totalorder %s376, %s390
      %p392 = scmp.eq.s32.totalorder %s30, 0
      %p393 = por %p391, %p392
      %s394 = ssub.s32 %s24, %s31
      %p395 = scmp.eq.s32.totalorder %s394, 0
      %s397 = sadd.s32 %s396, 1
      %s398 = scalar_select %p395, %s396, %s397
      %p401 = pneg %p395
      %p402 = scmp.eq.s32.totalorder %s24, 1
      %p403 = por %p401, %p402
      %p404 = scmp.ne.s32.totalorder %s396, %s399
      %p405 = scmp.eq.s32.totalorder %s24, 0
      %p406 = por %p404, %p405
      %p407 = scmp.ne.s32.totalorder %s396, %s399
      %p408 = scmp.eq.s32.totalorder %s29, 1
      %p409 = por %p407, %p408
      %p410 = scmp.ne.s32.totalorder %s399, %s400
      %p411 = scmp.eq.s32.totalorder %s29, 0
      %p412 = por %p410, %p411
      %p413 = scmp.ne.s32.totalorder %s399, %s400
      %p414 = scmp.eq.s32.totalorder %s30, 1
      %p415 = por %p413, %p414
      %p417 = scmp.ne.s32.totalorder %s400, %s416
      %p418 = scmp.eq.s32.totalorder %s30, 0
      %p419 = por %p417, %p418
      %p420 = scmp.le.s32.totalorder 1, %s24
      %p421 = scmp.lt.s32.totalorder %s24, 3
      %p422 = pnand %p420, %p421
      %p423 = pneg %p422
      // Predicated region
      $region9: #{vit_forward.1} parent=5 // pred_check
        _
      $region10: #{vit_forward.1} parent=5 // pred_check_branch
        %425 = sbr.rel (%p422) target = $region12
      $region11: #{vit_forward.1} parent=5 // pred_region
        %s426 = ssub.s32 %s24, 1
        // Predicated region
        $region13: #{vit_forward.1} parent=11 // pred_check
          %p427 = pneg %p71
        $region14: #{vit_forward.1} parent=11 // pred_check_branch
          %429 = sbr.rel (%p427) target = $region16
        $region15: #{vit_forward.1} parent=11 // pred_region
          _
        $region16: #{vit_forward.1} parent=11 // pred_fallthru
          _
        // Predicated region
        $region17: #{vit_forward.1} parent=11 // pred_check
          %p430 = pneg %p92
        $region18: #{vit_forward.1} parent=11 // pred_check_branch
          %432 = sbr.rel (%p430) target = $region20
        $region19: #{vit_forward.1} parent=11 // pred_region
          _
        $region20: #{vit_forward.1} parent=11 // pred_fallthru
          _
        // Predicated region
        $region21: #{vit_forward.1} parent=11 // pred_check
          %p433 = pneg %p113
        $region22: #{vit_forward.1} parent=11 // pred_check_branch
          %435 = sbr.rel (%p433) target = $region24
        $region23: #{vit_forward.1} parent=11 // pred_region
          _
        $region24: #{vit_forward.1} parent=11 // pred_fallthru
          _
        // Predicated region
        $region25: #{vit_forward.1} parent=11 // pred_check
          %p436 = pneg %p134
        $region26: #{vit_forward.1} parent=11 // pred_check_branch
          %438 = sbr.rel (%p436) target = $region28
        $region27: #{vit_forward.1} parent=11 // pred_region
          _
        $region28: #{vit_forward.1} parent=11 // pred_fallthru
          _
        // Predicated region
        $region29: #{vit_forward.1} parent=11 // pred_check
          %p439 = pneg %p155
        $region30: #{vit_forward.1} parent=11 // pred_check_branch
          %441 = sbr.rel (%p439) target = $region32
        $region31: #{vit_forward.1} parent=11 // pred_region
          _
        $region32: #{vit_forward.1} parent=11 // pred_fallthru
          _
        // Predicated region
        $region33: #{vit_forward.1} parent=11 // pred_check
          %p442 = pneg %p176
        $region34: #{vit_forward.1} parent=11 // pred_check_branch
          %444 = sbr.rel (%p442) target = $region36
        $region35: #{vit_forward.1} parent=11 // pred_region
          _
        $region36: #{vit_forward.1} parent=11 // pred_fallthru
          _
        // Predicated region
        $region37: #{vit_forward.1} parent=11 // pred_check
          %p445 = pneg %p197
        $region38: #{vit_forward.1} parent=11 // pred_check_branch
          %447 = sbr.rel (%p445) target = $region40
        $region39: #{vit_forward.1} parent=11 // pred_region
          %449 = vsyncadd [#allocation3], 0
          %s450 = sshll.u32 %s7, 4
          %s451 = int_to_ptr.hbm [resolvable:$true] %s450
          %s452 = sshll.u32 [#allocation2], 4
          %s453 = int_to_ptr.vmem [resolvable:$true] %s452
          %458 = dma.hbm_to_vmem [thread:$0]  %s451, 2048, %s453, [#allocation3], 128, 128, 8
        $region40: #{vit_forward.1} parent=11 // pred_fallthru
          _
        // Predicated region
        $region41: #{vit_forward.1} parent=11 // pred_check
          %p459 = pneg %p218
        $region42: #{vit_forward.1} parent=11 // pred_check_branch
          %461 = sbr.rel (%p459) target = $region44
        $region43: #{vit_forward.1} parent=11 // pred_region
          _
        $region44: #{vit_forward.1} parent=11 // pred_fallthru
          _
        // Predicated region
        $region45: #{vit_forward.1} parent=11 // pred_check
          %p462 = pneg %p239
        $region46: #{vit_forward.1} parent=11 // pred_check_branch
          %464 = sbr.rel (%p462) target = $region48
        $region47: #{vit_forward.1} parent=11 // pred_region
          _
        $region48: #{vit_forward.1} parent=11 // pred_fallthru
          _
        // Predicated region
        $region49: #{vit_forward.1} parent=11 // pred_check
          %p465 = pneg %p260
        $region50: #{vit_forward.1} parent=11 // pred_check_branch
          %467 = sbr.rel (%p465) target = $region52
        $region51: #{vit_forward.1} parent=11 // pred_region
          _
        $region52: #{vit_forward.1} parent=11 // pred_fallthru
          _
        // Predicated region
        $region53: #{vit_forward.1} parent=11 // pred_check
          %p468 = pneg %p281
        $region54: #{vit_forward.1} parent=11 // pred_check_branch
          %470 = sbr.rel (%p468) target = $region56
        $region55: #{vit_forward.1} parent=11 // pred_region
          _
        $region56: #{vit_forward.1} parent=11 // pred_fallthru
          _
        // Predicated region
        $region57: #{vit_forward.1} parent=11 // pred_check
          %p471 = pneg %p302
        $region58: #{vit_forward.1} parent=11 // pred_check_branch
          %473 = sbr.rel (%p471) target = $region60
        $region59: #{vit_forward.1} parent=11 // pred_region
          _
        $region60: #{vit_forward.1} parent=11 // pred_fallthru
          _
        // Predicated region
        $region61: #{vit_forward.1} parent=11 // pred_check
          %p474 = pneg %p323
        $region62: #{vit_forward.1} parent=11 // pred_check_branch
          %476 = sbr.rel (%p474) target = $region64
        $region63: #{vit_forward.1} parent=11 // pred_region
          _
        $region64: #{vit_forward.1} parent=11 // pred_fallthru
          _
        // Predicated region
        $region65: #{vit_forward.1} parent=11 // pred_check
          %p477 = pneg %p344
        $region66: #{vit_forward.1} parent=11 // pred_check_branch
          %479 = sbr.rel (%p477) target = $region68
        $region67: #{vit_forward.1} parent=11 // pred_region
          _
        $region68: #{vit_forward.1} parent=11 // pred_fallthru
          _
        // Predicated region
        $region69: #{vit_forward.1} parent=11 // pred_check
          %p480 = pneg %p365
        $region70: #{vit_forward.1} parent=11 // pred_check_branch
          %482 = sbr.rel (%p480) target = $region72
        $region71: #{vit_forward.1} parent=11 // pred_region
          _
        $region72: #{vit_forward.1} parent=11 // pred_fallthru
          _
        // Predicated region
        $region73: #{vit_forward.1} parent=11 // pred_check
          %p483 = pneg %p386
        $region74: #{vit_forward.1} parent=11 // pred_check_branch
          %485 = sbr.rel (%p483) target = $region76
        $region75: #{vit_forward.1} parent=11 // pred_region
          _
        $region76: #{vit_forward.1} parent=11 // pred_fallthru
          _
      $region12: #{vit_forward.1} parent=5 // pred_fallthru
        _
      %p486 = scmp.lt.s32.totalorder %s24, 2
      // Predicated region
      $region77: #{vit_forward.1} parent=5 // pred_check
        %p487 = pneg %p486
      $region78: #{vit_forward.1} parent=5 // pred_check_branch
        %489 = sbr.rel (%p487) target = $region80
      $region79: #{vit_forward.1} parent=5 // pred_region
        // Predicated region
        $region81: #{vit_forward.1} parent=79 // pred_check
          %p490 = pneg %p44
        $region82: #{vit_forward.1} parent=79 // pred_check_branch
          %492 = sbr.rel (%p490) target = $region84
        $region83: #{vit_forward.1} parent=79 // pred_region
          %p493 = scmp.lt.s32.totalorder %s24, 1
          %s494 = scalar_select %p493, %s24, 1
          %s495 = smul.addr %s494, 6
          %s496 = smul.addr %s495, 8
          %s497 = scalar_lea.vmem %s0, %s496
        $region84: #{vit_forward.1} parent=79 // pred_fallthru
          _
      $region80: #{vit_forward.1} parent=5 // pred_fallthru
        _
      %p498 = scmp.le.s32.totalorder 1, %s24
      %p499 = scmp.lt.s32.totalorder %s24, 3
      %p500 = pnand %p498, %p499
      %p501 = pneg %p500
      // Predicated region
      $region85: #{vit_forward.1} parent=5 // pred_check
        _
      $region86: #{vit_forward.1} parent=5 // pred_check_branch
        %503 = sbr.rel (%p500) target = $region88
      $region87: #{vit_forward.1} parent=5 // pred_region
        %s504 = ssub.s32 %s24, 1
        // Predicated region
        $region89: #{vit_forward.1} parent=87 // pred_check
          %p505 = pneg %p197
        $region90: #{vit_forward.1} parent=87 // pred_check_branch
          %507 = sbr.rel (%p505) target = $region92
        $region91: #{vit_forward.1} parent=87 // pred_region
          %509 = dma.done [#allocation3], 2048
        $region92: #{vit_forward.1} parent=87 // pred_fallthru
          _
        %p510 = scmp.lt.s32.totalorder %s29, 1
        %s511 = scalar_select %p510, %s29, 1
        %s512 = smul.addr %s511, 6
        %s513 = smul.addr %s512, 8
        %s514 = scalar_lea.vmem %s0, %s513
        %p515 = pneg %p50
        %p516 = pneg %p47
        %p517 = pneg %p71
        %p518 = pneg %p68
        %p519 = pneg %p92
        %p520 = pneg %p89
        %p521 = pneg %p113
        %p522 = pneg %p110
        %p523 = pneg %p134
        %p524 = pneg %p131
        %p525 = pneg %p155
        %p526 = pneg %p152
        %p527 = pneg %p176
        %p528 = pneg %p173
        %p529 = pneg %p197
        %p530 = pneg %p194
        %p531 = pneg %p218
        %p532 = pneg %p215
        %p533 = pneg %p239
        %p534 = pneg %p236
        %p535 = pneg %p260
        %p536 = pneg %p257
        %p537 = pneg %p281
        %p538 = pneg %p278
        %p539 = pneg %p302
        %p540 = pneg %p299
        %p541 = pneg %p323
        %p542 = pneg %p320
        %p543 = pneg %p344
        %p544 = pneg %p341
        %p545 = pneg %p365
        %p546 = pneg %p362
        %p547 = pneg %p386
        %p548 = pneg %p383
        %p549 = pneg %p412
        %p550 = pneg %p409
        %p551 = scmp.lt.s32.totalorder %s29, 1
        %s552 = scalar_select %p551, %s29, 1
        %s553 = smul.addr %s552, 8
        %s554 = scalar_lea.vmem %s17, %s553
        %p555 = scmp.lt.s32.totalorder %s29, 1
        %s556 = scalar_select %p555, %s29, 1
        %s557 = smul.addr %s556, 6
        %s558 = smul.addr %s557, 8
        %s559 = scalar_lea.vmem %s0, %s558
        %p560 = scmp.lt.s32.totalorder %s29, 1
        %s561 = scalar_select %p560, %s29, 1
        %s562 = smul.addr %s561, 8
        %s563 = scalar_lea.vmem %s17, %s562
        %v564 = vld [vmem:[%s559] sm:$0xff]
        %v565 = vld [vmem:[%s559 + $0x8] sm:$0xff]
        %v566 = vld [vmem:[%s559 + $0x10] sm:$0xff]
        %v567 = vld [vmem:[%s559 + $0x18] sm:$0xff]
        %v568 = vld [vmem:[%s559 + $0x20] sm:$0xff]
        %v569 = vld [vmem:[%s559 + $0x28] sm:$0xff]
        %v570 = vld [vmem:[%s2] sm:$0xff]
        %v571 = vld [vmem:[%s2 + $0x8] sm:$0xff]
        %v572 = vld [vmem:[%s2 + $0x10] sm:$0xff]
        %v573 = vld [vmem:[%s2 + $0x18] sm:$0xff]
        %v574 = vld [vmem:[%s2 + $0x20] sm:$0xff]
        %v575 = vld [vmem:[%s2 + $0x28] sm:$0xff]
        %v576 = vld [vmem:[%s2 + $0x30] sm:$0xff]
        %v577 = vld [vmem:[%s2 + $0x38] sm:$0xff]
        %v578 = vld [vmem:[%s2 + $0x40] sm:$0xff]
        %v579 = vld [vmem:[%s2 + $0x48] sm:$0xff]
        %v580 = vld [vmem:[%s2 + $0x50] sm:$0xff]
        %v581 = vld [vmem:[%s2 + $0x58] sm:$0xff]
        %v582 = vld [vmem:[%s2 + $0x60] sm:$0xff]
        %v583 = vld [vmem:[%s2 + $0x68] sm:$0xff]
        %v584 = vld [vmem:[%s2 + $0x70] sm:$0xff]
        %v585 = vld [vmem:[%s2 + $0x78] sm:$0xff]
        %v586 = vld [vmem:[%s2 + $0x80] sm:$0xff]
        %v587 = vld [vmem:[%s2 + $0x88] sm:$0xff]
        %v588 = vld [vmem:[%s2 + $0x90] sm:$0xff]
        %v589 = vld [vmem:[%s2 + $0x98] sm:$0xff]
        %v590 = vld [vmem:[%s2 + $0xa0] sm:$0xff]
        %v591 = vld [vmem:[%s2 + $0xa8] sm:$0xff]
        %v592 = vld [vmem:[%s2 + $0xb0] sm:$0xff]
        %v593 = vld [vmem:[%s2 + $0xb8] sm:$0xff]
        %v594 = vld [vmem:[%s2 + $0xc0] sm:$0xff]
        %v595 = vld [vmem:[%s2 + $0xc8] sm:$0xff]
        %v596 = vld [vmem:[%s2 + $0xd0] sm:$0xff]
        %v597 = vld [vmem:[%s2 + $0xd8] sm:$0xff]
        %v598 = vld [vmem:[%s2 + $0xe0] sm:$0xff]
        %v599 = vld [vmem:[%s2 + $0xe8] sm:$0xff]
        %v600 = vld [vmem:[%s2 + $0xf0] sm:$0xff]
        %v601 = vld [vmem:[%s2 + $0xf8] sm:$0xff]
        %v602 = vld [vmem:[%s2 + $0x100] sm:$0xff]
        %v603 = vld [vmem:[%s2 + $0x108] sm:$0xff]
        %v604 = vld [vmem:[%s2 + $0x110] sm:$0xff]
        %v605 = vld [vmem:[%s2 + $0x118] sm:$0xff]
        %v606 = vld [vmem:[%s2 + $0x120] sm:$0xff]
        %v607 = vld [vmem:[%s2 + $0x128] sm:$0xff]
        %v608 = vld [vmem:[%s2 + $0x130] sm:$0xff]
        %v609 = vld [vmem:[%s2 + $0x138] sm:$0xff]
        %v610 = vld [vmem:[%s2 + $0x140] sm:$0xff]
        %v611 = vld [vmem:[%s2 + $0x148] sm:$0xff]
        %v612 = vld [vmem:[%s2 + $0x150] sm:$0xff]
        %v613 = vld [vmem:[%s2 + $0x158] sm:$0xff]
        %v614 = vld [vmem:[%s2 + $0x160] sm:$0xff]
        %v615 = vld [vmem:[%s2 + $0x168] sm:$0xff]
        %v616 = vld [vmem:[%s2 + $0x170] sm:$0xff]
        %v617 = vld [vmem:[%s2 + $0x178] sm:$0xff]
        %v618 = vld [vmem:[%s2 + $0x180] sm:$0xff]
        %v619 = vld [vmem:[%s2 + $0x188] sm:$0xff]
        %v620 = vld [vmem:[%s2 + $0x190] sm:$0xff]
        %v621 = vld [vmem:[%s2 + $0x198] sm:$0xff]
        %v622 = vld [vmem:[%s2 + $0x1a0] sm:$0xff]
        %v623 = vld [vmem:[%s2 + $0x1a8] sm:$0xff]
        %v624 = vld [vmem:[%s2 + $0x1b0] sm:$0xff]
        %v625 = vld [vmem:[%s2 + $0x1b8] sm:$0xff]
        %v626 = vld [vmem:[%s2 + $0x1c0] sm:$0xff]
        %v627 = vld [vmem:[%s2 + $0x1c8] sm:$0xff]
        %v628 = vld [vmem:[%s2 + $0x1d0] sm:$0xff]
        %v629 = vld [vmem:[%s2 + $0x1d8] sm:$0xff]
        %v630 = vld [vmem:[%s2 + $0x1e0] sm:$0xff]
        %v631 = vld [vmem:[%s2 + $0x1e8] sm:$0xff]
        %v632 = vld [vmem:[%s2 + $0x1f0] sm:$0xff]
        %v633 = vld [vmem:[%s2 + $0x1f8] sm:$0xff]
        %v634 = vld [vmem:[%s2 + $0x200] sm:$0xff]
        %v635 = vld [vmem:[%s2 + $0x208] sm:$0xff]
        %v636 = vld [vmem:[%s2 + $0x210] sm:$0xff]
        %v637 = vld [vmem:[%s2 + $0x218] sm:$0xff]
        %v638 = vld [vmem:[%s2 + $0x220] sm:$0xff]
        %v639 = vld [vmem:[%s2 + $0x228] sm:$0xff]
        %v640 = vld [vmem:[%s2 + $0x230] sm:$0xff]
        %v641 = vld [vmem:[%s2 + $0x238] sm:$0xff]
        %v642 = vld [vmem:[%s2 + $0x240] sm:$0xff]
        %v643 = vld [vmem:[%s2 + $0x248] sm:$0xff]
        %v644 = vld [vmem:[%s2 + $0x250] sm:$0xff]
        %v645 = vld [vmem:[%s2 + $0x258] sm:$0xff]
        %v646 = vld [vmem:[%s2 + $0x260] sm:$0xff]
        %v647 = vld [vmem:[%s2 + $0x268] sm:$0xff]
        %v648 = vld [vmem:[%s2 + $0x270] sm:$0xff]
        %v649 = vld [vmem:[%s2 + $0x278] sm:$0xff]
        %v650 = vld [vmem:[%s2 + $0x280] sm:$0xff]
        %v651 = vld [vmem:[%s2 + $0x288] sm:$0xff]
        %v652 = vld [vmem:[%s2 + $0x290] sm:$0xff]
        %v653 = vld [vmem:[%s2 + $0x298] sm:$0xff]
        %v654 = vld [vmem:[%s2 + $0x2a0] sm:$0xff]
        %v655 = vld [vmem:[%s2 + $0x2a8] sm:$0xff]
        %v656 = vld [vmem:[%s2 + $0x2b0] sm:$0xff]
        %v657 = vld [vmem:[%s2 + $0x2b8] sm:$0xff]
        %v658 = vld [vmem:[%s2 + $0x2c0] sm:$0xff]
        %v659 = vld [vmem:[%s2 + $0x2c8] sm:$0xff]
        %v660 = vld [vmem:[%s2 + $0x2d0] sm:$0xff]
        %v661 = vld [vmem:[%s2 + $0x2d8] sm:$0xff]
        %v662 = vld [vmem:[%s2 + $0x2e0] sm:$0xff]
        %v663 = vld [vmem:[%s2 + $0x2e8] sm:$0xff]
        %v664 = vld [vmem:[%s2 + $0x2f0] sm:$0xff]
        %v665 = vld [vmem:[%s2 + $0x2f8] sm:$0xff]
        %v666 = vld [vmem:[%s1] sm:$0xff]
        %667 = vmatpush.msra.mxu0 %v585
        %668 = vmatpush.msra.mxu0 %v584
        %669 = vmatpush.msra.mxu0 %v583
        %670 = vmatpush.msra.mxu0 %v582
        %671 = vmatpush.msra.mxu0 %v581
        %672 = vmatpush.msra.mxu0 %v580
        %673 = vmatpush.msra.mxu0 %v579
        %674 = vmatpush.msra.mxu0 %v578
        %675 = vmatpush.msra.mxu0 %v577
        %676 = vmatpush.msra.mxu0 %v576
        %677 = vmatpush.msra.mxu0 %v575
        %678 = vmatpush.msra.mxu0 %v574
        %679 = vmatpush.msra.mxu0 %v573
        %680 = vmatpush.msra.mxu0 %v572
        %681 = vmatpush.msra.mxu0 %v571
        %682 = vmatpush.msra.mxu0 %v570
        %683 = vmatmul.f32.gmra.mxu0 %v564
        %v684 = vpop.f32.mrf.mxu0
        %v685 = vadd.f32 %v666, %v684
        %686 = vdwg.mxu0
        %687 = vmatpush.msra.mxu0 %v601
        %688 = vmatpush.msra.mxu0 %v600
        %689 = vmatpush.msra.mxu0 %v599
        %690 = vmatpush.msra.mxu0 %v598
        %691 = vmatpush.msra.mxu0 %v597
        %692 = vmatpush.msra.mxu0 %v596
        %693 = vmatpush.msra.mxu0 %v595
        %694 = vmatpush.msra.mxu0 %v594
        %695 = vmatpush.msra.mxu0 %v593
        %696 = vmatpush.msra.mxu0 %v592
        %697 = vmatpush.msra.mxu0 %v591
        %698 = vmatpush.msra.mxu0 %v590
        %699 = vmatpush.msra.mxu0 %v589
        %700 = vmatpush.msra.mxu0 %v588
        %701 = vmatpush.msra.mxu0 %v587
        %702 = vmatpush.msra.mxu0 %v586
        %703 = vmatmul.f32.gmra.mxu0 %v565
        %v704 = vpop.f32.mrf.mxu0
        %v705 = vadd.f32 %v685, %v704
        %706 = vdwg.mxu0
        %707 = vmatpush.msra.mxu0 %v617
        %708 = vmatpush.msra.mxu0 %v616
        %709 = vmatpush.msra.mxu0 %v615
        %710 = vmatpush.msra.mxu0 %v614
        %711 = vmatpush.msra.mxu0 %v613
        %712 = vmatpush.msra.mxu0 %v612
        %713 = vmatpush.msra.mxu0 %v611
        %714 = vmatpush.msra.mxu0 %v610
        %715 = vmatpush.msra.mxu0 %v609
        %716 = vmatpush.msra.mxu0 %v608
        %717 = vmatpush.msra.mxu0 %v607
        %718 = vmatpush.msra.mxu0 %v606
        %719 = vmatpush.msra.mxu0 %v605
        %720 = vmatpush.msra.mxu0 %v604
        %721 = vmatpush.msra.mxu0 %v603
        %722 = vmatpush.msra.mxu0 %v602
        %723 = vmatmul.f32.gmra.mxu0 %v566
        %v724 = vpop.f32.mrf.mxu0
        %v725 = vadd.f32 %v705, %v724
        %726 = vdwg.mxu0
        %727 = vmatpush.msra.mxu0 %v633
        %728 = vmatpush.msra.mxu0 %v632
        %729 = vmatpush.msra.mxu0 %v631
        %730 = vmatpush.msra.mxu0 %v630
        %731 = vmatpush.msra.mxu0 %v629
        %732 = vmatpush.msra.mxu0 %v628
        %733 = vmatpush.msra.mxu0 %v627
        %734 = vmatpush.msra.mxu0 %v626
        %735 = vmatpush.msra.mxu0 %v625
        %736 = vmatpush.msra.mxu0 %v624
        %737 = vmatpush.msra.mxu0 %v623
        %738 = vmatpush.msra.mxu0 %v622
        %739 = vmatpush.msra.mxu0 %v621
        %740 = vmatpush.msra.mxu0 %v620
        %741 = vmatpush.msra.mxu0 %v619
        %742 = vmatpush.msra.mxu0 %v618
        %743 = vmatmul.f32.gmra.mxu0 %v567
        %v744 = vpop.f32.mrf.mxu0
        %v745 = vadd.f32 %v725, %v744
        %746 = vdwg.mxu0
        %747 = vmatpush.msra.mxu0 %v649
        %748 = vmatpush.msra.mxu0 %v648
        %749 = vmatpush.msra.mxu0 %v647
        %750 = vmatpush.msra.mxu0 %v646
        %751 = vmatpush.msra.mxu0 %v645
        %752 = vmatpush.msra.mxu0 %v644
        %753 = vmatpush.msra.mxu0 %v643
        %754 = vmatpush.msra.mxu0 %v642
        %755 = vmatpush.msra.mxu0 %v641
        %756 = vmatpush.msra.mxu0 %v640
        %757 = vmatpush.msra.mxu0 %v639
        %758 = vmatpush.msra.mxu0 %v638
        %759 = vmatpush.msra.mxu0 %v637
        %760 = vmatpush.msra.mxu0 %v636
        %761 = vmatpush.msra.mxu0 %v635
        %762 = vmatpush.msra.mxu0 %v634
        %763 = vmatmul.f32.gmra.mxu0 %v568
        %v764 = vpop.f32.mrf.mxu0
        %v765 = vadd.f32 %v745, %v764
        %766 = vdwg.mxu0
        %767 = vmatpush.msra.mxu0 %v665
        %768 = vmatpush.msra.mxu0 %v664
        %769 = vmatpush.msra.mxu0 %v663
        %770 = vmatpush.msra.mxu0 %v662
        %771 = vmatpush.msra.mxu0 %v661
        %772 = vmatpush.msra.mxu0 %v660
        %773 = vmatpush.msra.mxu0 %v659
        %774 = vmatpush.msra.mxu0 %v658
        %775 = vmatpush.msra.mxu0 %v657
        %776 = vmatpush.msra.mxu0 %v656
        %777 = vmatpush.msra.mxu0 %v655
        %778 = vmatpush.msra.mxu0 %v654
        %779 = vmatpush.msra.mxu0 %v653
        %780 = vmatpush.msra.mxu0 %v652
        %781 = vmatpush.msra.mxu0 %v651
        %782 = vmatpush.msra.mxu0 %v650
        %783 = vmatmul.f32.gmra.mxu0 %v569
        %v784 = vpop.f32.mrf.mxu0
        %v785 = vadd.f32 %v765, %v784
        %786 = vdwg.mxu0
        %v787 = vlaneseq
        %v788 = vand.u32 %v787, 127
        %vm789 = vcmp.lt.s32.totalorder %v788, 5
        %v790 = vsel %vm789, 0.0, -1e+30
        %v791 = vld [vmem:[%s3] sm:$0x1]
        %v792 = vld [vmem:[%s4] sm:$0x1]
        %vm793 = vcmask 523264
        %v794 = vsel %vm793, %v785, 0.0
        %795 = vadd.xlane.f32.xlu0 %v794
        %v796 = vpop.xlane.xlu0 %795
        %v797 = vrcp.pop 64.0
        %v798 = vmul.f32 64.0, %v797
        %v799 = vsub.f32 1.0, %v798
        %v800 = vmul.f32 %v797, %v799
        %v801 = vadd.f32 %v797, %v800
        %vm802 = vweird.f32 %v797
        %v803 = vsel %vm802, %v797, %v801
        %v804 = vmul.f32 %v796, %v803
        %v805 = vsub.f32 %v785, %v804
        %v806 = vmul.f32 %v805, %v805
        %v807 = vsel %vm793, %v806, 0.0
        %808 = vadd.xlane.f32.xlu0 %v807
        %v809 = vpop.xlane.xlu0 %808
        %v810 = vmul.f32 %v809, %v803
        %v811 = vadd.f32 %v810, 1e-06
        %v812 = vrsqrt.pop %v811
        %v813 = vmul.f32 %v812, %v811
        %v814 = vmul.f32 %v813, %v812
        %v815 = vmul.f32 0.5, %v814
        %v816 = vsub.f32 1.5, %v815
        %v817 = vmul.f32 %v812, %v816
        %vm818 = vweird.f32 %v811
        %vm819 = vweird.f32 %v812
        %vm820 = vmor %vm818, %vm819
        %v821 = vsel %vm820, %v812, %v817
        %v822 = vmul.f32 %v805, %v821
        %v824 = vperm.slane %v791, 0
        %v826 = vmul.f32 %v822, %v824
        %v828 = vperm.slane %v792, 0
        %v830 = vadd.f32 %v826, %v828
        %v831 = vld [vmem:[%s5] sm:$0xff]
        %v832 = vld [vmem:[%s5 + $0x8] sm:$0xff]
        %v833 = vld [vmem:[%s5 + $0x10] sm:$0xff]
        %v834 = vld [vmem:[%s5 + $0x18] sm:$0xff]
        %v835 = vld [vmem:[%s5 + $0x20] sm:$0xff]
        %v836 = vld [vmem:[%s5 + $0x28] sm:$0xff]
        %v837 = vld [vmem:[%s5 + $0x30] sm:$0xff]
        %v838 = vld [vmem:[%s5 + $0x38] sm:$0xff]
        %v839 = vld [vmem:[%s5 + $0x40] sm:$0xff]
        %v840 = vld [vmem:[%s5 + $0x48] sm:$0xff]
        %v841 = vld [vmem:[%s5 + $0x50] sm:$0xff]
        %v842 = vld [vmem:[%s5 + $0x58] sm:$0xff]
        %v843 = vld [vmem:[%s5 + $0x60] sm:$0xff]
        %v844 = vld [vmem:[%s5 + $0x68] sm:$0xff]
        %v845 = vld [vmem:[%s5 + $0x70] sm:$0xff]
        %v846 = vld [vmem:[%s5 + $0x78] sm:$0xff]
        %v847 = vld [vmem:[%s6] sm:$0x3]
        %v849 = vperm.slane %v847, 0
        %v850 = vperm.slane %v847, 1
        %v854 = vsel %vm793, %v830, 0
        %856 = vmatpush.msra.mxu0 0.0
        %857 = vmatpush.msra.mxu0 0.0
        %858 = vmatpush.msra.mxu0 0.0
        %859 = vmatpush.msra.mxu0 0.0
        %860 = vmatpush.msra.mxu0 0.0
        %861 = vmatpush.msra.mxu0 0.0
        %862 = vmatpush.msra.mxu0 0.0
        %863 = vmatpush.msra.mxu0 0.0
        %864 = vmatpush.msra.mxu0 %v845
        %865 = vmatpush.msra.mxu0 %v843
        %866 = vmatpush.msra.mxu0 %v841
        %867 = vmatpush.msra.mxu0 %v839
        %868 = vmatpush.msra.mxu0 %v837
        %869 = vmatpush.msra.mxu0 %v835
        %870 = vmatpush.msra.mxu0 %v833
        %871 = vmatpush.msra.mxu0 %v831
        %872 = vmatmul.f32.gmra.mxu0 %v854
        %v873 = vpop.f32.mrf.mxu0
        %v874 = vadd.f32 %v849, %v873
        %875 = vdwg.mxu0
        %876 = vmatpush.msra.mxu0 0.0
        %877 = vmatpush.msra.mxu0 0.0
        %878 = vmatpush.msra.mxu0 0.0
        %879 = vmatpush.msra.mxu0 0.0
        %880 = vmatpush.msra.mxu0 0.0
        %881 = vmatpush.msra.mxu0 0.0
        %882 = vmatpush.msra.mxu0 0.0
        %883 = vmatpush.msra.mxu0 0.0
        %884 = vmatpush.msra.mxu0 %v846
        %885 = vmatpush.msra.mxu0 %v844
        %886 = vmatpush.msra.mxu0 %v842
        %887 = vmatpush.msra.mxu0 %v840
        %888 = vmatpush.msra.mxu0 %v838
        %889 = vmatpush.msra.mxu0 %v836
        %890 = vmatpush.msra.mxu0 %v834
        %891 = vmatpush.msra.mxu0 %v832
        %892 = vmatmul.f32.gmra.mxu0 %v854
        %v893 = vpop.f32.mrf.mxu0
        %v894 = vadd.f32 %v850, %v893
        %895 = vdwg.mxu0
        %v896 = vld [vmem:[#allocation2] sm:$0xff]
        %v897 = vld [vmem:[#allocation2 + $0x8] sm:$0xff]
        %v898 = vld [vmem:[#allocation2 + $0x10] sm:$0xff]
        %v899 = vld [vmem:[#allocation2 + $0x18] sm:$0xff]
        %v900 = vld [vmem:[#allocation2 + $0x20] sm:$0xff]
        %v901 = vld [vmem:[#allocation2 + $0x28] sm:$0xff]
        %v902 = vld [vmem:[#allocation2 + $0x30] sm:$0xff]
        %v903 = vld [vmem:[#allocation2 + $0x38] sm:$0xff]
        %v904 = vmul.f32 %v874, 0.25
        %906 = vrot.lane.b32.xlu0 %v874, 64
        %v907 = vpop.permute.xlu0 %906
        %vm908 = vcmask 130048
        %v910 = vsel %vm908, %v904, 0
        %v912 = vsel %vm908, %v907, 0
        %914 = vmatpush.xpose.msra.mxu0 0.0
        %915 = vmatpush.xpose.msra.mxu0 0.0
        %916 = vmatpush.xpose.msra.mxu0 0.0
        %917 = vmatpush.xpose.msra.mxu0 0.0
        %918 = vmatpush.xpose.msra.mxu0 0.0
        %919 = vmatpush.xpose.msra.mxu0 0.0
        %920 = vmatpush.xpose.msra.mxu0 0.0
        %921 = vmatpush.xpose.msra.mxu0 0.0
        %922 = vmatpush.xpose.msra.mxu0 0.0
        %923 = vmatpush.xpose.msra.mxu0 0.0
        %924 = vmatpush.xpose.msra.mxu0 0.0
        %925 = vmatpush.xpose.msra.mxu0 0.0
        %926 = vmatpush.xpose.msra.mxu0 0.0
        %927 = vmatpush.xpose.msra.mxu0 0.0
        %928 = vmatpush.xpose.msra.mxu0 0.0
        %929 = vmatpush.xpose.msra.mxu0 %v912
        %930 = vmatmul.f32.gmra.mxu0 %v910
        %v931 = vpop.f32.mrf.mxu0
        %v932 = vadd.f32 %v790, %v931
        %933 = vdwg.mxu0
        %vm934 = vcmask 64512
        %v935 = vsel %vm934, %v932, -inf
        %936 = vmax.xlane.f32.xlu0 %v935
        %v937 = vpop.xlane.xlu0 %936
        %v938 = vsub.f32 %v932, %v937
        %v939 = vmul.f32 %v938, 1.442695
        %v940 = vpow.pop %v939
        %v941 = vsel %vm934, %v940, 0.0
        %942 = vadd.xlane.f32.xlu0 %v941
        %v943 = vpop.xlane.xlu0 %942
        %v944 = vrcp.pop %v943
        %v945 = vmul.f32 %v940, %v944
        %v947 = vsel %vm934, %v945, 0
        %949 = vmatpush.msra.mxu0 0.0
        %950 = vmatpush.msra.mxu0 0.0
        %951 = vmatpush.msra.mxu0 0.0
        %952 = vmatpush.msra.mxu0 0.0
        %953 = vmatpush.msra.mxu0 0.0
        %954 = vmatpush.msra.mxu0 0.0
        %955 = vmatpush.msra.mxu0 0.0
        %956 = vmatpush.msra.mxu0 0.0
        %957 = vmatpush.msra.mxu0 0.0
        %958 = vmatpush.msra.mxu0 0.0
        %959 = vmatpush.msra.mxu0 0.0
        %960 = vmatpush.msra.mxu0 0.0
        %961 = vmatpush.msra.mxu0 0.0
        %962 = vmatpush.msra.mxu0 0.0
        %963 = vmatpush.msra.mxu0 0.0
        %964 = vmatpush.msra.mxu0 %v894
        %965 = vmatmul.f32.gmra.mxu0 %v947
        %v966 = vpop.f32.mrf.mxu0
        %v967 = vadd.f32 0.0, %v966
        %968 = vdwg.mxu0
        %969 = vrot.lane.b32.xlu0 %v904, 112
        %v970 = vpop.permute.xlu0 %969
        %971 = vrot.lane.b32.xlu0 %v874, 48
        %v972 = vpop.permute.xlu0 %971
        %v973 = vsel %vm908, %v970, 0
        %v975 = vsel %vm908, %v972, 0
        %977 = vmatpush.xpose.msra.mxu0 0.0
        %978 = vmatpush.xpose.msra.mxu0 0.0
        %979 = vmatpush.xpose.msra.mxu0 0.0
        %980 = vmatpush.xpose.msra.mxu0 0.0
        %981 = vmatpush.xpose.msra.mxu0 0.0
        %982 = vmatpush.xpose.msra.mxu0 0.0
        %983 = vmatpush.xpose.msra.mxu0 0.0
        %984 = vmatpush.xpose.msra.mxu0 0.0
        %985 = vmatpush.xpose.msra.mxu0 0.0
        %986 = vmatpush.xpose.msra.mxu0 0.0
        %987 = vmatpush.xpose.msra.mxu0 0.0
        %988 = vmatpush.xpose.msra.mxu0 0.0
        %989 = vmatpush.xpose.msra.mxu0 0.0
        %990 = vmatpush.xpose.msra.mxu0 0.0
        %991 = vmatpush.xpose.msra.mxu0 0.0
        %992 = vmatpush.xpose.msra.mxu0 %v975
        %993 = vmatmul.f32.gmra.mxu0 %v973
        %v994 = vpop.f32.mrf.mxu0
        %v995 = vadd.f32 %v790, %v994
        %996 = vdwg.mxu0
        %v997 = vsel %vm934, %v995, -inf
        %998 = vmax.xlane.f32.xlu0 %v997
        %v999 = vpop.xlane.xlu0 %998
        %v1000 = vsub.f32 %v995, %v999
        %v1001 = vmul.f32 %v1000, 1.442695
        %v1002 = vpow.pop %v1001
        %v1003 = vsel %vm934, %v1002, 0.0
        %1004 = vadd.xlane.f32.xlu0 %v1003
        %v1005 = vpop.xlane.xlu0 %1004
        %v1006 = vrcp.pop %v1005
        %v1007 = vmul.f32 %v1002, %v1006
        %1009 = vrot.lane.b32.xlu0 %v894, 112
        %v1010 = vpop.permute.xlu0 %1009
        %v1013 = vsel %vm934, %v1007, 0
        %1015 = vmatpush.msra.mxu0 0.0
        %1016 = vmatpush.msra.mxu0 0.0
        %1017 = vmatpush.msra.mxu0 0.0
        %1018 = vmatpush.msra.mxu0 0.0
        %1019 = vmatpush.msra.mxu0 0.0
        %1020 = vmatpush.msra.mxu0 0.0
        %1021 = vmatpush.msra.mxu0 0.0
        %1022 = vmatpush.msra.mxu0 0.0
        %1023 = vmatpush.msra.mxu0 0.0
        %1024 = vmatpush.msra.mxu0 0.0
        %1025 = vmatpush.msra.mxu0 0.0
        %1026 = vmatpush.msra.mxu0 0.0
        %1027 = vmatpush.msra.mxu0 0.0
        %1028 = vmatpush.msra.mxu0 0.0
        %1029 = vmatpush.msra.mxu0 0.0
        %1030 = vmatpush.msra.mxu0 %v1010
        %1031 = vmatmul.f32.gmra.mxu0 %v1013
        %v1032 = vpop.f32.mrf.mxu0
        %v1033 = vadd.f32 0.0, %v1032
        %1034 = vdwg.mxu0
        %v1036 = vsel %vm908, %v1033, 0
        %1038 = vmatpush.msra.mxu0 0.0
        %1039 = vmatpush.msra.mxu0 0.0
        %1040 = vmatpush.msra.mxu0 0.0
        %1041 = vmatpush.msra.mxu0 0.0
        %1042 = vmatpush.msra.mxu0 0.0
        %1043 = vmatpush.msra.mxu0 0.0
        %1044 = vmatpush.msra.mxu0 0.0
        %1045 = vmatpush.msra.mxu0 0.0
        %1046 = vmatpush.msra.mxu0 0.0
        %1047 = vmatpush.msra.mxu0 0.0
        %1048 = vmatpush.msra.mxu0 0.0
        %1049 = vmatpush.msra.mxu0 0.0
        %1050 = vmatpush.msra.mxu0 0.0
        %1051 = vmatpush.msra.mxu0 0.0
        %1052 = vmatpush.msra.mxu0 %v899
        %1053 = vmatpush.msra.mxu0 %v898
        %1054 = vmatmul.f32.gmra.mxu0 %v1036
        %v1055 = vpop.f32.mrf.mxu0
        %v1056 = vadd.f32 0.0, %v1055
        %1057 = vdwg.mxu0
        %v1059 = vsel %vm908, %v967, 0
        %1061 = vmatpush.msra.mxu0 0.0
        %1062 = vmatpush.msra.mxu0 0.0
        %1063 = vmatpush.msra.mxu0 0.0
        %1064 = vmatpush.msra.mxu0 0.0
        %1065 = vmatpush.msra.mxu0 0.0
        %1066 = vmatpush.msra.mxu0 0.0
        %1067 = vmatpush.msra.mxu0 0.0
        %1068 = vmatpush.msra.mxu0 0.0
        %1069 = vmatpush.msra.mxu0 0.0
        %1070 = vmatpush.msra.mxu0 0.0
        %1071 = vmatpush.msra.mxu0 0.0
        %1072 = vmatpush.msra.mxu0 0.0
        %1073 = vmatpush.msra.mxu0 0.0
        %1074 = vmatpush.msra.mxu0 0.0
        %1075 = vmatpush.msra.mxu0 %v897
        %1076 = vmatpush.msra.mxu0 %v896
        %1077 = vmatmul.f32.gmra.mxu0 %v1059
        %v1078 = vpop.f32.mrf.mxu0
        %v1079 = vadd.f32 %v1056, %v1078
        %1080 = vdwg.mxu0
        %1081 = vrot.lane.b32.xlu0 %v904, 96
        %v1082 = vpop.permute.xlu0 %1081
        %1083 = vrot.lane.b32.xlu0 %v874, 32
        %v1084 = vpop.permute.xlu0 %1083
        %v1085 = vsel %vm908, %v1082, 0
        %v1087 = vsel %vm908, %v1084, 0
        %1089 = vmatpush.xpose.msra.mxu0 0.0
        %1090 = vmatpush.xpose.msra.mxu0 0.0
        %1091 = vmatpush.xpose.msra.mxu0 0.0
        %1092 = vmatpush.xpose.msra.mxu0 0.0
        %1093 = vmatpush.xpose.msra.mxu0 0.0
        %1094 = vmatpush.xpose.msra.mxu0 0.0
        %1095 = vmatpush.xpose.msra.mxu0 0.0
        %1096 = vmatpush.xpose.msra.mxu0 0.0
        %1097 = vmatpush.xpose.msra.mxu0 0.0
        %1098 = vmatpush.xpose.msra.mxu0 0.0
        %1099 = vmatpush.xpose.msra.mxu0 0.0
        %1100 = vmatpush.xpose.msra.mxu0 0.0
        %1101 = vmatpush.xpose.msra.mxu0 0.0
        %1102 = vmatpush.xpose.msra.mxu0 0.0
        %1103 = vmatpush.xpose.msra.mxu0 0.0
        %1104 = vmatpush.xpose.msra.mxu0 %v1087
        %1105 = vmatmul.f32.gmra.mxu0 %v1085
        %v1106 = vpop.f32.mrf.mxu0
        %v1107 = vadd.f32 %v790, %v1106
        %1108 = vdwg.mxu0
        %v1109 = vsel %vm934, %v1107, -inf
        %1110 = vmax.xlane.f32.xlu0 %v1109
        %v1111 = vpop.xlane.xlu0 %1110
        %v1112 = vsub.f32 %v1107, %v1111
        %v1113 = vmul.f32 %v1112, 1.442695
        %v1114 = vpow.pop %v1113
        %v1115 = vsel %vm934, %v1114, 0.0
        %1116 = vadd.xlane.f32.xlu0 %v1115
        %v1117 = vpop.xlane.xlu0 %1116
        %v1118 = vrcp.pop %v1117
        %v1119 = vmul.f32 %v1114, %v1118
        %1120 = vrot.lane.b32.xlu0 %v894, 96
        %v1121 = vpop.permute.xlu0 %1120
        %v1124 = vsel %vm934, %v1119, 0
        %1126 = vmatpush.msra.mxu0 0.0
        %1127 = vmatpush.msra.mxu0 0.0
        %1128 = vmatpush.msra.mxu0 0.0
        %1129 = vmatpush.msra.mxu0 0.0
        %1130 = vmatpush.msra.mxu0 0.0
        %1131 = vmatpush.msra.mxu0 0.0
        %1132 = vmatpush.msra.mxu0 0.0
        %1133 = vmatpush.msra.mxu0 0.0
        %1134 = vmatpush.msra.mxu0 0.0
        %1135 = vmatpush.msra.mxu0 0.0
        %1136 = vmatpush.msra.mxu0 0.0
        %1137 = vmatpush.msra.mxu0 0.0
        %1138 = vmatpush.msra.mxu0 0.0
        %1139 = vmatpush.msra.mxu0 0.0
        %1140 = vmatpush.msra.mxu0 0.0
        %1141 = vmatpush.msra.mxu0 %v1121
        %1142 = vmatmul.f32.gmra.mxu0 %v1124
        %v1143 = vpop.f32.mrf.mxu0
        %v1144 = vadd.f32 0.0, %v1143
        %1145 = vdwg.mxu0
        %v1147 = vsel %vm908, %v1144, 0
        %1149 = vmatpush.msra.mxu0 0.0
        %1150 = vmatpush.msra.mxu0 0.0
        %1151 = vmatpush.msra.mxu0 0.0
        %1152 = vmatpush.msra.mxu0 0.0
        %1153 = vmatpush.msra.mxu0 0.0
        %1154 = vmatpush.msra.mxu0 0.0
        %1155 = vmatpush.msra.mxu0 0.0
        %1156 = vmatpush.msra.mxu0 0.0
        %1157 = vmatpush.msra.mxu0 0.0
        %1158 = vmatpush.msra.mxu0 0.0
        %1159 = vmatpush.msra.mxu0 0.0
        %1160 = vmatpush.msra.mxu0 0.0
        %1161 = vmatpush.msra.mxu0 0.0
        %1162 = vmatpush.msra.mxu0 0.0
        %1163 = vmatpush.msra.mxu0 %v901
        %1164 = vmatpush.msra.mxu0 %v900
        %1165 = vmatmul.f32.gmra.mxu0 %v1147
        %v1166 = vpop.f32.mrf.mxu0
        %v1167 = vadd.f32 0.0, %v1166
        %1168 = vdwg.mxu0
        %v1169 = vadd.f32 %v1079, %v1167
        %1170 = vrot.lane.b32.xlu0 %v904, 80
        %v1171 = vpop.permute.xlu0 %1170
        %1172 = vrot.lane.b32.xlu0 %v874, 16
        %v1173 = vpop.permute.xlu0 %1172
        %v1174 = vsel %vm908, %v1171, 0
        %v1176 = vsel %vm908, %v1173, 0
        %1178 = vmatpush.xpose.msra.mxu0 0.0
        %1179 = vmatpush.xpose.msra.mxu0 0.0
        %1180 = vmatpush.xpose.msra.mxu0 0.0
        %1181 = vmatpush.xpose.msra.mxu0 0.0
        %1182 = vmatpush.xpose.msra.mxu0 0.0
        %1183 = vmatpush.xpose.msra.mxu0 0.0
        %1184 = vmatpush.xpose.msra.mxu0 0.0
        %1185 = vmatpush.xpose.msra.mxu0 0.0
        %1186 = vmatpush.xpose.msra.mxu0 0.0
        %1187 = vmatpush.xpose.msra.mxu0 0.0
        %1188 = vmatpush.xpose.msra.mxu0 0.0
        %1189 = vmatpush.xpose.msra.mxu0 0.0
        %1190 = vmatpush.xpose.msra.mxu0 0.0
        %1191 = vmatpush.xpose.msra.mxu0 0.0
        %1192 = vmatpush.xpose.msra.mxu0 0.0
        %1193 = vmatpush.xpose.msra.mxu0 %v1176
        %1194 = vmatmul.f32.gmra.mxu0 %v1174
        %v1195 = vpop.f32.mrf.mxu0
        %v1196 = vadd.f32 %v790, %v1195
        %1197 = vdwg.mxu0
        %v1198 = vsel %vm934, %v1196, -inf
        %1199 = vmax.xlane.f32.xlu0 %v1198
        %v1200 = vpop.xlane.xlu0 %1199
        %v1201 = vsub.f32 %v1196, %v1200
        %v1202 = vmul.f32 %v1201, 1.442695
        %v1203 = vpow.pop %v1202
        %v1204 = vsel %vm934, %v1203, 0.0
        %1205 = vadd.xlane.f32.xlu0 %v1204
        %v1206 = vpop.xlane.xlu0 %1205
        %v1207 = vrcp.pop %v1206
        %v1208 = vmul.f32 %v1203, %v1207
        %1209 = vrot.lane.b32.xlu0 %v894, 80
        %v1210 = vpop.permute.xlu0 %1209
        %v1213 = vsel %vm934, %v1208, 0
        %1215 = vmatpush.msra.mxu0 0.0
        %1216 = vmatpush.msra.mxu0 0.0
        %1217 = vmatpush.msra.mxu0 0.0
        %1218 = vmatpush.msra.mxu0 0.0
        %1219 = vmatpush.msra.mxu0 0.0
        %1220 = vmatpush.msra.mxu0 0.0
        %1221 = vmatpush.msra.mxu0 0.0
        %1222 = vmatpush.msra.mxu0 0.0
        %1223 = vmatpush.msra.mxu0 0.0
        %1224 = vmatpush.msra.mxu0 0.0
        %1225 = vmatpush.msra.mxu0 0.0
        %1226 = vmatpush.msra.mxu0 0.0
        %1227 = vmatpush.msra.mxu0 0.0
        %1228 = vmatpush.msra.mxu0 0.0
        %1229 = vmatpush.msra.mxu0 0.0
        %1230 = vmatpush.msra.mxu0 %v1210
        %1231 = vmatmul.f32.gmra.mxu0 %v1213
        %v1232 = vpop.f32.mrf.mxu0
        %v1233 = vadd.f32 0.0, %v1232
        %1234 = vdwg.mxu0
        %v1236 = vsel %vm908, %v1233, 0
        %1238 = vmatpush.msra.mxu0 0.0
        %1239 = vmatpush.msra.mxu0 0.0
        %1240 = vmatpush.msra.mxu0 0.0
        %1241 = vmatpush.msra.mxu0 0.0
        %1242 = vmatpush.msra.mxu0 0.0
        %1243 = vmatpush.msra.mxu0 0.0
        %1244 = vmatpush.msra.mxu0 0.0
        %1245 = vmatpush.msra.mxu0 0.0
        %1246 = vmatpush.msra.mxu0 0.0
        %1247 = vmatpush.msra.mxu0 0.0
        %1248 = vmatpush.msra.mxu0 0.0
        %1249 = vmatpush.msra.mxu0 0.0
        %1250 = vmatpush.msra.mxu0 0.0
        %1251 = vmatpush.msra.mxu0 0.0
        %1252 = vmatpush.msra.mxu0 %v903
        %1253 = vmatpush.msra.mxu0 %v902
        %1254 = vmatmul.f32.gmra.mxu0 %v1236
        %v1255 = vpop.f32.mrf.mxu0
        %v1256 = vadd.f32 0.0, %v1255
        %1257 = vdwg.mxu0
        %v1258 = vadd.f32 %v1169, %v1256
        %v1259 = vadd.f32 %v785, %v1258
        %v1260 = vld [vmem:[%s8] sm:$0x1]
        %v1262 = vperm.slane %v1260, 0
        %v1264 = vadd.f32 %v1259, %v1262
        %v1265 = vld [vmem:[%s9] sm:$0x1]
        %v1266 = vld [vmem:[%s10] sm:$0x1]
        %v1267 = vsel %vm793, %v1264, 0.0
        %1268 = vadd.xlane.f32.xlu0 %v1267
        %v1269 = vpop.xlane.xlu0 %1268
        %v1270 = vmul.f32 %v1269, %v803
        %v1271 = vsub.f32 %v1264, %v1270
        %v1272 = vmul.f32 %v1271, %v1271
        %v1273 = vsel %vm793, %v1272, 0.0
        %1274 = vadd.xlane.f32.xlu0 %v1273
        %v1275 = vpop.xlane.xlu0 %1274
        %v1276 = vmul.f32 %v1275, %v803
        %v1277 = vadd.f32 %v1276, 1e-06
        %v1278 = vrsqrt.pop %v1277
        %v1279 = vmul.f32 %v1278, %v1277
        %v1280 = vmul.f32 %v1279, %v1278
        %v1281 = vmul.f32 0.5, %v1280
        %v1282 = vsub.f32 1.5, %v1281
        %v1283 = vmul.f32 %v1278, %v1282
        %vm1284 = vweird.f32 %v1277
        %vm1285 = vweird.f32 %v1278
        %vm1286 = vmor %vm1284, %vm1285
        %v1287 = vsel %vm1286, %v1278, %v1283
        %v1288 = vmul.f32 %v1271, %v1287
        %v1290 = vperm.slane %v1265, 0
        %v1292 = vmul.f32 %v1288, %v1290
        %v1294 = vperm.slane %v1266, 0
        %v1296 = vadd.f32 %v1292, %v1294
        %v1297 = vld [vmem:[%s11] sm:$0xff]
        %v1298 = vld [vmem:[%s11 + $0x8] sm:$0xff]
        %v1299 = vld [vmem:[%s11 + $0x10] sm:$0xff]
        %v1300 = vld [vmem:[%s11 + $0x18] sm:$0xff]
        %v1301 = vld [vmem:[%s11 + $0x20] sm:$0xff]
        %v1302 = vld [vmem:[%s11 + $0x28] sm:$0xff]
        %v1303 = vld [vmem:[%s11 + $0x30] sm:$0xff]
        %v1304 = vld [vmem:[%s11 + $0x38] sm:$0xff]
        %v1305 = vld [vmem:[%s11 + $0x40] sm:$0xff]
        %v1306 = vld [vmem:[%s11 + $0x48] sm:$0xff]
        %v1307 = vld [vmem:[%s11 + $0x50] sm:$0xff]
        %v1308 = vld [vmem:[%s11 + $0x58] sm:$0xff]
        %v1309 = vld [vmem:[%s11 + $0x60] sm:$0xff]
        %v1310 = vld [vmem:[%s11 + $0x68] sm:$0xff]
        %v1311 = vld [vmem:[%s11 + $0x70] sm:$0xff]
        %v1312 = vld [vmem:[%s11 + $0x78] sm:$0xff]
        %v1313 = vld [vmem:[%s12] sm:$0x3]
        %v1315 = vperm.slane %v1313, 0
        %v1316 = vperm.slane %v1313, 1
        %v1320 = vsel %vm793, %v1296, 0
        %1322 = vmatpush.msra.mxu0 0.0
        %1323 = vmatpush.msra.mxu0 0.0
        %1324 = vmatpush.msra.mxu0 0.0
        %1325 = vmatpush.msra.mxu0 0.0
        %1326 = vmatpush.msra.mxu0 0.0
        %1327 = vmatpush.msra.mxu0 0.0
        %1328 = vmatpush.msra.mxu0 0.0
        %1329 = vmatpush.msra.mxu0 0.0
        %1330 = vmatpush.msra.mxu0 %v1311
        %1331 = vmatpush.msra.mxu0 %v1309
        %1332 = vmatpush.msra.mxu0 %v1307
        %1333 = vmatpush.msra.mxu0 %v1305
        %1334 = vmatpush.msra.mxu0 %v1303
        %1335 = vmatpush.msra.mxu0 %v1301
        %1336 = vmatpush.msra.mxu0 %v1299
        %1337 = vmatpush.msra.mxu0 %v1297
        %1338 = vmatmul.f32.gmra.mxu0 %v1320
        %v1339 = vpop.f32.mrf.mxu0
        %v1340 = vadd.f32 %v1315, %v1339
        %1341 = vdwg.mxu0
        %1342 = vmatpush.msra.mxu0 0.0
        %1343 = vmatpush.msra.mxu0 0.0
        %1344 = vmatpush.msra.mxu0 0.0
        %1345 = vmatpush.msra.mxu0 0.0
        %1346 = vmatpush.msra.mxu0 0.0
        %1347 = vmatpush.msra.mxu0 0.0
        %1348 = vmatpush.msra.mxu0 0.0
        %1349 = vmatpush.msra.mxu0 0.0
        %1350 = vmatpush.msra.mxu0 %v1312
        %1351 = vmatpush.msra.mxu0 %v1310
        %1352 = vmatpush.msra.mxu0 %v1308
        %1353 = vmatpush.msra.mxu0 %v1306
        %1354 = vmatpush.msra.mxu0 %v1304
        %1355 = vmatpush.msra.mxu0 %v1302
        %1356 = vmatpush.msra.mxu0 %v1300
        %1357 = vmatpush.msra.mxu0 %v1298
        %1358 = vmatmul.f32.gmra.mxu0 %v1320
        %v1359 = vpop.f32.mrf.mxu0
        %v1360 = vadd.f32 %v1316, %v1359
        %1361 = vdwg.mxu0
        %v1362 = vmul.f32 %v1340, %v1340
        %v1363 = vmul.f32 %v1360, %v1360
        %v1364 = vmul.f32 %v1340, %v1362
        %v1365 = vmul.f32 %v1360, %v1363
        %v1366 = vmul.f32 %v1364, 0.044715
        %v1367 = vmul.f32 %v1365, 0.044715
        %v1368 = vadd.f32 %v1340, %v1366
        %v1369 = vadd.f32 %v1360, %v1367
        %v1370 = vmul.f32 %v1368, 0.7978846
        %v1371 = vmul.f32 %v1369, 0.7978846
        %v1372 = vtanh.pop %v1370
        %v1373 = vtanh.pop %v1371
        %v1374 = vadd.f32 %v1372, 1.0
        %v1375 = vadd.f32 %v1373, 1.0
        %v1376 = vmul.f32 %v1374, 0.5
        %v1377 = vmul.f32 %v1375, 0.5
        %v1378 = vmul.f32 %v1340, %v1376
        %v1379 = vmul.f32 %v1360, %v1377
        %v1380 = vld [vmem:[%s13] sm:$0xff]
        %v1381 = vld [vmem:[%s13 + $0x8] sm:$0xff]
        %v1382 = vld [vmem:[%s13 + $0x10] sm:$0xff]
        %v1383 = vld [vmem:[%s13 + $0x18] sm:$0xff]
        %v1384 = vld [vmem:[%s13 + $0x20] sm:$0xff]
        %v1385 = vld [vmem:[%s13 + $0x28] sm:$0xff]
        %v1386 = vld [vmem:[%s13 + $0x30] sm:$0xff]
        %v1387 = vld [vmem:[%s13 + $0x38] sm:$0xff]
        %v1388 = vld [vmem:[%s13 + $0x40] sm:$0xff]
        %v1389 = vld [vmem:[%s13 + $0x48] sm:$0xff]
        %v1390 = vld [vmem:[%s13 + $0x50] sm:$0xff]
        %v1391 = vld [vmem:[%s13 + $0x58] sm:$0xff]
        %v1392 = vld [vmem:[%s13 + $0x60] sm:$0xff]
        %v1393 = vld [vmem:[%s13 + $0x68] sm:$0xff]
        %v1394 = vld [vmem:[%s13 + $0x70] sm:$0xff]
        %v1395 = vld [vmem:[%s13 + $0x78] sm:$0xff]
        %v1396 = vld [vmem:[%s13 + $0x80] sm:$0xff]
        %v1397 = vld [vmem:[%s13 + $0x88] sm:$0xff]
        %v1398 = vld [vmem:[%s13 + $0x90] sm:$0xff]
        %v1399 = vld [vmem:[%s13 + $0x98] sm:$0xff]
        %v1400 = vld [vmem:[%s13 + $0xa0] sm:$0xff]
        %v1401 = vld [vmem:[%s13 + $0xa8] sm:$0xff]
        %v1402 = vld [vmem:[%s13 + $0xb0] sm:$0xff]
        %v1403 = vld [vmem:[%s13 + $0xb8] sm:$0xff]
        %v1404 = vld [vmem:[%s13 + $0xc0] sm:$0xff]
        %v1405 = vld [vmem:[%s13 + $0xc8] sm:$0xff]
        %v1406 = vld [vmem:[%s13 + $0xd0] sm:$0xff]
        %v1407 = vld [vmem:[%s13 + $0xd8] sm:$0xff]
        %v1408 = vld [vmem:[%s13 + $0xe0] sm:$0xff]
        %v1409 = vld [vmem:[%s13 + $0xe8] sm:$0xff]
        %v1410 = vld [vmem:[%s13 + $0xf0] sm:$0xff]
        %v1411 = vld [vmem:[%s13 + $0xf8] sm:$0xff]
        %v1412 = vld [vmem:[%s14] sm:$0x1]
        %v1414 = vperm.slane %v1412, 0
        %1416 = vmatpush.msra.mxu0 %v1395
        %1417 = vmatpush.msra.mxu0 %v1394
        %1418 = vmatpush.msra.mxu0 %v1393
        %1419 = vmatpush.msra.mxu0 %v1392
        %1420 = vmatpush.msra.mxu0 %v1391
        %1421 = vmatpush.msra.mxu0 %v1390
        %1422 = vmatpush.msra.mxu0 %v1389
        %1423 = vmatpush.msra.mxu0 %v1388
        %1424 = vmatpush.msra.mxu0 %v1387
        %1425 = vmatpush.msra.mxu0 %v1386
        %1426 = vmatpush.msra.mxu0 %v1385
        %1427 = vmatpush.msra.mxu0 %v1384
        %1428 = vmatpush.msra.mxu0 %v1383
        %1429 = vmatpush.msra.mxu0 %v1382
        %1430 = vmatpush.msra.mxu0 %v1381
        %1431 = vmatpush.msra.mxu0 %v1380
        %1432 = vmatmul.f32.gmra.mxu0 %v1378
        %v1433 = vpop.f32.mrf.mxu0
        %v1434 = vadd.f32 %v1414, %v1433
        %1435 = vdwg.mxu0
        %1436 = vmatpush.msra.mxu0 %v1411
        %1437 = vmatpush.msra.mxu0 %v1410
        %1438 = vmatpush.msra.mxu0 %v1409
        %1439 = vmatpush.msra.mxu0 %v1408
        %1440 = vmatpush.msra.mxu0 %v1407
        %1441 = vmatpush.msra.mxu0 %v1406
        %1442 = vmatpush.msra.mxu0 %v1405
        %1443 = vmatpush.msra.mxu0 %v1404
        %1444 = vmatpush.msra.mxu0 %v1403
        %1445 = vmatpush.msra.mxu0 %v1402
        %1446 = vmatpush.msra.mxu0 %v1401
        %1447 = vmatpush.msra.mxu0 %v1400
        %1448 = vmatpush.msra.mxu0 %v1399
        %1449 = vmatpush.msra.mxu0 %v1398
        %1450 = vmatpush.msra.mxu0 %v1397
        %1451 = vmatpush.msra.mxu0 %v1396
        %1452 = vmatmul.f32.gmra.mxu0 %v1379
        %v1453 = vpop.f32.mrf.mxu0
        %v1454 = vadd.f32 %v1434, %v1453
        %1455 = vdwg.mxu0
        %v1456 = vadd.f32 %v1264, %v1454
        %s1457 = scalar_lea.vmem %s3, 1
        %v1458 = vld [vmem:[%s1457] sm:$0x1]
        %s1459 = scalar_lea.vmem %s4, 1
        %v1460 = vld [vmem:[%s1459] sm:$0x1]
        %v1461 = vsel %vm793, %v1456, 0.0
        %1462 = vadd.xlane.f32.xlu0 %v1461
        %v1463 = vpop.xlane.xlu0 %1462
        %v1464 = vmul.f32 %v1463, %v803
        %v1465 = vsub.f32 %v1456, %v1464
        %v1466 = vmul.f32 %v1465, %v1465
        %v1467 = vsel %vm793, %v1466, 0.0
        %1468 = vadd.xlane.f32.xlu0 %v1467
        %v1469 = vpop.xlane.xlu0 %1468
        %v1470 = vmul.f32 %v1469, %v803
        %v1471 = vadd.f32 %v1470, 1e-06
        %v1472 = vrsqrt.pop %v1471
        %v1473 = vmul.f32 %v1472, %v1471
        %v1474 = vmul.f32 %v1473, %v1472
        %v1475 = vmul.f32 0.5, %v1474
        %v1476 = vsub.f32 1.5, %v1475
        %v1477 = vmul.f32 %v1472, %v1476
        %vm1478 = vweird.f32 %v1471
        %vm1479 = vweird.f32 %v1472
        %vm1480 = vmor %vm1478, %vm1479
        %v1481 = vsel %vm1480, %v1472, %v1477
        %v1482 = vmul.f32 %v1465, %v1481
        %v1484 = vperm.slane %v1458, 0
        %v1486 = vmul.f32 %v1482, %v1484
        %v1488 = vperm.slane %v1460, 0
        %v1490 = vadd.f32 %v1486, %v1488
        %s1491 = scalar_lea.vmem %s5, 128
        %v1492 = vld [vmem:[%s1491] sm:$0xff]
        %v1493 = vld [vmem:[%s1491 + $0x8] sm:$0xff]
        %v1494 = vld [vmem:[%s1491 + $0x10] sm:$0xff]
        %v1495 = vld [vmem:[%s1491 + $0x18] sm:$0xff]
        %v1496 = vld [vmem:[%s1491 + $0x20] sm:$0xff]
        %v1497 = vld [vmem:[%s1491 + $0x28] sm:$0xff]
        %v1498 = vld [vmem:[%s1491 + $0x30] sm:$0xff]
        %v1499 = vld [vmem:[%s1491 + $0x38] sm:$0xff]
        %v1500 = vld [vmem:[%s1491 + $0x40] sm:$0xff]
        %v1501 = vld [vmem:[%s1491 + $0x48] sm:$0xff]
        %v1502 = vld [vmem:[%s1491 + $0x50] sm:$0xff]
        %v1503 = vld [vmem:[%s1491 + $0x58] sm:$0xff]
        %v1504 = vld [vmem:[%s1491 + $0x60] sm:$0xff]
        %v1505 = vld [vmem:[%s1491 + $0x68] sm:$0xff]
        %v1506 = vld [vmem:[%s1491 + $0x70] sm:$0xff]
        %v1507 = vld [vmem:[%s1491 + $0x78] sm:$0xff]
        %s1508 = scalar_lea.vmem %s6, 2
        %v1509 = vld [vmem:[%s1508] sm:$0x3]
        %v1511 = vperm.slane %v1509, 0
        %v1512 = vperm.slane %v1509, 1
        %v1516 = vsel %vm793, %v1490, 0
        %1518 = vmatpush.msra.mxu0 0.0
        %1519 = vmatpush.msra.mxu0 0.0
        %1520 = vmatpush.msra.mxu0 0.0
        %1521 = vmatpush.msra.mxu0 0.0
        %1522 = vmatpush.msra.mxu0 0.0
        %1523 = vmatpush.msra.mxu0 0.0
        %1524 = vmatpush.msra.mxu0 0.0
        %1525 = vmatpush.msra.mxu0 0.0
        %1526 = vmatpush.msra.mxu0 %v1506
        %1527 = vmatpush.msra.mxu0 %v1504
        %1528 = vmatpush.msra.mxu0 %v1502
        %1529 = vmatpush.msra.mxu0 %v1500
        %1530 = vmatpush.msra.mxu0 %v1498
        %1531 = vmatpush.msra.mxu0 %v1496
        %1532 = vmatpush.msra.mxu0 %v1494
        %1533 = vmatpush.msra.mxu0 %v1492
        %1534 = vmatmul.f32.gmra.mxu0 %v1516
        %v1535 = vpop.f32.mrf.mxu0
        %v1536 = vadd.f32 %v1511, %v1535
        %1537 = vdwg.mxu0
        %1538 = vmatpush.msra.mxu0 0.0
        %1539 = vmatpush.msra.mxu0 0.0
        %1540 = vmatpush.msra.mxu0 0.0
        %1541 = vmatpush.msra.mxu0 0.0
        %1542 = vmatpush.msra.mxu0 0.0
        %1543 = vmatpush.msra.mxu0 0.0
        %1544 = vmatpush.msra.mxu0 0.0
        %1545 = vmatpush.msra.mxu0 0.0
        %1546 = vmatpush.msra.mxu0 %v1507
        %1547 = vmatpush.msra.mxu0 %v1505
        %1548 = vmatpush.msra.mxu0 %v1503
        %1549 = vmatpush.msra.mxu0 %v1501
        %1550 = vmatpush.msra.mxu0 %v1499
        %1551 = vmatpush.msra.mxu0 %v1497
        %1552 = vmatpush.msra.mxu0 %v1495
        %1553 = vmatpush.msra.mxu0 %v1493
        %1554 = vmatmul.f32.gmra.mxu0 %v1516
        %v1555 = vpop.f32.mrf.mxu0
        %v1556 = vadd.f32 %v1512, %v1555
        %1557 = vdwg.mxu0
        %s1558 = scalar_lea.vmem [#allocation2], 64
        %v1559 = vld [vmem:[%s1558] sm:$0xff]
        %v1560 = vld [vmem:[%s1558 + $0x8] sm:$0xff]
        %v1561 = vld [vmem:[%s1558 + $0x10] sm:$0xff]
        %v1562 = vld [vmem:[%s1558 + $0x18] sm:$0xff]
        %v1563 = vld [vmem:[%s1558 + $0x20] sm:$0xff]
        %v1564 = vld [vmem:[%s1558 + $0x28] sm:$0xff]
        %v1565 = vld [vmem:[%s1558 + $0x30] sm:$0xff]
        %v1566 = vld [vmem:[%s1558 + $0x38] sm:$0xff]
        %v1567 = vmul.f32 %v1536, 0.25
        %1569 = vrot.lane.b32.xlu0 %v1536, 64
        %v1570 = vpop.permute.xlu0 %1569
        %v1572 = vsel %vm908, %v1567, 0
        %v1574 = vsel %vm908, %v1570, 0
        %1576 = vmatpush.xpose.msra.mxu0 0.0
        %1577 = vmatpush.xpose.msra.mxu0 0.0
        %1578 = vmatpush.xpose.msra.mxu0 0.0
        %1579 = vmatpush.xpose.msra.mxu0 0.0
        %1580 = vmatpush.xpose.msra.mxu0 0.0
        %1581 = vmatpush.xpose.msra.mxu0 0.0
        %1582 = vmatpush.xpose.msra.mxu0 0.0
        %1583 = vmatpush.xpose.msra.mxu0 0.0
        %1584 = vmatpush.xpose.msra.mxu0 0.0
        %1585 = vmatpush.xpose.msra.mxu0 0.0
        %1586 = vmatpush.xpose.msra.mxu0 0.0
        %1587 = vmatpush.xpose.msra.mxu0 0.0
        %1588 = vmatpush.xpose.msra.mxu0 0.0
        %1589 = vmatpush.xpose.msra.mxu0 0.0
        %1590 = vmatpush.xpose.msra.mxu0 0.0
        %1591 = vmatpush.xpose.msra.mxu0 %v1574
        %1592 = vmatmul.f32.gmra.mxu0 %v1572
        %v1593 = vpop.f32.mrf.mxu0
        %v1594 = vadd.f32 %v790, %v1593
        %1595 = vdwg.mxu0
        %v1596 = vsel %vm934, %v1594, -inf
        %1597 = vmax.xlane.f32.xlu0 %v1596
        %v1598 = vpop.xlane.xlu0 %1597
        %v1599 = vsub.f32 %v1594, %v1598
        %v1600 = vmul.f32 %v1599, 1.442695
        %v1601 = vpow.pop %v1600
        %v1602 = vsel %vm934, %v1601, 0.0
        %1603 = vadd.xlane.f32.xlu0 %v1602
        %v1604 = vpop.xlane.xlu0 %1603
        %v1605 = vrcp.pop %v1604
        %v1606 = vmul.f32 %v1601, %v1605
        %v1608 = vsel %vm934, %v1606, 0
        %1610 = vmatpush.msra.mxu0 0.0
        %1611 = vmatpush.msra.mxu0 0.0
        %1612 = vmatpush.msra.mxu0 0.0
        %1613 = vmatpush.msra.mxu0 0.0
        %1614 = vmatpush.msra.mxu0 0.0
        %1615 = vmatpush.msra.mxu0 0.0
        %1616 = vmatpush.msra.mxu0 0.0
        %1617 = vmatpush.msra.mxu0 0.0
        %1618 = vmatpush.msra.mxu0 0.0
        %1619 = vmatpush.msra.mxu0 0.0
        %1620 = vmatpush.msra.mxu0 0.0
        %1621 = vmatpush.msra.mxu0 0.0
        %1622 = vmatpush.msra.mxu0 0.0
        %1623 = vmatpush.msra.mxu0 0.0
        %1624 = vmatpush.msra.mxu0 0.0
        %1625 = vmatpush.msra.mxu0 %v1556
        %1626 = vmatmul.f32.gmra.mxu0 %v1608
        %v1627 = vpop.f32.mrf.mxu0
        %v1628 = vadd.f32 0.0, %v1627
        %1629 = vdwg.mxu0
        %1630 = vrot.lane.b32.xlu0 %v1567, 112
        %v1631 = vpop.permute.xlu0 %1630
        %1632 = vrot.lane.b32.xlu0 %v1536, 48
        %v1633 = vpop.permute.xlu0 %1632
        %v1634 = vsel %vm908, %v1631, 0
        %v1636 = vsel %vm908, %v1633, 0
        %1638 = vmatpush.xpose.msra.mxu0 0.0
        %1639 = vmatpush.xpose.msra.mxu0 0.0
        %1640 = vmatpush.xpose.msra.mxu0 0.0
        %1641 = vmatpush.xpose.msra.mxu0 0.0
        %1642 = vmatpush.xpose.msra.mxu0 0.0
        %1643 = vmatpush.xpose.msra.mxu0 0.0
        %1644 = vmatpush.xpose.msra.mxu0 0.0
        %1645 = vmatpush.xpose.msra.mxu0 0.0
        %1646 = vmatpush.xpose.msra.mxu0 0.0
        %1647 = vmatpush.xpose.msra.mxu0 0.0
        %1648 = vmatpush.xpose.msra.mxu0 0.0
        %1649 = vmatpush.xpose.msra.mxu0 0.0
        %1650 = vmatpush.xpose.msra.mxu0 0.0
        %1651 = vmatpush.xpose.msra.mxu0 0.0
        %1652 = vmatpush.xpose.msra.mxu0 0.0
        %1653 = vmatpush.xpose.msra.mxu0 %v1636
        %1654 = vmatmul.f32.gmra.mxu0 %v1634
        %v1655 = vpop.f32.mrf.mxu0
        %v1656 = vadd.f32 %v790, %v1655
        %1657 = vdwg.mxu0
        %v1658 = vsel %vm934, %v1656, -inf
        %1659 = vmax.xlane.f32.xlu0 %v1658
        %v1660 = vpop.xlane.xlu0 %1659
        %v1661 = vsub.f32 %v1656, %v1660
        %v1662 = vmul.f32 %v1661, 1.442695
        %v1663 = vpow.pop %v1662
        %v1664 = vsel %vm934, %v1663, 0.0
        %1665 = vadd.xlane.f32.xlu0 %v1664
        %v1666 = vpop.xlane.xlu0 %1665
        %v1667 = vrcp.pop %v1666
        %v1668 = vmul.f32 %v1663, %v1667
        %1670 = vrot.lane.b32.xlu0 %v1556, 112
        %v1671 = vpop.permute.xlu0 %1670
        %v1674 = vsel %vm934, %v1668, 0
        %1676 = vmatpush.msra.mxu0 0.0
        %1677 = vmatpush.msra.mxu0 0.0
        %1678 = vmatpush.msra.mxu0 0.0
        %1679 = vmatpush.msra.mxu0 0.0
        %1680 = vmatpush.msra.mxu0 0.0
        %1681 = vmatpush.msra.mxu0 0.0
        %1682 = vmatpush.msra.mxu0 0.0
        %1683 = vmatpush.msra.mxu0 0.0
        %1684 = vmatpush.msra.mxu0 0.0
        %1685 = vmatpush.msra.mxu0 0.0
        %1686 = vmatpush.msra.mxu0 0.0
        %1687 = vmatpush.msra.mxu0 0.0
        %1688 = vmatpush.msra.mxu0 0.0
        %1689 = vmatpush.msra.mxu0 0.0
        %1690 = vmatpush.msra.mxu0 0.0
        %1691 = vmatpush.msra.mxu0 %v1671
        %1692 = vmatmul.f32.gmra.mxu0 %v1674
        %v1693 = vpop.f32.mrf.mxu0
        %v1694 = vadd.f32 0.0, %v1693
        %1695 = vdwg.mxu0
        %v1697 = vsel %vm908, %v1694, 0
        %1699 = vmatpush.msra.mxu0 0.0
        %1700 = vmatpush.msra.mxu0 0.0
        %1701 = vmatpush.msra.mxu0 0.0
        %1702 = vmatpush.msra.mxu0 0.0
        %1703 = vmatpush.msra.mxu0 0.0
        %1704 = vmatpush.msra.mxu0 0.0
        %1705 = vmatpush.msra.mxu0 0.0
        %1706 = vmatpush.msra.mxu0 0.0
        %1707 = vmatpush.msra.mxu0 0.0
        %1708 = vmatpush.msra.mxu0 0.0
        %1709 = vmatpush.msra.mxu0 0.0
        %1710 = vmatpush.msra.mxu0 0.0
        %1711 = vmatpush.msra.mxu0 0.0
        %1712 = vmatpush.msra.mxu0 0.0
        %1713 = vmatpush.msra.mxu0 %v1562
        %1714 = vmatpush.msra.mxu0 %v1561
        %1715 = vmatmul.f32.gmra.mxu0 %v1697
        %v1716 = vpop.f32.mrf.mxu0
        %v1717 = vadd.f32 0.0, %v1716
        %1718 = vdwg.mxu0
        %v1720 = vsel %vm908, %v1628, 0
        %1722 = vmatpush.msra.mxu0 0.0
        %1723 = vmatpush.msra.mxu0 0.0
        %1724 = vmatpush.msra.mxu0 0.0
        %1725 = vmatpush.msra.mxu0 0.0
        %1726 = vmatpush.msra.mxu0 0.0
        %1727 = vmatpush.msra.mxu0 0.0
        %1728 = vmatpush.msra.mxu0 0.0
        %1729 = vmatpush.msra.mxu0 0.0
        %1730 = vmatpush.msra.mxu0 0.0
        %1731 = vmatpush.msra.mxu0 0.0
        %1732 = vmatpush.msra.mxu0 0.0
        %1733 = vmatpush.msra.mxu0 0.0
        %1734 = vmatpush.msra.mxu0 0.0
        %1735 = vmatpush.msra.mxu0 0.0
        %1736 = vmatpush.msra.mxu0 %v1560
        %1737 = vmatpush.msra.mxu0 %v1559
        %1738 = vmatmul.f32.gmra.mxu0 %v1720
        %v1739 = vpop.f32.mrf.mxu0
        %v1740 = vadd.f32 %v1717, %v1739
        %1741 = vdwg.mxu0
        %1742 = vrot.lane.b32.xlu0 %v1567, 96
        %v1743 = vpop.permute.xlu0 %1742
        %1744 = vrot.lane.b32.xlu0 %v1536, 32
        %v1745 = vpop.permute.xlu0 %1744
        %v1746 = vsel %vm908, %v1743, 0
        %v1748 = vsel %vm908, %v1745, 0
        %1750 = vmatpush.xpose.msra.mxu0 0.0
        %1751 = vmatpush.xpose.msra.mxu0 0.0
        %1752 = vmatpush.xpose.msra.mxu0 0.0
        %1753 = vmatpush.xpose.msra.mxu0 0.0
        %1754 = vmatpush.xpose.msra.mxu0 0.0
        %1755 = vmatpush.xpose.msra.mxu0 0.0
        %1756 = vmatpush.xpose.msra.mxu0 0.0
        %1757 = vmatpush.xpose.msra.mxu0 0.0
        %1758 = vmatpush.xpose.msra.mxu0 0.0
        %1759 = vmatpush.xpose.msra.mxu0 0.0
        %1760 = vmatpush.xpose.msra.mxu0 0.0
        %1761 = vmatpush.xpose.msra.mxu0 0.0
        %1762 = vmatpush.xpose.msra.mxu0 0.0
        %1763 = vmatpush.xpose.msra.mxu0 0.0
        %1764 = vmatpush.xpose.msra.mxu0 0.0
        %1765 = vmatpush.xpose.msra.mxu0 %v1748
        %1766 = vmatmul.f32.gmra.mxu0 %v1746
        %v1767 = vpop.f32.mrf.mxu0
        %v1768 = vadd.f32 %v790, %v1767
        %1769 = vdwg.mxu0
        %v1770 = vsel %vm934, %v1768, -inf
        %1771 = vmax.xlane.f32.xlu0 %v1770
        %v1772 = vpop.xlane.xlu0 %1771
        %v1773 = vsub.f32 %v1768, %v1772
        %v1774 = vmul.f32 %v1773, 1.442695
        %v1775 = vpow.pop %v1774
        %v1776 = vsel %vm934, %v1775, 0.0
        %1777 = vadd.xlane.f32.xlu0 %v1776
        %v1778 = vpop.xlane.xlu0 %1777
        %v1779 = vrcp.pop %v1778
        %v1780 = vmul.f32 %v1775, %v1779
        %1781 = vrot.lane.b32.xlu0 %v1556, 96
        %v1782 = vpop.permute.xlu0 %1781
        %v1785 = vsel %vm934, %v1780, 0
        %1787 = vmatpush.msra.mxu0 0.0
        %1788 = vmatpush.msra.mxu0 0.0
        %1789 = vmatpush.msra.mxu0 0.0
        %1790 = vmatpush.msra.mxu0 0.0
        %1791 = vmatpush.msra.mxu0 0.0
        %1792 = vmatpush.msra.mxu0 0.0
        %1793 = vmatpush.msra.mxu0 0.0
        %1794 = vmatpush.msra.mxu0 0.0
        %1795 = vmatpush.msra.mxu0 0.0
        %1796 = vmatpush.msra.mxu0 0.0
        %1797 = vmatpush.msra.mxu0 0.0
        %1798 = vmatpush.msra.mxu0 0.0
        %1799 = vmatpush.msra.mxu0 0.0
        %1800 = vmatpush.msra.mxu0 0.0
        %1801 = vmatpush.msra.mxu0 0.0
        %1802 = vmatpush.msra.mxu0 %v1782
        %1803 = vmatmul.f32.gmra.mxu0 %v1785
        %v1804 = vpop.f32.mrf.mxu0
        %v1805 = vadd.f32 0.0, %v1804
        %1806 = vdwg.mxu0
        %v1808 = vsel %vm908, %v1805, 0
        %1810 = vmatpush.msra.mxu0 0.0
        %1811 = vmatpush.msra.mxu0 0.0
        %1812 = vmatpush.msra.mxu0 0.0
        %1813 = vmatpush.msra.mxu0 0.0
        %1814 = vmatpush.msra.mxu0 0.0
        %1815 = vmatpush.msra.mxu0 0.0
        %1816 = vmatpush.msra.mxu0 0.0
        %1817 = vmatpush.msra.mxu0 0.0
        %1818 = vmatpush.msra.mxu0 0.0
        %1819 = vmatpush.msra.mxu0 0.0
        %1820 = vmatpush.msra.mxu0 0.0
        %1821 = vmatpush.msra.mxu0 0.0
        %1822 = vmatpush.msra.mxu0 0.0
        %1823 = vmatpush.msra.mxu0 0.0
        %1824 = vmatpush.msra.mxu0 %v1564
        %1825 = vmatpush.msra.mxu0 %v1563
        %1826 = vmatmul.f32.gmra.mxu0 %v1808
        %v1827 = vpop.f32.mrf.mxu0
        %v1828 = vadd.f32 0.0, %v1827
        %1829 = vdwg.mxu0
        %v1830 = vadd.f32 %v1740, %v1828
        %1831 = vrot.lane.b32.xlu0 %v1567, 80
        %v1832 = vpop.permute.xlu0 %1831
        %1833 = vrot.lane.b32.xlu0 %v1536, 16
        %v1834 = vpop.permute.xlu0 %1833
        %v1835 = vsel %vm908, %v1832, 0
        %v1837 = vsel %vm908, %v1834, 0
        %1839 = vmatpush.xpose.msra.mxu0 0.0
        %1840 = vmatpush.xpose.msra.mxu0 0.0
        %1841 = vmatpush.xpose.msra.mxu0 0.0
        %1842 = vmatpush.xpose.msra.mxu0 0.0
        %1843 = vmatpush.xpose.msra.mxu0 0.0
        %1844 = vmatpush.xpose.msra.mxu0 0.0
        %1845 = vmatpush.xpose.msra.mxu0 0.0
        %1846 = vmatpush.xpose.msra.mxu0 0.0
        %1847 = vmatpush.xpose.msra.mxu0 0.0
        %1848 = vmatpush.xpose.msra.mxu0 0.0
        %1849 = vmatpush.xpose.msra.mxu0 0.0
        %1850 = vmatpush.xpose.msra.mxu0 0.0
        %1851 = vmatpush.xpose.msra.mxu0 0.0
        %1852 = vmatpush.xpose.msra.mxu0 0.0
        %1853 = vmatpush.xpose.msra.mxu0 0.0
        %1854 = vmatpush.xpose.msra.mxu0 %v1837
        %1855 = vmatmul.f32.gmra.mxu0 %v1835
        %v1856 = vpop.f32.mrf.mxu0
        %v1857 = vadd.f32 %v790, %v1856
        %1858 = vdwg.mxu0
        %v1859 = vsel %vm934, %v1857, -inf
        %1860 = vmax.xlane.f32.xlu0 %v1859
        %v1861 = vpop.xlane.xlu0 %1860
        %v1862 = vsub.f32 %v1857, %v1861
        %v1863 = vmul.f32 %v1862, 1.442695
        %v1864 = vpow.pop %v1863
        %v1865 = vsel %vm934, %v1864, 0.0
        %1866 = vadd.xlane.f32.xlu0 %v1865
        %v1867 = vpop.xlane.xlu0 %1866
        %v1868 = vrcp.pop %v1867
        %v1869 = vmul.f32 %v1864, %v1868
        %1870 = vrot.lane.b32.xlu0 %v1556, 80
        %v1871 = vpop.permute.xlu0 %1870
        %v1874 = vsel %vm934, %v1869, 0
        %1876 = vmatpush.msra.mxu0 0.0
        %1877 = vmatpush.msra.mxu0 0.0
        %1878 = vmatpush.msra.mxu0 0.0
        %1879 = vmatpush.msra.mxu0 0.0
        %1880 = vmatpush.msra.mxu0 0.0
        %1881 = vmatpush.msra.mxu0 0.0
        %1882 = vmatpush.msra.mxu0 0.0
        %1883 = vmatpush.msra.mxu0 0.0
        %1884 = vmatpush.msra.mxu0 0.0
        %1885 = vmatpush.msra.mxu0 0.0
        %1886 = vmatpush.msra.mxu0 0.0
        %1887 = vmatpush.msra.mxu0 0.0
        %1888 = vmatpush.msra.mxu0 0.0
        %1889 = vmatpush.msra.mxu0 0.0
        %1890 = vmatpush.msra.mxu0 0.0
        %1891 = vmatpush.msra.mxu0 %v1871
        %1892 = vmatmul.f32.gmra.mxu0 %v1874
        %v1893 = vpop.f32.mrf.mxu0
        %v1894 = vadd.f32 0.0, %v1893
        %1895 = vdwg.mxu0
        %v1897 = vsel %vm908, %v1894, 0
        %1899 = vmatpush.msra.mxu0 0.0
        %1900 = vmatpush.msra.mxu0 0.0
        %1901 = vmatpush.msra.mxu0 0.0
        %1902 = vmatpush.msra.mxu0 0.0
        %1903 = vmatpush.msra.mxu0 0.0
        %1904 = vmatpush.msra.mxu0 0.0
        %1905 = vmatpush.msra.mxu0 0.0
        %1906 = vmatpush.msra.mxu0 0.0
        %1907 = vmatpush.msra.mxu0 0.0
        %1908 = vmatpush.msra.mxu0 0.0
        %1909 = vmatpush.msra.mxu0 0.0
        %1910 = vmatpush.msra.mxu0 0.0
        %1911 = vmatpush.msra.mxu0 0.0
        %1912 = vmatpush.msra.mxu0 0.0
        %1913 = vmatpush.msra.mxu0 %v1566
        %1914 = vmatpush.msra.mxu0 %v1565
        %1915 = vmatmul.f32.gmra.mxu0 %v1897
        %v1916 = vpop.f32.mrf.mxu0
        %v1917 = vadd.f32 0.0, %v1916
        %1918 = vdwg.mxu0
        %v1919 = vadd.f32 %v1830, %v1917
        %v1920 = vadd.f32 %v1456, %v1919
        %s1921 = scalar_lea.vmem %s8, 1
        %v1922 = vld [vmem:[%s1921] sm:$0x1]
        %v1924 = vperm.slane %v1922, 0
        %v1926 = vadd.f32 %v1920, %v1924
        %s1927 = scalar_lea.vmem %s9, 1
        %v1928 = vld [vmem:[%s1927] sm:$0x1]
        %s1929 = scalar_lea.vmem %s10, 1
        %v1930 = vld [vmem:[%s1929] sm:$0x1]
        %v1931 = vsel %vm793, %v1926, 0.0
        %1932 = vadd.xlane.f32.xlu0 %v1931
        %v1933 = vpop.xlane.xlu0 %1932
        %v1934 = vmul.f32 %v1933, %v803
        %v1935 = vsub.f32 %v1926, %v1934
        %v1936 = vmul.f32 %v1935, %v1935
        %v1937 = vsel %vm793, %v1936, 0.0
        %1938 = vadd.xlane.f32.xlu0 %v1937
        %v1939 = vpop.xlane.xlu0 %1938
        %v1940 = vmul.f32 %v1939, %v803
        %v1941 = vadd.f32 %v1940, 1e-06
        %v1942 = vrsqrt.pop %v1941
        %v1943 = vmul.f32 %v1942, %v1941
        %v1944 = vmul.f32 %v1943, %v1942
        %v1945 = vmul.f32 0.5, %v1944
        %v1946 = vsub.f32 1.5, %v1945
        %v1947 = vmul.f32 %v1942, %v1946
        %vm1948 = vweird.f32 %v1941
        %vm1949 = vweird.f32 %v1942
        %vm1950 = vmor %vm1948, %vm1949
        %v1951 = vsel %vm1950, %v1942, %v1947
        %v1952 = vmul.f32 %v1935, %v1951
        %v1954 = vperm.slane %v1928, 0
        %v1956 = vmul.f32 %v1952, %v1954
        %v1958 = vperm.slane %v1930, 0
        %v1960 = vadd.f32 %v1956, %v1958
        %s1961 = scalar_lea.vmem %s11, 128
        %v1962 = vld [vmem:[%s1961] sm:$0xff]
        %v1963 = vld [vmem:[%s1961 + $0x8] sm:$0xff]
        %v1964 = vld [vmem:[%s1961 + $0x10] sm:$0xff]
        %v1965 = vld [vmem:[%s1961 + $0x18] sm:$0xff]
        %v1966 = vld [vmem:[%s1961 + $0x20] sm:$0xff]
        %v1967 = vld [vmem:[%s1961 + $0x28] sm:$0xff]
        %v1968 = vld [vmem:[%s1961 + $0x30] sm:$0xff]
        %v1969 = vld [vmem:[%s1961 + $0x38] sm:$0xff]
        %v1970 = vld [vmem:[%s1961 + $0x40] sm:$0xff]
        %v1971 = vld [vmem:[%s1961 + $0x48] sm:$0xff]
        %v1972 = vld [vmem:[%s1961 + $0x50] sm:$0xff]
        %v1973 = vld [vmem:[%s1961 + $0x58] sm:$0xff]
        %v1974 = vld [vmem:[%s1961 + $0x60] sm:$0xff]
        %v1975 = vld [vmem:[%s1961 + $0x68] sm:$0xff]
        %v1976 = vld [vmem:[%s1961 + $0x70] sm:$0xff]
        %v1977 = vld [vmem:[%s1961 + $0x78] sm:$0xff]
        %s1978 = scalar_lea.vmem %s12, 2
        %v1979 = vld [vmem:[%s1978] sm:$0x3]
        %v1981 = vperm.slane %v1979, 0
        %v1982 = vperm.slane %v1979, 1
        %v1986 = vsel %vm793, %v1960, 0
        %1988 = vmatpush.msra.mxu0 0.0
        %1989 = vmatpush.msra.mxu0 0.0
        %1990 = vmatpush.msra.mxu0 0.0
        %1991 = vmatpush.msra.mxu0 0.0
        %1992 = vmatpush.msra.mxu0 0.0
        %1993 = vmatpush.msra.mxu0 0.0
        %1994 = vmatpush.msra.mxu0 0.0
        %1995 = vmatpush.msra.mxu0 0.0
        %1996 = vmatpush.msra.mxu0 %v1976
        %1997 = vmatpush.msra.mxu0 %v1974
        %1998 = vmatpush.msra.mxu0 %v1972
        %1999 = vmatpush.msra.mxu0 %v1970
        %2000 = vmatpush.msra.mxu0 %v1968
        %2001 = vmatpush.msra.mxu0 %v1966
        %2002 = vmatpush.msra.mxu0 %v1964
        %2003 = vmatpush.msra.mxu0 %v1962
        %2004 = vmatmul.f32.gmra.mxu0 %v1986
        %v2005 = vpop.f32.mrf.mxu0
        %v2006 = vadd.f32 %v1981, %v2005
        %2007 = vdwg.mxu0
        %2008 = vmatpush.msra.mxu0 0.0
        %2009 = vmatpush.msra.mxu0 0.0
        %2010 = vmatpush.msra.mxu0 0.0
        %2011 = vmatpush.msra.mxu0 0.0
        %2012 = vmatpush.msra.mxu0 0.0
        %2013 = vmatpush.msra.mxu0 0.0
        %2014 = vmatpush.msra.mxu0 0.0
        %2015 = vmatpush.msra.mxu0 0.0
        %2016 = vmatpush.msra.mxu0 %v1977
        %2017 = vmatpush.msra.mxu0 %v1975
        %2018 = vmatpush.msra.mxu0 %v1973
        %2019 = vmatpush.msra.mxu0 %v1971
        %2020 = vmatpush.msra.mxu0 %v1969
        %2021 = vmatpush.msra.mxu0 %v1967
        %2022 = vmatpush.msra.mxu0 %v1965
        %2023 = vmatpush.msra.mxu0 %v1963
        %2024 = vmatmul.f32.gmra.mxu0 %v1986
        %v2025 = vpop.f32.mrf.mxu0
        %v2026 = vadd.f32 %v1982, %v2025
        %2027 = vdwg.mxu0
        %v2028 = vmul.f32 %v2006, %v2006
        %v2029 = vmul.f32 %v2026, %v2026
        %v2030 = vmul.f32 %v2006, %v2028
        %v2031 = vmul.f32 %v2026, %v2029
        %v2032 = vmul.f32 %v2030, 0.044715
        %v2033 = vmul.f32 %v2031, 0.044715
        %v2034 = vadd.f32 %v2006, %v2032
        %v2035 = vadd.f32 %v2026, %v2033
        %v2036 = vmul.f32 %v2034, 0.7978846
        %v2037 = vmul.f32 %v2035, 0.7978846
        %v2038 = vtanh.pop %v2036
        %v2039 = vtanh.pop %v2037
        %v2040 = vadd.f32 %v2038, 1.0
        %v2041 = vadd.f32 %v2039, 1.0
        %v2042 = vmul.f32 %v2040, 0.5
        %v2043 = vmul.f32 %v2041, 0.5
        %v2044 = vmul.f32 %v2006, %v2042
        %v2045 = vmul.f32 %v2026, %v2043
        %s2046 = scalar_lea.vmem %s13, 256
        %v2047 = vld [vmem:[%s2046] sm:$0xff]
        %v2048 = vld [vmem:[%s2046 + $0x8] sm:$0xff]
        %v2049 = vld [vmem:[%s2046 + $0x10] sm:$0xff]
        %v2050 = vld [vmem:[%s2046 + $0x18] sm:$0xff]
        %v2051 = vld [vmem:[%s2046 + $0x20] sm:$0xff]
        %v2052 = vld [vmem:[%s2046 + $0x28] sm:$0xff]
        %v2053 = vld [vmem:[%s2046 + $0x30] sm:$0xff]
        %v2054 = vld [vmem:[%s2046 + $0x38] sm:$0xff]
        %v2055 = vld [vmem:[%s2046 + $0x40] sm:$0xff]
        %v2056 = vld [vmem:[%s2046 + $0x48] sm:$0xff]
        %v2057 = vld [vmem:[%s2046 + $0x50] sm:$0xff]
        %v2058 = vld [vmem:[%s2046 + $0x58] sm:$0xff]
        %v2059 = vld [vmem:[%s2046 + $0x60] sm:$0xff]
        %v2060 = vld [vmem:[%s2046 + $0x68] sm:$0xff]
        %v2061 = vld [vmem:[%s2046 + $0x70] sm:$0xff]
        %v2062 = vld [vmem:[%s2046 + $0x78] sm:$0xff]
        %v2063 = vld [vmem:[%s2046 + $0x80] sm:$0xff]
        %v2064 = vld [vmem:[%s2046 + $0x88] sm:$0xff]
        %v2065 = vld [vmem:[%s2046 + $0x90] sm:$0xff]
        %v2066 = vld [vmem:[%s2046 + $0x98] sm:$0xff]
        %v2067 = vld [vmem:[%s2046 + $0xa0] sm:$0xff]
        %v2068 = vld [vmem:[%s2046 + $0xa8] sm:$0xff]
        %v2069 = vld [vmem:[%s2046 + $0xb0] sm:$0xff]
        %v2070 = vld [vmem:[%s2046 + $0xb8] sm:$0xff]
        %v2071 = vld [vmem:[%s2046 + $0xc0] sm:$0xff]
        %v2072 = vld [vmem:[%s2046 + $0xc8] sm:$0xff]
        %v2073 = vld [vmem:[%s2046 + $0xd0] sm:$0xff]
        %v2074 = vld [vmem:[%s2046 + $0xd8] sm:$0xff]
        %v2075 = vld [vmem:[%s2046 + $0xe0] sm:$0xff]
        %v2076 = vld [vmem:[%s2046 + $0xe8] sm:$0xff]
        %v2077 = vld [vmem:[%s2046 + $0xf0] sm:$0xff]
        %v2078 = vld [vmem:[%s2046 + $0xf8] sm:$0xff]
        %s2079 = scalar_lea.vmem %s14, 1
        %v2080 = vld [vmem:[%s2079] sm:$0x1]
        %v2082 = vperm.slane %v2080, 0
        %2084 = vmatpush.msra.mxu0 %v2062
        %2085 = vmatpush.msra.mxu0 %v2061
        %2086 = vmatpush.msra.mxu0 %v2060
        %2087 = vmatpush.msra.mxu0 %v2059
        %2088 = vmatpush.msra.mxu0 %v2058
        %2089 = vmatpush.msra.mxu0 %v2057
        %2090 = vmatpush.msra.mxu0 %v2056
        %2091 = vmatpush.msra.mxu0 %v2055
        %2092 = vmatpush.msra.mxu0 %v2054
        %2093 = vmatpush.msra.mxu0 %v2053
        %2094 = vmatpush.msra.mxu0 %v2052
        %2095 = vmatpush.msra.mxu0 %v2051
        %2096 = vmatpush.msra.mxu0 %v2050
        %2097 = vmatpush.msra.mxu0 %v2049
        %2098 = vmatpush.msra.mxu0 %v2048
        %2099 = vmatpush.msra.mxu0 %v2047
        %2100 = vmatmul.f32.gmra.mxu0 %v2044
        %v2101 = vpop.f32.mrf.mxu0
        %v2102 = vadd.f32 %v2082, %v2101
        %2103 = vdwg.mxu0
        %2104 = vmatpush.msra.mxu0 %v2078
        %2105 = vmatpush.msra.mxu0 %v2077
        %2106 = vmatpush.msra.mxu0 %v2076
        %2107 = vmatpush.msra.mxu0 %v2075
        %2108 = vmatpush.msra.mxu0 %v2074
        %2109 = vmatpush.msra.mxu0 %v2073
        %2110 = vmatpush.msra.mxu0 %v2072
        %2111 = vmatpush.msra.mxu0 %v2071
        %2112 = vmatpush.msra.mxu0 %v2070
        %2113 = vmatpush.msra.mxu0 %v2069
        %2114 = vmatpush.msra.mxu0 %v2068
        %2115 = vmatpush.msra.mxu0 %v2067
        %2116 = vmatpush.msra.mxu0 %v2066
        %2117 = vmatpush.msra.mxu0 %v2065
        %2118 = vmatpush.msra.mxu0 %v2064
        %2119 = vmatpush.msra.mxu0 %v2063
        %2120 = vmatmul.f32.gmra.mxu0 %v2045
        %v2121 = vpop.f32.mrf.mxu0
        %v2122 = vadd.f32 %v2102, %v2121
        %2123 = vdwg.mxu0
        %v2124 = vadd.f32 %v1926, %v2122
        %v2125 = vld [vmem:[%s15] sm:$0x1]
        %v2126 = vld [vmem:[%s16] sm:$0x1]
        %v2127 = vsel %vm793, %v2124, 0.0
        %2128 = vadd.xlane.f32.xlu0 %v2127
        %v2129 = vpop.xlane.xlu0 %2128
        %v2130 = vmul.f32 %v2129, %v803
        %v2131 = vsub.f32 %v2124, %v2130
        %v2132 = vmul.f32 %v2131, %v2131
        %v2133 = vsel %vm793, %v2132, 0.0
        %2134 = vadd.xlane.f32.xlu0 %v2133
        %v2135 = vpop.xlane.xlu0 %2134
        %v2136 = vmul.f32 %v2135, %v803
        %v2137 = vadd.f32 %v2136, 1e-06
        %v2138 = vrsqrt.pop %v2137
        %v2139 = vmul.f32 %v2138, %v2137
        %v2140 = vmul.f32 %v2139, %v2138
        %v2141 = vmul.f32 0.5, %v2140
        %v2142 = vsub.f32 1.5, %v2141
        %v2143 = vmul.f32 %v2138, %v2142
        %vm2144 = vweird.f32 %v2137
        %vm2145 = vweird.f32 %v2138
        %vm2146 = vmor %vm2144, %vm2145
        %v2147 = vsel %vm2146, %v2138, %v2143
        %v2148 = vmul.f32 %v2131, %v2147
        %v2150 = vperm.slane %v2125, 0
        %v2152 = vmul.f32 %v2148, %v2150
        %v2154 = vperm.slane %v2126, 0
        %v2156 = vadd.f32 %v2152, %v2154
        %2157 = vst.msk [vmem:[%s563] sm:$0xff] %vm793, %v2156
        %p2158 = scmp.lt.s32.totalorder %s29, 1
        %s2159 = scalar_select %p2158, %s29, 1
        %s2160 = smul.addr %s2159, 8
        %s2161 = scalar_lea.vmem %s17, %s2160
        // Predicated region
        $region93: #{vit_forward.1} parent=87 // pred_check
          %p2162 = pneg %p409
        $region94: #{vit_forward.1} parent=87 // pred_check_branch
          %2164 = sbr.rel (%p2162) target = $region96
        $region95: #{vit_forward.1} parent=87 // pred_region
          _
        $region96: #{vit_forward.1} parent=87 // pred_fallthru
          _
      $region88: #{vit_forward.1} parent=5 // pred_fallthru
        _
      %p2165 = scmp.le.s32.totalorder 2, %s24
      // Predicated region
      $region97: #{vit_forward.1} parent=5 // pred_check
        %p2166 = pneg %p2165
      $region98: #{vit_forward.1} parent=5 // pred_check_branch
        %2168 = sbr.rel (%p2166) target = $region100
      $region99: #{vit_forward.1} parent=5 // pred_region
        %s2169 = ssub.s32 %s24, 2
        // Predicated region
        $region101: #{vit_forward.1} parent=99 // pred_check
          %p2170 = pneg %p415
        $region102: #{vit_forward.1} parent=99 // pred_check_branch
          %2172 = sbr.rel (%p2170) target = $region104
        $region103: #{vit_forward.1} parent=99 // pred_region
          %p2173 = scmp.lt.s32.totalorder %s30, 1
          %s2174 = scalar_select %p2173, %s30, 1
          %s2175 = smul.addr %s2174, 8
          %s2176 = scalar_lea.vmem %s17, %s2175
        $region104: #{vit_forward.1} parent=99 // pred_fallthru
          _
      $region100: #{vit_forward.1} parent=5 // pred_fallthru
        _
    $region6: #{vit_forward.1} parent=1 // loop_footer
      %s28 = sadd.s32 1, %s24
    $region7: #{vit_forward.1} parent=1 // loop_footer_branch
      %23 = sbr.rel target = $region3
    $region8: #{vit_forward.1} parent=1 // loop_exit
      _
    %2177 = vsyncpa [#allocation3], 1
    %s2178 = scalar_lea.sflag [#allocation3], 1
    %2179 = vsyncpa %s2178, 1

</llo_original>
